<compile_context>
chip_gen: v7x
topology: tpu7x:2x2x1
jax: 0.10.0
libtpu: 0.0.40
codegen_flags: <defaults>
</compile_context>

<pallas_src>
import jax
import jax.numpy as jnp
from jax import lax
from jax.experimental import pallas as pl
from jax.experimental.pallas import tpu as pltpu


_VMEM = pl.BlockSpec(memory_space=pltpu.MemorySpace.VMEM)


# ------------------------------ fused kernel --------------------------------

def _make_roost_kernel(n_graph, elem_heads, elem_gate, elem_msg,
                       cry_heads, cry_gate, cry_msg):
    """Build the fused DescriptorNetwork kernel for a fixed configuration."""

    def wap_pool(x, gmat_b, gmat_f, smat_f, logw,
                 w1, b1, gw2bd, gb2, mw2, mb2, powr, expm,
                 n_heads, gate_hidden):
        """All heads of one WeightedAttentionPooling stack, head-vectorized.

        x      : (R, Din)   features fed to the gate/message SimpleNetworks
        gmat_b : (R, S)     bool one-hot  row -> segment (gather orientation)
        gmat_f : (R, S)     same, float32
        smat_f : (S, R)     float one-hot segment -> row (scatter orientation)
        logw   : (R, 1)     log of the (positive) fractional weights per row
        w1     : (Din, H*(GH+MH))  packed [gate heads | msg heads] 1st layers
        b1     : (1,   H*(GH+MH))
        gw2bd  : (H*GH, H)  block-diagonal gate 2nd-layer weights
        gb2    : (1, H)     gate 2nd-layer biases
        mw2    : (H*MH, F)  stacked message 2nd-layer weights
        mb2    : (H, F)     message 2nd-layer biases
        powr   : (1, H)     learnable pow per head
        expm   : (H, H*MH)  block-of-ones head-expansion matrix
        returns: (S, F) = mean_h scatter_add(gate_h * msg_h, index)
        """
        # one lane-dense matmul for all gate+message hidden layers of all heads
        h1 = jnp.dot(x, w1, preferred_element_type=jnp.float32) + b1
        h1 = jnp.where(h1 > 0, h1, 0.01 * h1)                  # LeakyReLU(0.01)
        gh = n_heads * gate_hidden
        hg = h1[:, :gh]                                         # (R, H*GH)
        hm = h1[:, gh:]                                         # (R, H*MH)

        # all gate logits in one MXU pass (block-diag second layer)
        glog = jnp.dot(hg, gw2bd, preferred_element_type=jnp.float32) + gb2   # (R, H)

        # segment softmax: scatter_max (per head, tiny unroll) then vectorized
        row_max_cols = []
        for h in range(n_heads):                                # H is 2-3: unrolled
            masked = jnp.where(gmat_b, glog[:, h:h + 1], jnp.float32(-1e30))
            seg_max = jnp.max(masked, axis=0, keepdims=True)                  # (1, S)
            row_max_cols.append(jnp.sum(gmat_f * seg_max, axis=1, keepdims=True))
        row_max = jnp.concatenate(row_max_cols, axis=1)         # (R, H)

        # weights ** pow  ==  exp(pow * log(w))   (weights are positive fractions)
        numer = jnp.exp(powr * logw) * jnp.exp(glog - row_max)                 # (R, H)
        seg_sum = jnp.dot(smat_f, numer, preferred_element_type=jnp.float32)   # (S, H)
        row_sum = jnp.dot(gmat_f, seg_sum, preferred_element_type=jnp.float32) # (R, H)
        gate = numer / (row_sum + 1e-10)                                       # (R, H)

        # sum_h gate_h*(hm_h @ mw2_h + mb2_h) as two lane-dense matmuls
        gate_wide = jnp.dot(gate, expm, preferred_element_type=jnp.float32)    # (R, H*MH)
        weighted = (jnp.dot(gate_wide * hm, mw2, preferred_element_type=jnp.float32)
                    + jnp.dot(gate, mb2, preferred_element_type=jnp.float32))  # (R, F)

        # scatter_add over segments, mean over heads folded in as 1/H
        pooled = jnp.dot(smat_f, weighted, preferred_element_type=jnp.float32) # (S, F)
        return pooled * (1.0 / n_heads)

    def kernel(x_ref, wts_ref,
               sidx_c_ref, sidx_r_ref, nidx_c_ref, cidx_c_ref, cidx_r_ref,
               emb_w_ref, emb_b_ref,
               gexp_ref, gw1_ref, gb1_ref, ggw2_ref, ggb2_ref,
               gmw2_ref, gmb2_ref, gpow_ref,
               cexp_ref, cw1_ref, cb1_ref, cgw2_ref, cgb2_ref,
               cmw2_ref, cmb2_ref, cpow_ref,
               out_ref):
        wts = wts_ref[...]                               # (N, 1)
        n = wts.shape[0]
        m = sidx_c_ref.shape[0]
        c = out_ref.shape[0]
        f = out_ref.shape[1]

        # embedding Linear; fractional weight lands in the last lane via a
        # padded weight matrix + last-lane add (no in-kernel concat)
        e_last = (lax.broadcasted_iota(jnp.int32, (1, f), 1) == f - 1).astype(jnp.float32)
        fea = (jnp.dot(x_ref[...], emb_w_ref[...], preferred_element_type=jnp.float32)
               + emb_b_ref[...] + wts * e_last)          # (N, F)

        # gather/scatter one-hots, built ONCE and reused by every layer
        sidx_c = sidx_c_ref[...]                         # (M, 1)
        sidx_r = sidx_r_ref[...]                         # (1, M)
        nidx_c = nidx_c_ref[...]                         # (M, 1)
        col_mn = lax.broadcasted_iota(jnp.int32, (m, n), 1)
        gmat_b = sidx_c == col_mn                        # (M, N)
        gmat_f = gmat_b.astype(jnp.float32)
        nmat_f = (nidx_c == col_mn).astype(jnp.float32)
        smat_f = (sidx_r == lax.broadcasted_iota(jnp.int32, (n, m), 0)).astype(jnp.float32)

        cidx_c = cidx_c_ref[...]                         # (N, 1)
        cidx_r = cidx_r_ref[...]                         # (1, N)
        cgmat_b = cidx_c == lax.broadcasted_iota(jnp.int32, (n, c), 1)
        cgmat_f = cgmat_b.astype(jnp.float32)
        csmat_f = (cidx_r == lax.broadcasted_iota(jnp.int32, (c, n), 0)).astype(jnp.float32)

        # neighbour fractional weights are layer-invariant: gather + log once
        log_nbr_w = jnp.log(
            jnp.dot(nmat_f, wts, preferred_element_type=jnp.float32))   # (M, 1)
        log_wts = jnp.log(wts)                                           # (N, 1)

        gexp = gexp_ref[...]
        # message-passing layers (fully fused; per-layer params via static index)
        for l in range(n_graph):
            self_f = jnp.dot(gmat_f, fea, preferred_element_type=jnp.float32)  # (M, F)
            nbr_f = jnp.dot(nmat_f, fea, preferred_element_type=jnp.float32)   # (M, F)
            pair = jnp.concatenate([self_f, nbr_f], axis=1)                    # (M, 2F)
            pooled = wap_pool(pair, gmat_b, gmat_f, smat_f, log_nbr_w,
                              gw1_ref[l], gb1_ref[l], ggw2_ref[l], ggb2_ref[l],
                              gmw2_ref[l], gmb2_ref[l], gpow_ref[l], gexp,
                              elem_heads, elem_gate)
            fea = pooled + fea                                                  # residual

        # crystal pooling heads (mean over heads folded into wap_pool)
        out_ref[...] = wap_pool(fea, cgmat_b, cgmat_f, csmat_f, log_wts,
                                cw1_ref[...], cb1_ref[...], cgw2_ref[...],
                                cgb2_ref[...], cmw2_ref[...], cmb2_ref[...],
                                cpow_ref[...], cexp_ref[...],
                                cry_heads, cry_gate)

    return kernel


# ------------------------- parameter initialization -------------------------

def _init_simple_net(key, d_in, d_hidden, d_out):
    k1, k2, k3, k4 = jax.random.split(key, 4)
    s1 = 1.0 / jnp.sqrt(d_in)
    s2 = 1.0 / jnp.sqrt(d_hidden)
    return dict(
        w1=jax.random.uniform(k1, (d_in, d_hidden), jnp.float32, -s1, s1),
        b1=jax.random.uniform(k2, (d_hidden,), jnp.float32, -s1, s1),
        w2=jax.random.uniform(k3, (d_hidden, d_out), jnp.float32, -s2, s2),
        b2=jax.random.uniform(k4, (d_out,), jnp.float32, -s2, s2),
    )


def _init_wap_pack(key, d_in, d_out, gate_hidden, msg_hidden, n_heads):
    """Init one WeightedAttentionPooling stack, packed for the fused kernel."""
    keys = jax.random.split(key, n_heads)
    gates, msgs, pows = [], [], []
    for h in range(n_heads):
        kg, km, kp = jax.random.split(keys[h], 3)
        gates.append(_init_simple_net(kg, d_in, gate_hidden, 1))
        msgs.append(_init_simple_net(km, d_in, msg_hidden, d_out))
        pows.append(jax.random.normal(kp, (), jnp.float32))
    # first layers packed: columns = [gate head 0 | ... | msg head 0 | ...]
    w1 = jnp.concatenate([g["w1"] for g in gates] + [mn["w1"] for mn in msgs], axis=1)
    b1 = jnp.concatenate([g["b1"] for g in gates] + [mn["b1"] for mn in msgs]).reshape(1, -1)
    # gate second layers as one block-diagonal (H*GH, H) matrix
    gw2 = jnp.zeros((n_heads * gate_hidden, n_heads), jnp.float32)
    for h, g in enumerate(gates):
        gw2 = gw2.at[h * gate_hidden:(h + 1) * gate_hidden, h].set(g["w2"][:, 0])
    gb2 = jnp.stack([g["b2"].reshape(()) for g in gates]).reshape(1, n_heads)
    mw2 = jnp.concatenate([mn["w2"] for mn in msgs], axis=0)        # (H*MH, F)
    mb2 = jnp.stack([mn["b2"] for mn in msgs])                      # (H, F)
    powr = jnp.stack(pows).reshape(1, n_heads)                      # (1, H)
    return dict(w1=w1, b1=b1, gw2=gw2, gb2=gb2, mw2=mw2, mb2=mb2, pow=powr)


def _expand_matrix(n_heads, msg_hidden):
    # (H, H*MH), ones in block h -> broadcasts a per-head gate over its hiddens
    return jnp.repeat(jnp.eye(n_heads, dtype=jnp.float32), msg_hidden, axis=1)


def init_descriptor_network(key, elem_emb_len, elem_fea_len, n_graph,
                            elem_heads, elem_gate, elem_msg,
                            cry_heads, cry_gate, cry_msg):
    k_emb, k_graph, k_cry = jax.random.split(key, 3)
    s = 1.0 / jnp.sqrt(elem_emb_len)
    kw, kb = jax.random.split(k_emb)
    emb_w = jax.random.uniform(kw, (elem_emb_len, elem_fea_len - 1), jnp.float32, -s, s)
    emb_b = jax.random.uniform(kb, (elem_fea_len - 1,), jnp.float32, -s, s)
    # pad with a zero last column/entry: the fractional weight is added to the
    # last lane in-kernel (replaces the concat of the PyTorch module)
    emb_w = jnp.concatenate([emb_w, jnp.zeros((elem_emb_len, 1), jnp.float32)], axis=1)
    emb_b = jnp.concatenate([emb_b, jnp.zeros((1,), jnp.float32)]).reshape(1, -1)

    gk = jax.random.split(k_graph, n_graph)
    gpacks = [_init_wap_pack(gk[g], 2 * elem_fea_len, elem_fea_len,
                             elem_gate, elem_msg, elem_heads)
              for g in range(n_graph)]
    graph = {k: jnp.stack([p[k] for p in gpacks]) for k in gpacks[0]}
    graph["exp"] = _expand_matrix(elem_heads, elem_msg)

    cry = _init_wap_pack(k_cry, elem_fea_len, elem_fea_len,
                         cry_gate, cry_msg, cry_heads)
    cry["exp"] = _expand_matrix(cry_heads, cry_msg)

    return dict(emb_w=emb_w, emb_b=emb_b, graph=graph, cry=cry,
                config=dict(n_graph=n_graph,
                            elem_heads=elem_heads, elem_gate=elem_gate, elem_msg=elem_msg,
                            cry_heads=cry_heads, cry_gate=cry_gate, cry_msg=cry_msg))


# ------------------------------ forward pass --------------------------------

def descriptor_network_forward(params, elem_weights, elem_fea,
                               self_fea_idx, nbr_fea_idx, cry_elem_idx, n_cry):
    n = elem_fea.shape[0]
    m = self_fea_idx.shape[0]
    f = params["emb_w"].shape[1]
    cfg = params["config"]

    # index layout plumbing (column layout for gather/mask, row for scatter)
    sidx_c = self_fea_idx.reshape(m, 1).astype(jnp.int32)
    sidx_r = self_fea_idx.reshape(1, m).astype(jnp.int32)
    nidx_c = nbr_fea_idx.reshape(m, 1).astype(jnp.int32)
    cidx_c = cry_elem_idx.reshape(n, 1).astype(jnp.int32)
    cidx_r = cry_elem_idx.reshape(1, n).astype(jnp.int32)

    kernel = _make_roost_kernel(cfg["n_graph"],
                                cfg["elem_heads"], cfg["elem_gate"], cfg["elem_msg"],
                                cfg["cry_heads"], cfg["cry_gate"], cfg["cry_msg"])
    g = params["graph"]
    cp = params["cry"]
    return pl.pallas_call(
        kernel,
        out_shape=jax.ShapeDtypeStruct((n_cry, f), jnp.float32),
        in_specs=[_VMEM] * 25,
        out_specs=_VMEM,
    )(elem_fea, elem_weights, sidx_c, sidx_r, nidx_c, cidx_c, cidx_r,
      params["emb_w"], params["emb_b"],
      g["exp"], g["w1"], g["b1"], g["gw2"], g["gb2"], g["mw2"], g["mb2"], g["pow"],
      cp["exp"], cp["w1"], cp["b1"], cp["gw2"], cp["gb2"], cp["mw2"], cp["mb2"], cp["pow"])


# ---------------------------------- main -------------------------------------

if __name__ == "__main__":
    key = jax.random.PRNGKey(0)

    elem_emb_len = 16
    elem_fea_len = 32
    n_graph, elem_heads, cry_heads = 2, 2, 2
    gate_hidden = msg_hidden = 64

    # batch: 3 crystals with 4, 3, 3 elements -> N = 10 nodes
    crystal_sizes = [4, 3, 3]
    n_cry = len(crystal_sizes)
    n_elem = sum(crystal_sizes)
    cry_elem_idx = jnp.concatenate([
        jnp.full((s,), c, jnp.int32) for c, s in enumerate(crystal_sizes)
    ])

    # dense self-product edges within each crystal (Roost convention) -> M = 34
    self_idx, nbr_idx, off = [], [], 0
    for s in crystal_sizes:
        for i in range(s):
            for j in range(s):
                self_idx.append(off + i)
                nbr_idx.append(off + j)
        off += s
    self_fea_idx = jnp.array(self_idx, jnp.int32)
    nbr_fea_idx = jnp.array(nbr_idx, jnp.int32)

    kw, kf, kp = jax.random.split(key, 3)
    raw_w = jax.random.uniform(kw, (n_elem,), jnp.float32, 0.1, 1.0)
    seg_tot = jax.ops.segment_sum(raw_w, cry_elem_idx, num_segments=n_cry)
    elem_weights = (raw_w / seg_tot[cry_elem_idx]).reshape(n_elem, 1)   # (N, 1) > 0
    elem_fea = jax.random.normal(kf, (n_elem, elem_emb_len), jnp.float32)

    params = init_descriptor_network(
        kp, elem_emb_len, elem_fea_len, n_graph,
        elem_heads, gate_hidden, msg_hidden,
        cry_heads, gate_hidden, msg_hidden,
    )

    out = descriptor_network_forward(
        params, elem_weights, elem_fea,
        self_fea_idx, nbr_fea_idx, cry_elem_idx, n_cry,
    )
    out = jax.block_until_ready(out)
    assert out.shape == (n_cry, elem_fea_len), out.shape
    assert bool(jnp.all(jnp.isfinite(out)))
    print("KERNEL_OK")
</pallas_src>

<mosaic_0001>
module attributes {stable_mosaic.version = 11 : i64} {
  func.func @kernel(%arg0: memref<10x16xf32, #tpu.memory_space<vmem>>, %arg1: memref<10x1xf32, #tpu.memory_space<vmem>>, %arg2: memref<34x1xi32, #tpu.memory_space<vmem>>, %arg3: memref<1x34xi32, #tpu.memory_space<vmem>>, %arg4: memref<34x1xi32, #tpu.memory_space<vmem>>, %arg5: memref<10x1xi32, #tpu.memory_space<vmem>>, %arg6: memref<1x10xi32, #tpu.memory_space<vmem>>, %arg7: memref<16x32xf32, #tpu.memory_space<vmem>>, %arg8: memref<1x32xf32, #tpu.memory_space<vmem>>, %arg9: memref<2x128xf32, #tpu.memory_space<vmem>>, %arg10: memref<2x64x256xf32, #tpu.memory_space<vmem>>, %arg11: memref<2x1x256xf32, #tpu.memory_space<vmem>>, %arg12: memref<2x128x2xf32, #tpu.memory_space<vmem>>, %arg13: memref<2x1x2xf32, #tpu.memory_space<vmem>>, %arg14: memref<2x128x32xf32, #tpu.memory_space<vmem>>, %arg15: memref<2x2x32xf32, #tpu.memory_space<vmem>>, %arg16: memref<2x1x2xf32, #tpu.memory_space<vmem>>, %arg17: memref<2x128xf32, #tpu.memory_space<vmem>>, %arg18: memref<32x256xf32, #tpu.memory_space<vmem>>, %arg19: memref<1x256xf32, #tpu.memory_space<vmem>>, %arg20: memref<128x2xf32, #tpu.memory_space<vmem>>, %arg21: memref<1x2xf32, #tpu.memory_space<vmem>>, %arg22: memref<128x32xf32, #tpu.memory_space<vmem>>, %arg23: memref<2x32xf32, #tpu.memory_space<vmem>>, %arg24: memref<1x2xf32, #tpu.memory_space<vmem>>, %arg25: memref<3x32xf32, #tpu.memory_space<vmem>>) attributes {dimension_semantics = [], scalar_prefetch = 0 : i64, scratch_operands = 0 : i64, tpu.core_type = #tpu.core_type<tc>} {
    %c0 = arith.constant 0 : index
    %c0_0 = arith.constant 0 : index
    %0 = vector.load %arg1[%c0, %c0_0] : memref<10x1xf32, #tpu.memory_space<vmem>>, vector<10x1xf32>
    %1 = tpu.iota {dimensions = array<i32: 1>} : vector<1x32xi32>
    %c31_i32 = arith.constant 31 : i32
    %2 = vector.broadcast %c31_i32 : i32 to vector<1x32xi32>
    %3 = arith.cmpi eq, %1, %2 : vector<1x32xi32>
    %4 = arith.extui %3 : vector<1x32xi1> to vector<1x32xi32>
    %5 = arith.sitofp %4 : vector<1x32xi32> to vector<1x32xf32>
    %c0_1 = arith.constant 0 : index
    %c0_2 = arith.constant 0 : index
    %6 = vector.load %arg0[%c0_1, %c0_2] : memref<10x16xf32, #tpu.memory_space<vmem>>, vector<10x16xf32>
    %c0_3 = arith.constant 0 : index
    %c0_4 = arith.constant 0 : index
    %7 = vector.load %arg7[%c0_3, %c0_4] : memref<16x32xf32, #tpu.memory_space<vmem>>, vector<16x32xf32>
    %cst = arith.constant dense<0.000000e+00> : vector<10x32xf32>
    %8 = tpu.matmul %6, %7, %cst {dimension_numbers = #tpu.dot_dimension_numbers<[1], [0], [0], [1], [0, 0, 1, 1], [], []>} : vector<10x16xf32>, vector<16x32xf32>, vector<10x32xf32> -> vector<10x32xf32>
    %c0_5 = arith.constant 0 : index
    %c0_6 = arith.constant 0 : index
    %9 = vector.load %arg8[%c0_5, %c0_6] : memref<1x32xf32, #tpu.memory_space<vmem>>, vector<1x32xf32>
    %10 = vector.broadcast %9 : vector<1x32xf32> to vector<10x32xf32>
    %11 = arith.addf %8, %10 : vector<10x32xf32>
    %12 = vector.broadcast %0 : vector<10x1xf32> to vector<10x32xf32>
    %13 = vector.broadcast %5 : vector<1x32xf32> to vector<10x32xf32>
    %14 = arith.mulf %12, %13 : vector<10x32xf32>
    %15 = arith.addf %11, %14 : vector<10x32xf32>
    %c0_7 = arith.constant 0 : index
    %c0_8 = arith.constant 0 : index
    %16 = vector.load %arg2[%c0_7, %c0_8] : memref<34x1xi32, #tpu.memory_space<vmem>>, vector<34x1xi32>
    %c0_9 = arith.constant 0 : index
    %c0_10 = arith.constant 0 : index
    %17 = vector.load %arg3[%c0_9, %c0_10] : memref<1x34xi32, #tpu.memory_space<vmem>>, vector<1x34xi32>
    %c0_11 = arith.constant 0 : index
    %c0_12 = arith.constant 0 : index
    %18 = vector.load %arg4[%c0_11, %c0_12] : memref<34x1xi32, #tpu.memory_space<vmem>>, vector<34x1xi32>
    %19 = tpu.iota {dimensions = array<i32: 1>} : vector<34x10xi32>
    %20 = vector.broadcast %16 : vector<34x1xi32> to vector<34x10xi32>
    %21 = arith.cmpi eq, %20, %19 : vector<34x10xi32>
    %22 = arith.extui %21 : vector<34x10xi1> to vector<34x10xi32>
    %23 = arith.sitofp %22 : vector<34x10xi32> to vector<34x10xf32>
    %24 = vector.broadcast %18 : vector<34x1xi32> to vector<34x10xi32>
    %25 = arith.cmpi eq, %24, %19 : vector<34x10xi32>
    %26 = arith.extui %25 : vector<34x10xi1> to vector<34x10xi32>
    %27 = arith.sitofp %26 : vector<34x10xi32> to vector<34x10xf32>
    %28 = tpu.iota {dimensions = array<i32: 0>} : vector<10x34xi32>
    %29 = vector.broadcast %17 : vector<1x34xi32> to vector<10x34xi32>
    %30 = arith.cmpi eq, %29, %28 : vector<10x34xi32>
    %31 = arith.extui %30 : vector<10x34xi1> to vector<10x34xi32>
    %32 = arith.sitofp %31 : vector<10x34xi32> to vector<10x34xf32>
    %c0_13 = arith.constant 0 : index
    %c0_14 = arith.constant 0 : index
    %33 = vector.load %arg5[%c0_13, %c0_14] : memref<10x1xi32, #tpu.memory_space<vmem>>, vector<10x1xi32>
    %c0_15 = arith.constant 0 : index
    %c0_16 = arith.constant 0 : index
    %34 = vector.load %arg6[%c0_15, %c0_16] : memref<1x10xi32, #tpu.memory_space<vmem>>, vector<1x10xi32>
    %35 = tpu.iota {dimensions = array<i32: 1>} : vector<10x3xi32>
    %36 = vector.broadcast %33 : vector<10x1xi32> to vector<10x3xi32>
    %37 = arith.cmpi eq, %36, %35 : vector<10x3xi32>
    %38 = arith.extui %37 : vector<10x3xi1> to vector<10x3xi32>
    %39 = arith.sitofp %38 : vector<10x3xi32> to vector<10x3xf32>
    %40 = tpu.iota {dimensions = array<i32: 0>} : vector<3x10xi32>
    %41 = vector.broadcast %34 : vector<1x10xi32> to vector<3x10xi32>
    %42 = arith.cmpi eq, %41, %40 : vector<3x10xi32>
    %43 = arith.extui %42 : vector<3x10xi1> to vector<3x10xi32>
    %44 = arith.sitofp %43 : vector<3x10xi32> to vector<3x10xf32>
    %cst_17 = arith.constant dense<0.000000e+00> : vector<34x1xf32>
    %45 = tpu.matmul %27, %0, %cst_17 {dimension_numbers = #tpu.dot_dimension_numbers<[1], [0], [0], [1], [0, 0, 1, 1], [], []>} : vector<34x10xf32>, vector<10x1xf32>, vector<34x1xf32> -> vector<34x1xf32>
    %46 = math.log %45 : vector<34x1xf32>
    %47 = math.log %0 : vector<10x1xf32>
    %c0_18 = arith.constant 0 : index
    %c0_19 = arith.constant 0 : index
    %48 = vector.load %arg9[%c0_18, %c0_19] : memref<2x128xf32, #tpu.memory_space<vmem>>, vector<2x128xf32>
    %cst_20 = arith.constant dense<0.000000e+00> : vector<34x32xf32>
    %49 = tpu.matmul %23, %15, %cst_20 {dimension_numbers = #tpu.dot_dimension_numbers<[1], [0], [0], [1], [0, 0, 1, 1], [], []>} : vector<34x10xf32>, vector<10x32xf32>, vector<34x32xf32> -> vector<34x32xf32>
    %cst_21 = arith.constant dense<0.000000e+00> : vector<34x32xf32>
    %50 = tpu.matmul %27, %15, %cst_21 {dimension_numbers = #tpu.dot_dimension_numbers<[1], [0], [0], [1], [0, 0, 1, 1], [], []>} : vector<34x10xf32>, vector<10x32xf32>, vector<34x32xf32> -> vector<34x32xf32>
    %51 = tpu.concatenate %49, %50 in 1 : vector<34x32xf32>, vector<34x32xf32> -> vector<34x64xf32>
    %c0_22 = arith.constant 0 : index
    %c0_23 = arith.constant 0 : index
    %c0_24 = arith.constant 0 : index
    %52 = vector.load %arg10[%c0_22, %c0_23, %c0_24] : memref<2x64x256xf32, #tpu.memory_space<vmem>>, vector<1x64x256xf32>
    %53 = vector.shape_cast %52 : vector<1x64x256xf32> to vector<64x256xf32>
    %c0_25 = arith.constant 0 : index
    %c0_26 = arith.constant 0 : index
    %c0_27 = arith.constant 0 : index
    %54 = vector.load %arg11[%c0_25, %c0_26, %c0_27] : memref<2x1x256xf32, #tpu.memory_space<vmem>>, vector<1x1x256xf32>
    %55 = vector.shape_cast %54 : vector<1x1x256xf32> to vector<1x256xf32>
    %c0_28 = arith.constant 0 : index
    %c0_29 = arith.constant 0 : index
    %c0_30 = arith.constant 0 : index
    %56 = vector.load %arg12[%c0_28, %c0_29, %c0_30] : memref<2x128x2xf32, #tpu.memory_space<vmem>>, vector<1x128x2xf32>
    %57 = vector.shape_cast %56 : vector<1x128x2xf32> to vector<128x2xf32>
    %c0_31 = arith.constant 0 : index
    %c0_32 = arith.constant 0 : index
    %c0_33 = arith.constant 0 : index
    %58 = vector.load %arg13[%c0_31, %c0_32, %c0_33] : memref<2x1x2xf32, #tpu.memory_space<vmem>>, vector<1x1x2xf32>
    %59 = vector.shape_cast %58 : vector<1x1x2xf32> to vector<1x2xf32>
    %c0_34 = arith.constant 0 : index
    %c0_35 = arith.constant 0 : index
    %c0_36 = arith.constant 0 : index
    %60 = vector.load %arg14[%c0_34, %c0_35, %c0_36] : memref<2x128x32xf32, #tpu.memory_space<vmem>>, vector<1x128x32xf32>
    %61 = vector.shape_cast %60 : vector<1x128x32xf32> to vector<128x32xf32>
    %c0_37 = arith.constant 0 : index
    %c0_38 = arith.constant 0 : index
    %c0_39 = arith.constant 0 : index
    %62 = vector.load %arg15[%c0_37, %c0_38, %c0_39] : memref<2x2x32xf32, #tpu.memory_space<vmem>>, vector<1x2x32xf32>
    %63 = vector.shape_cast %62 : vector<1x2x32xf32> to vector<2x32xf32>
    %c0_40 = arith.constant 0 : index
    %c0_41 = arith.constant 0 : index
    %c0_42 = arith.constant 0 : index
    %64 = vector.load %arg16[%c0_40, %c0_41, %c0_42] : memref<2x1x2xf32, #tpu.memory_space<vmem>>, vector<1x1x2xf32>
    %65 = vector.shape_cast %64 : vector<1x1x2xf32> to vector<1x2xf32>
    %cst_43 = arith.constant dense<0.000000e+00> : vector<34x256xf32>
    %66 = tpu.matmul %51, %53, %cst_43 {dimension_numbers = #tpu.dot_dimension_numbers<[1], [0], [0], [1], [0, 0, 1, 1], [], []>} : vector<34x64xf32>, vector<64x256xf32>, vector<34x256xf32> -> vector<34x256xf32>
    %67 = vector.broadcast %55 : vector<1x256xf32> to vector<34x256xf32>
    %68 = arith.addf %66, %67 : vector<34x256xf32>
    %cst_44 = arith.constant 0.000000e+00 : f32
    %69 = vector.broadcast %cst_44 : f32 to vector<34x256xf32>
    %70 = arith.cmpf ogt, %68, %69 : vector<34x256xf32>
    %cst_45 = arith.constant 0.00999999977 : f32
    %71 = vector.broadcast %cst_45 : f32 to vector<34x256xf32>
    %72 = arith.mulf %71, %68 : vector<34x256xf32>
    %73 = arith.select %70, %68, %72 : vector<34x256xi1>, vector<34x256xf32>
    %74 = vector.extract_strided_slice %73 {offsets = [0, 0], sizes = [34, 128], strides = [1, 1]} : vector<34x256xf32> to vector<34x128xf32>
    %75 = vector.extract_strided_slice %73 {offsets = [0, 128], sizes = [34, 128], strides = [1, 1]} : vector<34x256xf32> to vector<34x128xf32>
    %cst_46 = arith.constant dense<0.000000e+00> : vector<34x2xf32>
    %76 = tpu.matmul %74, %57, %cst_46 {dimension_numbers = #tpu.dot_dimension_numbers<[1], [0], [0], [1], [0, 0, 1, 1], [], []>} : vector<34x128xf32>, vector<128x2xf32>, vector<34x2xf32> -> vector<34x2xf32>
    %77 = vector.broadcast %59 : vector<1x2xf32> to vector<34x2xf32>
    %78 = arith.addf %76, %77 : vector<34x2xf32>
    %79 = vector.extract_strided_slice %78 {offsets = [0, 0], sizes = [34, 1], strides = [1, 1]} : vector<34x2xf32> to vector<34x1xf32>
    %cst_47 = arith.constant -1.000000e+30 : f32
    %80 = vector.shape_cast %79 : vector<34x1xf32> to vector<34x1xf32>
    %81 = vector.broadcast %80 : vector<34x1xf32> to vector<34x10xf32>
    %82 = vector.broadcast %cst_47 : f32 to vector<34x10xf32>
    %83 = arith.select %21, %81, %82 : vector<34x10xi1>, vector<34x10xf32>
    %cst_48 = arith.constant dense<0xFF800000> : vector<10xf32>
    %84 = vector.multi_reduction <maximumf>, %83, %cst_48 [0] : vector<34x10xf32> to vector<10xf32>
    %85 = vector.shape_cast %84 : vector<10xf32> to vector<1x10xf32>
    %86 = vector.broadcast %85 : vector<1x10xf32> to vector<34x10xf32>
    %87 = arith.mulf %23, %86 : vector<34x10xf32>
    %cst_49 = arith.constant dense<0.000000e+00> : vector<34xf32>
    %88 = vector.multi_reduction <add>, %87, %cst_49 [1] : vector<34x10xf32> to vector<34xf32>
    %89 = vector.shape_cast %88 : vector<34xf32> to vector<34x1xf32>
    %90 = vector.extract_strided_slice %78 {offsets = [0, 1], sizes = [34, 1], strides = [1, 1]} : vector<34x2xf32> to vector<34x1xf32>
    %cst_50 = arith.constant -1.000000e+30 : f32
    %91 = vector.shape_cast %90 : vector<34x1xf32> to vector<34x1xf32>
    %92 = vector.broadcast %91 : vector<34x1xf32> to vector<34x10xf32>
    %93 = vector.broadcast %cst_50 : f32 to vector<34x10xf32>
    %94 = arith.select %21, %92, %93 : vector<34x10xi1>, vector<34x10xf32>
    %cst_51 = arith.constant dense<0xFF800000> : vector<10xf32>
    %95 = vector.multi_reduction <maximumf>, %94, %cst_51 [0] : vector<34x10xf32> to vector<10xf32>
    %96 = vector.shape_cast %95 : vector<10xf32> to vector<1x10xf32>
    %97 = vector.broadcast %96 : vector<1x10xf32> to vector<34x10xf32>
    %98 = arith.mulf %23, %97 : vector<34x10xf32>
    %cst_52 = arith.constant dense<0.000000e+00> : vector<34xf32>
    %99 = vector.multi_reduction <add>, %98, %cst_52 [1] : vector<34x10xf32> to vector<34xf32>
    %100 = vector.shape_cast %99 : vector<34xf32> to vector<34x1xf32>
    %101 = tpu.concatenate %89, %100 in 1 : vector<34x1xf32>, vector<34x1xf32> -> vector<34x2xf32>
    %102 = vector.broadcast %65 : vector<1x2xf32> to vector<34x2xf32>
    %103 = vector.broadcast %46 : vector<34x1xf32> to vector<34x2xf32>
    %104 = arith.mulf %102, %103 : vector<34x2xf32>
    %105 = math.exp %104 : vector<34x2xf32>
    %106 = arith.subf %78, %101 : vector<34x2xf32>
    %107 = math.exp %106 : vector<34x2xf32>
    %108 = arith.mulf %105, %107 : vector<34x2xf32>
    %cst_53 = arith.constant dense<0.000000e+00> : vector<10x2xf32>
    %109 = tpu.matmul %32, %108, %cst_53 {dimension_numbers = #tpu.dot_dimension_numbers<[1], [0], [0], [1], [0, 0, 1, 1], [], []>} : vector<10x34xf32>, vector<34x2xf32>, vector<10x2xf32> -> vector<10x2xf32>
    %cst_54 = arith.constant dense<0.000000e+00> : vector<34x2xf32>
    %110 = tpu.matmul %23, %109, %cst_54 {dimension_numbers = #tpu.dot_dimension_numbers<[1], [0], [0], [1], [0, 0, 1, 1], [], []>} : vector<34x10xf32>, vector<10x2xf32>, vector<34x2xf32> -> vector<34x2xf32>
    %cst_55 = arith.constant 1.000000e-10 : f32
    %111 = vector.broadcast %cst_55 : f32 to vector<34x2xf32>
    %112 = arith.addf %110, %111 : vector<34x2xf32>
    %113 = arith.divf %108, %112 : vector<34x2xf32>
    %cst_56 = arith.constant dense<0.000000e+00> : vector<34x128xf32>
    %114 = tpu.matmul %113, %48, %cst_56 {dimension_numbers = #tpu.dot_dimension_numbers<[1], [0], [0], [1], [0, 0, 1, 1], [], []>} : vector<34x2xf32>, vector<2x128xf32>, vector<34x128xf32> -> vector<34x128xf32>
    %115 = arith.mulf %114, %75 : vector<34x128xf32>
    %cst_57 = arith.constant dense<0.000000e+00> : vector<34x32xf32>
    %116 = tpu.matmul %115, %61, %cst_57 {dimension_numbers = #tpu.dot_dimension_numbers<[1], [0], [0], [1], [0, 0, 1, 1], [], []>} : vector<34x128xf32>, vector<128x32xf32>, vector<34x32xf32> -> vector<34x32xf32>
    %cst_58 = arith.constant dense<0.000000e+00> : vector<34x32xf32>
    %117 = tpu.matmul %113, %63, %cst_58 {dimension_numbers = #tpu.dot_dimension_numbers<[1], [0], [0], [1], [0, 0, 1, 1], [], []>} : vector<34x2xf32>, vector<2x32xf32>, vector<34x32xf32> -> vector<34x32xf32>
    %118 = arith.addf %116, %117 : vector<34x32xf32>
    %cst_59 = arith.constant dense<0.000000e+00> : vector<10x32xf32>
    %119 = tpu.matmul %32, %118, %cst_59 {dimension_numbers = #tpu.dot_dimension_numbers<[1], [0], [0], [1], [0, 0, 1, 1], [], []>} : vector<10x34xf32>, vector<34x32xf32>, vector<10x32xf32> -> vector<10x32xf32>
    %cst_60 = arith.constant 5.000000e-01 : f32
    %120 = vector.broadcast %cst_60 : f32 to vector<10x32xf32>
    %121 = arith.mulf %119, %120 : vector<10x32xf32>
    %122 = arith.addf %121, %15 : vector<10x32xf32>
    %cst_61 = arith.constant dense<0.000000e+00> : vector<34x32xf32>
    %123 = tpu.matmul %23, %122, %cst_61 {dimension_numbers = #tpu.dot_dimension_numbers<[1], [0], [0], [1], [0, 0, 1, 1], [], []>} : vector<34x10xf32>, vector<10x32xf32>, vector<34x32xf32> -> vector<34x32xf32>
    %cst_62 = arith.constant dense<0.000000e+00> : vector<34x32xf32>
    %124 = tpu.matmul %27, %122, %cst_62 {dimension_numbers = #tpu.dot_dimension_numbers<[1], [0], [0], [1], [0, 0, 1, 1], [], []>} : vector<34x10xf32>, vector<10x32xf32>, vector<34x32xf32> -> vector<34x32xf32>
    %125 = tpu.concatenate %123, %124 in 1 : vector<34x32xf32>, vector<34x32xf32> -> vector<34x64xf32>
    %c1 = arith.constant 1 : index
    %c0_63 = arith.constant 0 : index
    %c0_64 = arith.constant 0 : index
    %126 = vector.load %arg10[%c1, %c0_63, %c0_64] : memref<2x64x256xf32, #tpu.memory_space<vmem>>, vector<1x64x256xf32>
    %127 = vector.shape_cast %126 : vector<1x64x256xf32> to vector<64x256xf32>
    %c1_65 = arith.constant 1 : index
    %c0_66 = arith.constant 0 : index
    %c0_67 = arith.constant 0 : index
    %128 = vector.load %arg11[%c1_65, %c0_66, %c0_67] : memref<2x1x256xf32, #tpu.memory_space<vmem>>, vector<1x1x256xf32>
    %129 = vector.shape_cast %128 : vector<1x1x256xf32> to vector<1x256xf32>
    %c1_68 = arith.constant 1 : index
    %c0_69 = arith.constant 0 : index
    %c0_70 = arith.constant 0 : index
    %130 = vector.load %arg12[%c1_68, %c0_69, %c0_70] : memref<2x128x2xf32, #tpu.memory_space<vmem>>, vector<1x128x2xf32>
    %131 = vector.shape_cast %130 : vector<1x128x2xf32> to vector<128x2xf32>
    %c1_71 = arith.constant 1 : index
    %c0_72 = arith.constant 0 : index
    %c0_73 = arith.constant 0 : index
    %132 = vector.load %arg13[%c1_71, %c0_72, %c0_73] : memref<2x1x2xf32, #tpu.memory_space<vmem>>, vector<1x1x2xf32>
    %133 = vector.shape_cast %132 : vector<1x1x2xf32> to vector<1x2xf32>
    %c1_74 = arith.constant 1 : index
    %c0_75 = arith.constant 0 : index
    %c0_76 = arith.constant 0 : index
    %134 = vector.load %arg14[%c1_74, %c0_75, %c0_76] : memref<2x128x32xf32, #tpu.memory_space<vmem>>, vector<1x128x32xf32>
    %135 = vector.shape_cast %134 : vector<1x128x32xf32> to vector<128x32xf32>
    %c1_77 = arith.constant 1 : index
    %c0_78 = arith.constant 0 : index
    %c0_79 = arith.constant 0 : index
    %136 = vector.load %arg15[%c1_77, %c0_78, %c0_79] : memref<2x2x32xf32, #tpu.memory_space<vmem>>, vector<1x2x32xf32>
    %137 = vector.shape_cast %136 : vector<1x2x32xf32> to vector<2x32xf32>
    %c1_80 = arith.constant 1 : index
    %c0_81 = arith.constant 0 : index
    %c0_82 = arith.constant 0 : index
    %138 = vector.load %arg16[%c1_80, %c0_81, %c0_82] : memref<2x1x2xf32, #tpu.memory_space<vmem>>, vector<1x1x2xf32>
    %139 = vector.shape_cast %138 : vector<1x1x2xf32> to vector<1x2xf32>
    %cst_83 = arith.constant dense<0.000000e+00> : vector<34x256xf32>
    %140 = tpu.matmul %125, %127, %cst_83 {dimension_numbers = #tpu.dot_dimension_numbers<[1], [0], [0], [1], [0, 0, 1, 1], [], []>} : vector<34x64xf32>, vector<64x256xf32>, vector<34x256xf32> -> vector<34x256xf32>
    %141 = vector.broadcast %129 : vector<1x256xf32> to vector<34x256xf32>
    %142 = arith.addf %140, %141 : vector<34x256xf32>
    %cst_84 = arith.constant 0.000000e+00 : f32
    %143 = vector.broadcast %cst_84 : f32 to vector<34x256xf32>
    %144 = arith.cmpf ogt, %142, %143 : vector<34x256xf32>
    %cst_85 = arith.constant 0.00999999977 : f32
    %145 = vector.broadcast %cst_85 : f32 to vector<34x256xf32>
    %146 = arith.mulf %145, %142 : vector<34x256xf32>
    %147 = arith.select %144, %142, %146 : vector<34x256xi1>, vector<34x256xf32>
    %148 = vector.extract_strided_slice %147 {offsets = [0, 0], sizes = [34, 128], strides = [1, 1]} : vector<34x256xf32> to vector<34x128xf32>
    %149 = vector.extract_strided_slice %147 {offsets = [0, 128], sizes = [34, 128], strides = [1, 1]} : vector<34x256xf32> to vector<34x128xf32>
    %cst_86 = arith.constant dense<0.000000e+00> : vector<34x2xf32>
    %150 = tpu.matmul %148, %131, %cst_86 {dimension_numbers = #tpu.dot_dimension_numbers<[1], [0], [0], [1], [0, 0, 1, 1], [], []>} : vector<34x128xf32>, vector<128x2xf32>, vector<34x2xf32> -> vector<34x2xf32>
    %151 = vector.broadcast %133 : vector<1x2xf32> to vector<34x2xf32>
    %152 = arith.addf %150, %151 : vector<34x2xf32>
    %153 = vector.extract_strided_slice %152 {offsets = [0, 0], sizes = [34, 1], strides = [1, 1]} : vector<34x2xf32> to vector<34x1xf32>
    %cst_87 = arith.constant -1.000000e+30 : f32
    %154 = vector.shape_cast %153 : vector<34x1xf32> to vector<34x1xf32>
    %155 = vector.broadcast %154 : vector<34x1xf32> to vector<34x10xf32>
    %156 = vector.broadcast %cst_87 : f32 to vector<34x10xf32>
    %157 = arith.select %21, %155, %156 : vector<34x10xi1>, vector<34x10xf32>
    %cst_88 = arith.constant dense<0xFF800000> : vector<10xf32>
    %158 = vector.multi_reduction <maximumf>, %157, %cst_88 [0] : vector<34x10xf32> to vector<10xf32>
    %159 = vector.shape_cast %158 : vector<10xf32> to vector<1x10xf32>
    %160 = vector.broadcast %159 : vector<1x10xf32> to vector<34x10xf32>
    %161 = arith.mulf %23, %160 : vector<34x10xf32>
    %cst_89 = arith.constant dense<0.000000e+00> : vector<34xf32>
    %162 = vector.multi_reduction <add>, %161, %cst_89 [1] : vector<34x10xf32> to vector<34xf32>
    %163 = vector.shape_cast %162 : vector<34xf32> to vector<34x1xf32>
    %164 = vector.extract_strided_slice %152 {offsets = [0, 1], sizes = [34, 1], strides = [1, 1]} : vector<34x2xf32> to vector<34x1xf32>
    %cst_90 = arith.constant -1.000000e+30 : f32
    %165 = vector.shape_cast %164 : vector<34x1xf32> to vector<34x1xf32>
    %166 = vector.broadcast %165 : vector<34x1xf32> to vector<34x10xf32>
    %167 = vector.broadcast %cst_90 : f32 to vector<34x10xf32>
    %168 = arith.select %21, %166, %167 : vector<34x10xi1>, vector<34x10xf32>
    %cst_91 = arith.constant dense<0xFF800000> : vector<10xf32>
    %169 = vector.multi_reduction <maximumf>, %168, %cst_91 [0] : vector<34x10xf32> to vector<10xf32>
    %170 = vector.shape_cast %169 : vector<10xf32> to vector<1x10xf32>
    %171 = vector.broadcast %170 : vector<1x10xf32> to vector<34x10xf32>
    %172 = arith.mulf %23, %171 : vector<34x10xf32>
    %cst_92 = arith.constant dense<0.000000e+00> : vector<34xf32>
    %173 = vector.multi_reduction <add>, %172, %cst_92 [1] : vector<34x10xf32> to vector<34xf32>
    %174 = vector.shape_cast %173 : vector<34xf32> to vector<34x1xf32>
    %175 = tpu.concatenate %163, %174 in 1 : vector<34x1xf32>, vector<34x1xf32> -> vector<34x2xf32>
    %176 = vector.broadcast %139 : vector<1x2xf32> to vector<34x2xf32>
    %177 = vector.broadcast %46 : vector<34x1xf32> to vector<34x2xf32>
    %178 = arith.mulf %176, %177 : vector<34x2xf32>
    %179 = math.exp %178 : vector<34x2xf32>
    %180 = arith.subf %152, %175 : vector<34x2xf32>
    %181 = math.exp %180 : vector<34x2xf32>
    %182 = arith.mulf %179, %181 : vector<34x2xf32>
    %cst_93 = arith.constant dense<0.000000e+00> : vector<10x2xf32>
    %183 = tpu.matmul %32, %182, %cst_93 {dimension_numbers = #tpu.dot_dimension_numbers<[1], [0], [0], [1], [0, 0, 1, 1], [], []>} : vector<10x34xf32>, vector<34x2xf32>, vector<10x2xf32> -> vector<10x2xf32>
    %cst_94 = arith.constant dense<0.000000e+00> : vector<34x2xf32>
    %184 = tpu.matmul %23, %183, %cst_94 {dimension_numbers = #tpu.dot_dimension_numbers<[1], [0], [0], [1], [0, 0, 1, 1], [], []>} : vector<34x10xf32>, vector<10x2xf32>, vector<34x2xf32> -> vector<34x2xf32>
    %cst_95 = arith.constant 1.000000e-10 : f32
    %185 = vector.broadcast %cst_95 : f32 to vector<34x2xf32>
    %186 = arith.addf %184, %185 : vector<34x2xf32>
    %187 = arith.divf %182, %186 : vector<34x2xf32>
    %cst_96 = arith.constant dense<0.000000e+00> : vector<34x128xf32>
    %188 = tpu.matmul %187, %48, %cst_96 {dimension_numbers = #tpu.dot_dimension_numbers<[1], [0], [0], [1], [0, 0, 1, 1], [], []>} : vector<34x2xf32>, vector<2x128xf32>, vector<34x128xf32> -> vector<34x128xf32>
    %189 = arith.mulf %188, %149 : vector<34x128xf32>
    %cst_97 = arith.constant dense<0.000000e+00> : vector<34x32xf32>
    %190 = tpu.matmul %189, %135, %cst_97 {dimension_numbers = #tpu.dot_dimension_numbers<[1], [0], [0], [1], [0, 0, 1, 1], [], []>} : vector<34x128xf32>, vector<128x32xf32>, vector<34x32xf32> -> vector<34x32xf32>
    %cst_98 = arith.constant dense<0.000000e+00> : vector<34x32xf32>
    %191 = tpu.matmul %187, %137, %cst_98 {dimension_numbers = #tpu.dot_dimension_numbers<[1], [0], [0], [1], [0, 0, 1, 1], [], []>} : vector<34x2xf32>, vector<2x32xf32>, vector<34x32xf32> -> vector<34x32xf32>
    %192 = arith.addf %190, %191 : vector<34x32xf32>
    %cst_99 = arith.constant dense<0.000000e+00> : vector<10x32xf32>
    %193 = tpu.matmul %32, %192, %cst_99 {dimension_numbers = #tpu.dot_dimension_numbers<[1], [0], [0], [1], [0, 0, 1, 1], [], []>} : vector<10x34xf32>, vector<34x32xf32>, vector<10x32xf32> -> vector<10x32xf32>
    %cst_100 = arith.constant 5.000000e-01 : f32
    %194 = vector.broadcast %cst_100 : f32 to vector<10x32xf32>
    %195 = arith.mulf %193, %194 : vector<10x32xf32>
    %196 = arith.addf %195, %122 : vector<10x32xf32>
    %c0_101 = arith.constant 0 : index
    %c0_102 = arith.constant 0 : index
    %197 = vector.load %arg18[%c0_101, %c0_102] : memref<32x256xf32, #tpu.memory_space<vmem>>, vector<32x256xf32>
    %c0_103 = arith.constant 0 : index
    %c0_104 = arith.constant 0 : index
    %198 = vector.load %arg19[%c0_103, %c0_104] : memref<1x256xf32, #tpu.memory_space<vmem>>, vector<1x256xf32>
    %c0_105 = arith.constant 0 : index
    %c0_106 = arith.constant 0 : index
    %199 = vector.load %arg20[%c0_105, %c0_106] : memref<128x2xf32, #tpu.memory_space<vmem>>, vector<128x2xf32>
    %c0_107 = arith.constant 0 : index
    %c0_108 = arith.constant 0 : index
    %200 = vector.load %arg21[%c0_107, %c0_108] : memref<1x2xf32, #tpu.memory_space<vmem>>, vector<1x2xf32>
    %c0_109 = arith.constant 0 : index
    %c0_110 = arith.constant 0 : index
    %201 = vector.load %arg22[%c0_109, %c0_110] : memref<128x32xf32, #tpu.memory_space<vmem>>, vector<128x32xf32>
    %c0_111 = arith.constant 0 : index
    %c0_112 = arith.constant 0 : index
    %202 = vector.load %arg23[%c0_111, %c0_112] : memref<2x32xf32, #tpu.memory_space<vmem>>, vector<2x32xf32>
    %c0_113 = arith.constant 0 : index
    %c0_114 = arith.constant 0 : index
    %203 = vector.load %arg24[%c0_113, %c0_114] : memref<1x2xf32, #tpu.memory_space<vmem>>, vector<1x2xf32>
    %c0_115 = arith.constant 0 : index
    %c0_116 = arith.constant 0 : index
    %204 = vector.load %arg17[%c0_115, %c0_116] : memref<2x128xf32, #tpu.memory_space<vmem>>, vector<2x128xf32>
    %cst_117 = arith.constant dense<0.000000e+00> : vector<10x256xf32>
    %205 = tpu.matmul %196, %197, %cst_117 {dimension_numbers = #tpu.dot_dimension_numbers<[1], [0], [0], [1], [0, 0, 1, 1], [], []>} : vector<10x32xf32>, vector<32x256xf32>, vector<10x256xf32> -> vector<10x256xf32>
    %206 = vector.broadcast %198 : vector<1x256xf32> to vector<10x256xf32>
    %207 = arith.addf %205, %206 : vector<10x256xf32>
    %cst_118 = arith.constant 0.000000e+00 : f32
    %208 = vector.broadcast %cst_118 : f32 to vector<10x256xf32>
    %209 = arith.cmpf ogt, %207, %208 : vector<10x256xf32>
    %cst_119 = arith.constant 0.00999999977 : f32
    %210 = vector.broadcast %cst_119 : f32 to vector<10x256xf32>
    %211 = arith.mulf %210, %207 : vector<10x256xf32>
    %212 = arith.select %209, %207, %211 : vector<10x256xi1>, vector<10x256xf32>
    %213 = vector.extract_strided_slice %212 {offsets = [0, 0], sizes = [10, 128], strides = [1, 1]} : vector<10x256xf32> to vector<10x128xf32>
    %214 = vector.extract_strided_slice %212 {offsets = [0, 128], sizes = [10, 128], strides = [1, 1]} : vector<10x256xf32> to vector<10x128xf32>
    %cst_120 = arith.constant dense<0.000000e+00> : vector<10x2xf32>
    %215 = tpu.matmul %213, %199, %cst_120 {dimension_numbers = #tpu.dot_dimension_numbers<[1], [0], [0], [1], [0, 0, 1, 1], [], []>} : vector<10x128xf32>, vector<128x2xf32>, vector<10x2xf32> -> vector<10x2xf32>
    %216 = vector.broadcast %200 : vector<1x2xf32> to vector<10x2xf32>
    %217 = arith.addf %215, %216 : vector<10x2xf32>
    %218 = vector.extract_strided_slice %217 {offsets = [0, 0], sizes = [10, 1], strides = [1, 1]} : vector<10x2xf32> to vector<10x1xf32>
    %cst_121 = arith.constant -1.000000e+30 : f32
    %219 = vector.shape_cast %218 : vector<10x1xf32> to vector<10x1xf32>
    %220 = vector.broadcast %219 : vector<10x1xf32> to vector<10x3xf32>
    %221 = vector.broadcast %cst_121 : f32 to vector<10x3xf32>
    %222 = arith.select %37, %220, %221 : vector<10x3xi1>, vector<10x3xf32>
    %cst_122 = arith.constant dense<0xFF800000> : vector<3xf32>
    %223 = vector.multi_reduction <maximumf>, %222, %cst_122 [0] : vector<10x3xf32> to vector<3xf32>
    %224 = vector.shape_cast %223 : vector<3xf32> to vector<1x3xf32>
    %225 = vector.broadcast %224 : vector<1x3xf32> to vector<10x3xf32>
    %226 = arith.mulf %39, %225 : vector<10x3xf32>
    %cst_123 = arith.constant dense<0.000000e+00> : vector<10xf32>
    %227 = vector.multi_reduction <add>, %226, %cst_123 [1] : vector<10x3xf32> to vector<10xf32>
    %228 = vector.shape_cast %227 : vector<10xf32> to vector<10x1xf32>
    %229 = vector.extract_strided_slice %217 {offsets = [0, 1], sizes = [10, 1], strides = [1, 1]} : vector<10x2xf32> to vector<10x1xf32>
    %cst_124 = arith.constant -1.000000e+30 : f32
    %230 = vector.shape_cast %229 : vector<10x1xf32> to vector<10x1xf32>
    %231 = vector.broadcast %230 : vector<10x1xf32> to vector<10x3xf32>
    %232 = vector.broadcast %cst_124 : f32 to vector<10x3xf32>
    %233 = arith.select %37, %231, %232 : vector<10x3xi1>, vector<10x3xf32>
    %cst_125 = arith.constant dense<0xFF800000> : vector<3xf32>
    %234 = vector.multi_reduction <maximumf>, %233, %cst_125 [0] : vector<10x3xf32> to vector<3xf32>
    %235 = vector.shape_cast %234 : vector<3xf32> to vector<1x3xf32>
    %236 = vector.broadcast %235 : vector<1x3xf32> to vector<10x3xf32>
    %237 = arith.mulf %39, %236 : vector<10x3xf32>
    %cst_126 = arith.constant dense<0.000000e+00> : vector<10xf32>
    %238 = vector.multi_reduction <add>, %237, %cst_126 [1] : vector<10x3xf32> to vector<10xf32>
    %239 = vector.shape_cast %238 : vector<10xf32> to vector<10x1xf32>
    %240 = tpu.concatenate %228, %239 in 1 : vector<10x1xf32>, vector<10x1xf32> -> vector<10x2xf32>
    %241 = vector.broadcast %203 : vector<1x2xf32> to vector<10x2xf32>
    %242 = vector.broadcast %47 : vector<10x1xf32> to vector<10x2xf32>
    %243 = arith.mulf %241, %242 : vector<10x2xf32>
    %244 = math.exp %243 : vector<10x2xf32>
    %245 = arith.subf %217, %240 : vector<10x2xf32>
    %246 = math.exp %245 : vector<10x2xf32>
    %247 = arith.mulf %244, %246 : vector<10x2xf32>
    %cst_127 = arith.constant dense<0.000000e+00> : vector<3x2xf32>
    %248 = tpu.matmul %44, %247, %cst_127 {dimension_numbers = #tpu.dot_dimension_numbers<[1], [0], [0], [1], [0, 0, 1, 1], [], []>} : vector<3x10xf32>, vector<10x2xf32>, vector<3x2xf32> -> vector<3x2xf32>
    %cst_128 = arith.constant dense<0.000000e+00> : vector<10x2xf32>
    %249 = tpu.matmul %39, %248, %cst_128 {dimension_numbers = #tpu.dot_dimension_numbers<[1], [0], [0], [1], [0, 0, 1, 1], [], []>} : vector<10x3xf32>, vector<3x2xf32>, vector<10x2xf32> -> vector<10x2xf32>
    %cst_129 = arith.constant 1.000000e-10 : f32
    %250 = vector.broadcast %cst_129 : f32 to vector<10x2xf32>
    %251 = arith.addf %249, %250 : vector<10x2xf32>
    %252 = arith.divf %247, %251 : vector<10x2xf32>
    %cst_130 = arith.constant dense<0.000000e+00> : vector<10x128xf32>
    %253 = tpu.matmul %252, %204, %cst_130 {dimension_numbers = #tpu.dot_dimension_numbers<[1], [0], [0], [1], [0, 0, 1, 1], [], []>} : vector<10x2xf32>, vector<2x128xf32>, vector<10x128xf32> -> vector<10x128xf32>
    %254 = arith.mulf %253, %214 : vector<10x128xf32>
    %cst_131 = arith.constant dense<0.000000e+00> : vector<10x32xf32>
    %255 = tpu.matmul %254, %201, %cst_131 {dimension_numbers = #tpu.dot_dimension_numbers<[1], [0], [0], [1], [0, 0, 1, 1], [], []>} : vector<10x128xf32>, vector<128x32xf32>, vector<10x32xf32> -> vector<10x32xf32>
    %cst_132 = arith.constant dense<0.000000e+00> : vector<10x32xf32>
    %256 = tpu.matmul %252, %202, %cst_132 {dimension_numbers = #tpu.dot_dimension_numbers<[1], [0], [0], [1], [0, 0, 1, 1], [], []>} : vector<10x2xf32>, vector<2x32xf32>, vector<10x32xf32> -> vector<10x32xf32>
    %257 = arith.addf %255, %256 : vector<10x32xf32>
    %cst_133 = arith.constant dense<0.000000e+00> : vector<3x32xf32>
    %258 = tpu.matmul %44, %257, %cst_133 {dimension_numbers = #tpu.dot_dimension_numbers<[1], [0], [0], [1], [0, 0, 1, 1], [], []>} : vector<3x10xf32>, vector<10x32xf32>, vector<3x32xf32> -> vector<3x32xf32>
    %cst_134 = arith.constant 5.000000e-01 : f32
    %259 = vector.broadcast %cst_134 : f32 to vector<3x32xf32>
    %260 = arith.mulf %258, %259 : vector<3x32xf32>
    %c0_135 = arith.constant 0 : index
    %c0_136 = arith.constant 0 : index
    %261 = vector.load %arg25[%c0_135, %c0_136] : memref<3x32xf32, #tpu.memory_space<vmem>>, vector<3x32xf32>
    tpu.vector_store %arg25[%c0_135, %c0_136], %260 {strides = array<i32>} : memref<3x32xf32, #tpu.memory_space<vmem>>, vector<3x32xf32>,
    return
  }
}

</mosaic_0001>

<llo_original>
// kernel: tpu_custom_call.1
$region0: #{tpu_custom_call.1}
  #allocation0 [shape = 'u32[]', space=smem, size = 0x4, offset = 0x4, fixed_abs, tag = 'smem constant byte address 0x4 - core index']
  #allocation1 [shape = 'u32[144,128]{1,0:T(1,128)}', space=vmem, size = 0x12000, scoped, tag = 'internal scratch']
  %s0 = inlined_call_operand.vmem [shape: f32[10,16], index: 0, kind: input, shape index: {}]
  %s1 = inlined_call_operand.vmem [shape: f32[10,1], index: 1, kind: input, shape index: {}]
  %s2 = inlined_call_operand.vmem [shape: s32[34,1], index: 2, kind: input, shape index: {}]
  %s3 = inlined_call_operand.vmem [shape: s32[1,34], index: 3, kind: input, shape index: {}]
  %s4 = inlined_call_operand.vmem [shape: s32[34,1], index: 4, kind: input, shape index: {}]
  %s5 = inlined_call_operand.vmem [shape: s32[10,1], index: 5, kind: input, shape index: {}]
  %s6 = inlined_call_operand.vmem [shape: s32[1,10], index: 6, kind: input, shape index: {}]
  %s7 = inlined_call_operand.vmem [shape: f32[16,32], index: 7, kind: input, shape index: {}]
  %s8 = inlined_call_operand.vmem [shape: f32[1,32], index: 8, kind: input, shape index: {}]
  %s9 = inlined_call_operand.vmem [shape: f32[2,128], index: 9, kind: input, shape index: {}]
  %s10 = inlined_call_operand.vmem [shape: f32[2,64,256], index: 10, kind: input, shape index: {}]
  %s11 = inlined_call_operand.vmem [shape: f32[2,1,256], index: 11, kind: input, shape index: {}]
  %s12 = inlined_call_operand.vmem [shape: f32[2,128,2], index: 12, kind: input, shape index: {}]
  %s13 = inlined_call_operand.vmem [shape: f32[2,1,2], index: 13, kind: input, shape index: {}]
  %s14 = inlined_call_operand.vmem [shape: f32[2,128,32], index: 14, kind: input, shape index: {}]
  %s15 = inlined_call_operand.vmem [shape: f32[2,2,32], index: 15, kind: input, shape index: {}]
  %s16 = inlined_call_operand.vmem [shape: f32[2,1,2], index: 16, kind: input, shape index: {}]
  %s17 = inlined_call_operand.vmem [shape: f32[2,128], index: 17, kind: input, shape index: {}]
  %s18 = inlined_call_operand.vmem [shape: f32[32,256], index: 18, kind: input, shape index: {}]
  %s19 = inlined_call_operand.vmem [shape: f32[1,256], index: 19, kind: input, shape index: {}]
  %s20 = inlined_call_operand.vmem [shape: f32[128,2], index: 20, kind: input, shape index: {}]
  %s21 = inlined_call_operand.vmem [shape: f32[1,2], index: 21, kind: input, shape index: {}]
  %s22 = inlined_call_operand.vmem [shape: f32[128,32], index: 22, kind: input, shape index: {}]
  %s23 = inlined_call_operand.vmem [shape: f32[2,32], index: 23, kind: input, shape index: {}]
  %s24 = inlined_call_operand.vmem [shape: f32[1,2], index: 24, kind: input, shape index: {}]
  %s25 = inlined_call_operand.hbm [shape: f32[3,32], index: 25, kind: output, shape index: {}]
  %s26 = sld [smem:[#allocation0]]
  $region110: #{tpu_custom_call.1} parent=0
    _
  %s28 = ssub.s32 1, %s26
  %s29 = scalar_select 0, %s28, %s26
  $region1: #{tpu_custom_call.1} parent=0
    #allocation2 [shape = 'u8[2048]{0}', space=vmem, size = 0x800, scoped, tag = 'output window, operand 0, single buffered']
    #allocation3 [shape = 's32[1]{0}', space=sflag, size = 0x4, scoped, tag = 'scoped memory for tpu_custom_call.1']
    %30 = vsyncpa [#allocation3], 0
    // Predicated region
    $region2: #{tpu_custom_call.1} parent=1 // pred_check
      _
    $region3: #{tpu_custom_call.1} parent=1 // pred_check_branch
      %32 = sbr.rel (0) target = $region5
    $region4: #{tpu_custom_call.1} parent=1 // pred_region
      _
    $region5: #{tpu_custom_call.1} parent=1 // pred_fallthru
      _
    // Predicated region
    $region6: #{tpu_custom_call.1} parent=1 // pred_check
      _
    $region7: #{tpu_custom_call.1} parent=1 // pred_check_branch
      %34 = sbr.rel (0) target = $region9
    $region8: #{tpu_custom_call.1} parent=1 // pred_region
      _
    $region9: #{tpu_custom_call.1} parent=1 // pred_fallthru
      _
    // Predicated region
    $region10: #{tpu_custom_call.1} parent=1 // pred_check
      _
    $region11: #{tpu_custom_call.1} parent=1 // pred_check_branch
      %36 = sbr.rel (0) target = $region13
    $region12: #{tpu_custom_call.1} parent=1 // pred_region
      _
    $region13: #{tpu_custom_call.1} parent=1 // pred_fallthru
      _
    // Predicated region
    $region14: #{tpu_custom_call.1} parent=1 // pred_check
      _
    $region15: #{tpu_custom_call.1} parent=1 // pred_check_branch
      %38 = sbr.rel (0) target = $region17
    $region16: #{tpu_custom_call.1} parent=1 // pred_region
      _
    $region17: #{tpu_custom_call.1} parent=1 // pred_fallthru
      _
    // Predicated region
    $region18: #{tpu_custom_call.1} parent=1 // pred_check
      _
    $region19: #{tpu_custom_call.1} parent=1 // pred_check_branch
      %40 = sbr.rel (0) target = $region21
    $region20: #{tpu_custom_call.1} parent=1 // pred_region
      _
    $region21: #{tpu_custom_call.1} parent=1 // pred_fallthru
      _
    // Predicated region
    $region22: #{tpu_custom_call.1} parent=1 // pred_check
      _
    $region23: #{tpu_custom_call.1} parent=1 // pred_check_branch
      %42 = sbr.rel (0) target = $region25
    $region24: #{tpu_custom_call.1} parent=1 // pred_region
      _
    $region25: #{tpu_custom_call.1} parent=1 // pred_fallthru
      _
    // Predicated region
    $region26: #{tpu_custom_call.1} parent=1 // pred_check
      _
    $region27: #{tpu_custom_call.1} parent=1 // pred_check_branch
      %44 = sbr.rel (0) target = $region29
    $region28: #{tpu_custom_call.1} parent=1 // pred_region
      _
    $region29: #{tpu_custom_call.1} parent=1 // pred_fallthru
      _
    // Predicated region
    $region30: #{tpu_custom_call.1} parent=1 // pred_check
      _
    $region31: #{tpu_custom_call.1} parent=1 // pred_check_branch
      %46 = sbr.rel (0) target = $region33
    $region32: #{tpu_custom_call.1} parent=1 // pred_region
      _
    $region33: #{tpu_custom_call.1} parent=1 // pred_fallthru
      _
    // Predicated region
    $region34: #{tpu_custom_call.1} parent=1 // pred_check
      _
    $region35: #{tpu_custom_call.1} parent=1 // pred_check_branch
      %48 = sbr.rel (0) target = $region37
    $region36: #{tpu_custom_call.1} parent=1 // pred_region
      _
    $region37: #{tpu_custom_call.1} parent=1 // pred_fallthru
      _
    // Predicated region
    $region38: #{tpu_custom_call.1} parent=1 // pred_check
      _
    $region39: #{tpu_custom_call.1} parent=1 // pred_check_branch
      %50 = sbr.rel (0) target = $region41
    $region40: #{tpu_custom_call.1} parent=1 // pred_region
      _
    $region41: #{tpu_custom_call.1} parent=1 // pred_fallthru
      _
    // Predicated region
    $region42: #{tpu_custom_call.1} parent=1 // pred_check
      _
    $region43: #{tpu_custom_call.1} parent=1 // pred_check_branch
      %52 = sbr.rel (0) target = $region45
    $region44: #{tpu_custom_call.1} parent=1 // pred_region
      _
    $region45: #{tpu_custom_call.1} parent=1 // pred_fallthru
      _
    // Predicated region
    $region46: #{tpu_custom_call.1} parent=1 // pred_check
      _
    $region47: #{tpu_custom_call.1} parent=1 // pred_check_branch
      %54 = sbr.rel (0) target = $region49
    $region48: #{tpu_custom_call.1} parent=1 // pred_region
      _
    $region49: #{tpu_custom_call.1} parent=1 // pred_fallthru
      _
    // Predicated region
    $region50: #{tpu_custom_call.1} parent=1 // pred_check
      _
    $region51: #{tpu_custom_call.1} parent=1 // pred_check_branch
      %56 = sbr.rel (0) target = $region53
    $region52: #{tpu_custom_call.1} parent=1 // pred_region
      _
    $region53: #{tpu_custom_call.1} parent=1 // pred_fallthru
      _
    // Predicated region
    $region54: #{tpu_custom_call.1} parent=1 // pred_check
      _
    $region55: #{tpu_custom_call.1} parent=1 // pred_check_branch
      %58 = sbr.rel (0) target = $region57
    $region56: #{tpu_custom_call.1} parent=1 // pred_region
      _
    $region57: #{tpu_custom_call.1} parent=1 // pred_fallthru
      _
    // Predicated region
    $region58: #{tpu_custom_call.1} parent=1 // pred_check
      _
    $region59: #{tpu_custom_call.1} parent=1 // pred_check_branch
      %60 = sbr.rel (0) target = $region61
    $region60: #{tpu_custom_call.1} parent=1 // pred_region
      _
    $region61: #{tpu_custom_call.1} parent=1 // pred_fallthru
      _
    // Predicated region
    $region62: #{tpu_custom_call.1} parent=1 // pred_check
      _
    $region63: #{tpu_custom_call.1} parent=1 // pred_check_branch
      %62 = sbr.rel (0) target = $region65
    $region64: #{tpu_custom_call.1} parent=1 // pred_region
      _
    $region65: #{tpu_custom_call.1} parent=1 // pred_fallthru
      _
    // Predicated region
    $region66: #{tpu_custom_call.1} parent=1 // pred_check
      _
    $region67: #{tpu_custom_call.1} parent=1 // pred_check_branch
      %64 = sbr.rel (0) target = $region69
    $region68: #{tpu_custom_call.1} parent=1 // pred_region
      _
    $region69: #{tpu_custom_call.1} parent=1 // pred_fallthru
      _
    // Predicated region
    $region70: #{tpu_custom_call.1} parent=1 // pred_check
      _
    $region71: #{tpu_custom_call.1} parent=1 // pred_check_branch
      %66 = sbr.rel (0) target = $region73
    $region72: #{tpu_custom_call.1} parent=1 // pred_region
      _
    $region73: #{tpu_custom_call.1} parent=1 // pred_fallthru
      _
    // Predicated region
    $region74: #{tpu_custom_call.1} parent=1 // pred_check
      _
    $region75: #{tpu_custom_call.1} parent=1 // pred_check_branch
      %68 = sbr.rel (0) target = $region77
    $region76: #{tpu_custom_call.1} parent=1 // pred_region
      _
    $region77: #{tpu_custom_call.1} parent=1 // pred_fallthru
      _
    // Predicated region
    $region78: #{tpu_custom_call.1} parent=1 // pred_check
      _
    $region79: #{tpu_custom_call.1} parent=1 // pred_check_branch
      %70 = sbr.rel (0) target = $region81
    $region80: #{tpu_custom_call.1} parent=1 // pred_region
      _
    $region81: #{tpu_custom_call.1} parent=1 // pred_fallthru
      _
    // Predicated region
    $region82: #{tpu_custom_call.1} parent=1 // pred_check
      _
    $region83: #{tpu_custom_call.1} parent=1 // pred_check_branch
      %72 = sbr.rel (0) target = $region85
    $region84: #{tpu_custom_call.1} parent=1 // pred_region
      _
    $region85: #{tpu_custom_call.1} parent=1 // pred_fallthru
      _
    // Predicated region
    $region86: #{tpu_custom_call.1} parent=1 // pred_check
      _
    $region87: #{tpu_custom_call.1} parent=1 // pred_check_branch
      %74 = sbr.rel (0) target = $region89
    $region88: #{tpu_custom_call.1} parent=1 // pred_region
      _
    $region89: #{tpu_custom_call.1} parent=1 // pred_fallthru
      _
    // Predicated region
    $region90: #{tpu_custom_call.1} parent=1 // pred_check
      _
    $region91: #{tpu_custom_call.1} parent=1 // pred_check_branch
      %76 = sbr.rel (0) target = $region93
    $region92: #{tpu_custom_call.1} parent=1 // pred_region
      _
    $region93: #{tpu_custom_call.1} parent=1 // pred_fallthru
      _
    // Predicated region
    $region94: #{tpu_custom_call.1} parent=1 // pred_check
      _
    $region95: #{tpu_custom_call.1} parent=1 // pred_check_branch
      %78 = sbr.rel (0) target = $region97
    $region96: #{tpu_custom_call.1} parent=1 // pred_region
      _
    $region97: #{tpu_custom_call.1} parent=1 // pred_fallthru
      _
    // Predicated region
    $region98: #{tpu_custom_call.1} parent=1 // pred_check
      _
    $region99: #{tpu_custom_call.1} parent=1 // pred_check_branch
      %80 = sbr.rel (0) target = $region101
    $region100: #{tpu_custom_call.1} parent=1 // pred_region
      _
    $region101: #{tpu_custom_call.1} parent=1 // pred_fallthru
      _
    %v81 = vld [vmem:[%s1] sm:$0xff]
    %v82 = vld [vmem:[%s1 + $0x8] sm:$0x3]
    %v83 = vlaneseq
    %v84 = vand.u32 %v83, 127
    %vm85 = vcmp.eq.s32.totalorder %v84, 31
    %v86 = vsel %vm85, 1, 0
    %v87 = vcvt.s32.f32 %v86
    %v88 = vld [vmem:[%s0] sm:$0xff]
    %v89 = vld [vmem:[%s0 + $0x8] sm:$0x3]
    %v90 = vld [vmem:[%s7] sm:$0xff]
    %v91 = vld [vmem:[%s7 + $0x8] sm:$0xff]
    %v92 = vld [vmem:[%s8] sm:$0x1]
    %v94 = vlaneseq
    %v95 = vshrl.u32 %v94, 7
    %v96 = vsub.s32 0, %v95
    %v97 = vrot.slane %v92, %v96
    %vm99 = vcmask 130048
    %v101 = vsel %vm99, %v88, 0
    %v104 = vsel %vm99, %v89, 0
    %106 = vmatprep.subr.mxu0 0.0
    %107 = vmatpush1.msra.mxu0 %v90
    %108 = vmatprep.subr.mxu0 0.0
    %109 = vmatpush1.msra.mxu0 %v91
    %110 = vmatprep.subr.mxu0 0.0
    %111 = vmatpush1.msra.mxu0 0.0
    %112 = vmatprep.subr.mxu0 0.0
    %113 = vmatpush1.msra.mxu0 0.0
    %114 = vmatprep.subr.mxu0 0.0
    %115 = vmatpush1.msra.mxu0 0.0
    %116 = vmatprep.subr.mxu0 0.0
    %117 = vmatpush1.msra.mxu0 0.0
    %118 = vmatprep.subr.mxu0 0.0
    %119 = vmatpush1.msra.mxu0 0.0
    %120 = vmatprep.subr.mxu0 0.0
    %121 = vmatpush1.msra.mxu0 0.0
    %122 = vmatprep.subr.mxu0 0.0
    %123 = vmatpush1.msra.mxu0 0.0
    %124 = vmatprep.subr.mxu0 0.0
    %125 = vmatpush1.msra.mxu0 0.0
    %126 = vmatprep.subr.mxu0 0.0
    %127 = vmatpush1.msra.mxu0 0.0
    %128 = vmatprep.subr.mxu0 0.0
    %129 = vmatpush1.msra.mxu0 0.0
    %130 = vmatprep.subr.mxu0 0.0
    %131 = vmatpush1.msra.mxu0 0.0
    %132 = vmatprep.subr.mxu0 0.0
    %133 = vmatpush1.msra.mxu0 0.0
    %134 = vmatprep.subr.mxu0 0.0
    %135 = vmatpush1.msra.mxu0 0.0
    %136 = vmatprep.subr.mxu0 0.0
    %137 = vmatpush1.msra.mxu0 0.0
    %138 = vmatprep.subr.mxu0 0.0
    %139 = vmatpush1.msra.mxu0 0.0
    %140 = vmatprep.subr.mxu0 0.0
    %141 = vmatpush1.msra.mxu0 0.0
    %142 = vmatprep.subr.mxu0 0.0
    %143 = vmatpush1.msra.mxu0 0.0
    %144 = vmatprep.subr.mxu0 0.0
    %145 = vmatpush1.msra.mxu0 0.0
    %146 = vmatprep.subr.mxu0 0.0
    %147 = vmatpush1.msra.mxu0 0.0
    %148 = vmatprep.subr.mxu0 0.0
    %149 = vmatpush1.msra.mxu0 0.0
    %150 = vmatprep.subr.mxu0 0.0
    %151 = vmatpush1.msra.mxu0 0.0
    %152 = vmatprep.subr.mxu0 0.0
    %153 = vmatpush1.msra.mxu0 0.0
    %154 = vmatprep.subr.mxu0 0.0
    %155 = vmatpush1.msra.mxu0 0.0
    %156 = vmatprep.subr.mxu0 0.0
    %157 = vmatpush1.msra.mxu0 0.0
    %158 = vmatprep.subr.mxu0 0.0
    %159 = vmatpush1.msra.mxu0 0.0
    %160 = vmatprep.subr.mxu0 0.0
    %161 = vmatpush1.msra.mxu0 0.0
    %162 = vmatprep.subr.mxu0 0.0
    %163 = vmatpush1.msra.mxu0 0.0
    %164 = vmatprep.subr.mxu0 0.0
    %165 = vmatpush1.msra.mxu0 0.0
    %166 = vmatprep.subr.mxu0 0.0
    %167 = vmatpush1.msra.mxu0 0.0
    %168 = vmatprep.subr.mxu0 0.0
    %169 = vmatpush1.msra.mxu0 0.0
    %170 = vmatprep.mubr.f32.mxu0 0.0
    %171 = vmatmul.mubr.f32.gmra.mrb[0].mxu0 %v101
    %v172 = vpop.f32.mrb[0].mxu0
    %v173 = vadd.f32 %v97, %v172
    %v174 = vpop.f32.mrb[0].mxu0
    %175 = vmatprep.mubr.f32.mxu0 0.0
    %176 = vmatmul.mubr.f32.gmra.mrb[0].mxu0 %v104
    %v177 = vpop.f32.mrb[0].mxu0
    %v178 = vadd.f32 %v97, %v177
    %v179 = vpop.f32.mrb[0].mxu0
    %180 = vdwg.mxu0
    %182 = vset.pattern.permute.xlu0 0
    %183 = vperm.xlu0 %182, %v81
    %v184 = vpop.permute.xlu0 %183
    %187 = vset.pattern.permute.xlu0 0
    %188 = vperm.xlu0 %187, %v82
    %v189 = vpop.permute.xlu0 %188
    %v191 = vmul.f32 %v184, %v87
    %v192 = vmul.f32 %v189, %v87
    %v193 = vadd.f32 %v173, %v191
    %v194 = vadd.f32 %v178, %v192
    %v195 = vld [vmem:[%s2] sm:$0xff]
    %v196 = vld [vmem:[%s2 + $0x8] sm:$0xff]
    %v197 = vld [vmem:[%s2 + $0x10] sm:$0xff]
    %v198 = vld [vmem:[%s2 + $0x18] sm:$0xff]
    %v199 = vld [vmem:[%s2 + $0x20] sm:$0x3]
    %v200 = vld [vmem:[%s3] sm:$0x1]
    %v201 = vld [vmem:[%s4] sm:$0xff]
    %v202 = vld [vmem:[%s4 + $0x8] sm:$0xff]
    %v203 = vld [vmem:[%s4 + $0x10] sm:$0xff]
    %v204 = vld [vmem:[%s4 + $0x18] sm:$0xff]
    %v205 = vld [vmem:[%s4 + $0x20] sm:$0x3]
    %206 = vset.pattern.permute.xlu0 0
    %207 = vperm.xlu0 %206, %v195
    %v208 = vpop.permute.xlu0 %207
    %209 = vset.pattern.permute.xlu0 0
    %210 = vperm.xlu0 %209, %v196
    %v211 = vpop.permute.xlu0 %210
    %212 = vset.pattern.permute.xlu0 0
    %213 = vperm.xlu0 %212, %v197
    %v214 = vpop.permute.xlu0 %213
    %215 = vset.pattern.permute.xlu0 0
    %216 = vperm.xlu0 %215, %v198
    %v217 = vpop.permute.xlu0 %216
    %218 = vset.pattern.permute.xlu0 0
    %219 = vperm.xlu0 %218, %v199
    %v220 = vpop.permute.xlu0 %219
    %vm221 = vcmp.eq.s32.totalorder %v208, %v84
    %vm222 = vcmp.eq.s32.totalorder %v211, %v84
    %vm223 = vcmp.eq.s32.totalorder %v214, %v84
    %vm224 = vcmp.eq.s32.totalorder %v217, %v84
    %vm225 = vcmp.eq.s32.totalorder %v220, %v84
    %v226 = vsel %vm221, 1, 0
    %v227 = vsel %vm222, 1, 0
    %v228 = vsel %vm223, 1, 0
    %v229 = vsel %vm224, 1, 0
    %v230 = vsel %vm225, 1, 0
    %v231 = vcvt.s32.f32 %v226
    %v232 = vcvt.s32.f32 %v227
    %v233 = vcvt.s32.f32 %v228
    %v234 = vcvt.s32.f32 %v229
    %v235 = vcvt.s32.f32 %v230
    %236 = vset.pattern.permute.xlu0 0
    %237 = vperm.xlu0 %236, %v201
    %v238 = vpop.permute.xlu0 %237
    %239 = vset.pattern.permute.xlu0 0
    %240 = vperm.xlu0 %239, %v202
    %v241 = vpop.permute.xlu0 %240
    %242 = vset.pattern.permute.xlu0 0
    %243 = vperm.xlu0 %242, %v203
    %v244 = vpop.permute.xlu0 %243
    %245 = vset.pattern.permute.xlu0 0
    %246 = vperm.xlu0 %245, %v204
    %v247 = vpop.permute.xlu0 %246
    %248 = vset.pattern.permute.xlu0 0
    %249 = vperm.xlu0 %248, %v205
    %v250 = vpop.permute.xlu0 %249
    %vm251 = vcmp.eq.s32.totalorder %v238, %v84
    %vm252 = vcmp.eq.s32.totalorder %v241, %v84
    %vm253 = vcmp.eq.s32.totalorder %v244, %v84
    %vm254 = vcmp.eq.s32.totalorder %v247, %v84
    %vm255 = vcmp.eq.s32.totalorder %v250, %v84
    %v256 = vsel %vm251, 1, 0
    %v257 = vsel %vm252, 1, 0
    %v258 = vsel %vm253, 1, 0
    %v259 = vsel %vm254, 1, 0
    %v260 = vsel %vm255, 1, 0
    %v261 = vcvt.s32.f32 %v256
    %v262 = vcvt.s32.f32 %v257
    %v263 = vcvt.s32.f32 %v258
    %v264 = vcvt.s32.f32 %v259
    %v265 = vcvt.s32.f32 %v260
    %v266 = vlaneseq
    %v267 = vshrl.u32 %v266, 7
    %v268 = vadd.s32 %v267, 8
    %v269 = vlaneseq
    %v270 = vshrl.u32 %v269, 7
    %v271 = vsub.s32 0, %v270
    %v272 = vrot.slane %v200, %v271
    %vm273 = vcmp.eq.s32.totalorder %v272, %v267
    %vm274 = vcmp.eq.s32.totalorder %v272, %v268
    %v275 = vsel %vm273, 1, 0
    %v276 = vsel %vm274, 1, 0
    %v277 = vcvt.s32.f32 %v275
    %v278 = vcvt.s32.f32 %v276
    %v279 = vld [vmem:[%s5] sm:$0xff]
    %v280 = vld [vmem:[%s5 + $0x8] sm:$0x3]
    %v281 = vld [vmem:[%s6] sm:$0x1]
    %282 = vset.pattern.permute.xlu0 0
    %283 = vperm.xlu0 %282, %v279
    %v284 = vpop.permute.xlu0 %283
    %285 = vset.pattern.permute.xlu0 0
    %286 = vperm.xlu0 %285, %v280
    %v287 = vpop.permute.xlu0 %286
    %vm288 = vcmp.eq.s32.totalorder %v284, %v84
    %vm289 = vcmp.eq.s32.totalorder %v287, %v84
    %v290 = vsel %vm288, 1, 0
    %v291 = vsel %vm289, 1, 0
    %v292 = vcvt.s32.f32 %v290
    %v293 = vcvt.s32.f32 %v291
    %v294 = vlaneseq
    %v295 = vshrl.u32 %v294, 7
    %v296 = vsub.s32 0, %v295
    %v297 = vrot.slane %v281, %v296
    %vm298 = vcmp.eq.s32.totalorder %v297, %v267
    %v299 = vsel %vm298, 1, 0
    %v300 = vcvt.s32.f32 %v299
    %vm301 = vcmask 80896
    %v303 = vsel %vm301, %v261, 0
    %v306 = vsel %vm301, %v262, 0
    %v309 = vsel %vm301, %v263, 0
    %v312 = vsel %vm301, %v264, 0
    %v315 = vsel %vm301, %v265, 0
    %vm317 = vcmask 1041408
    %v318 = vsel %vm317, %v82, 0
    %320 = vmatprep.subr.mxu0 0.0
    %321 = vmatpush1.msra.mxu0 %v81
    %322 = vmatprep.subr.mxu0 0.0
    %323 = vmatpush1.msra.mxu0 %v318
    %324 = vmatprep.subr.mxu0 0.0
    %325 = vmatpush1.msra.mxu0 0.0
    %326 = vmatprep.subr.mxu0 0.0
    %327 = vmatpush1.msra.mxu0 0.0
    %328 = vmatprep.subr.mxu0 0.0
    %329 = vmatpush1.msra.mxu0 0.0
    %330 = vmatprep.subr.mxu0 0.0
    %331 = vmatpush1.msra.mxu0 0.0
    %332 = vmatprep.subr.mxu0 0.0
    %333 = vmatpush1.msra.mxu0 0.0
    %334 = vmatprep.subr.mxu0 0.0
    %335 = vmatpush1.msra.mxu0 0.0
    %336 = vmatprep.subr.mxu0 0.0
    %337 = vmatpush1.msra.mxu0 0.0
    %338 = vmatprep.subr.mxu0 0.0
    %339 = vmatpush1.msra.mxu0 0.0
    %340 = vmatprep.subr.mxu0 0.0
    %341 = vmatpush1.msra.mxu0 0.0
    %342 = vmatprep.subr.mxu0 0.0
    %343 = vmatpush1.msra.mxu0 0.0
    %344 = vmatprep.subr.mxu0 0.0
    %345 = vmatpush1.msra.mxu0 0.0
    %346 = vmatprep.subr.mxu0 0.0
    %347 = vmatpush1.msra.mxu0 0.0
    %348 = vmatprep.subr.mxu0 0.0
    %349 = vmatpush1.msra.mxu0 0.0
    %350 = vmatprep.subr.mxu0 0.0
    %351 = vmatpush1.msra.mxu0 0.0
    %352 = vmatprep.subr.mxu0 0.0
    %353 = vmatpush1.msra.mxu0 0.0
    %354 = vmatprep.subr.mxu0 0.0
    %355 = vmatpush1.msra.mxu0 0.0
    %356 = vmatprep.subr.mxu0 0.0
    %357 = vmatpush1.msra.mxu0 0.0
    %358 = vmatprep.subr.mxu0 0.0
    %359 = vmatpush1.msra.mxu0 0.0
    %360 = vmatprep.subr.mxu0 0.0
    %361 = vmatpush1.msra.mxu0 0.0
    %362 = vmatprep.subr.mxu0 0.0
    %363 = vmatpush1.msra.mxu0 0.0
    %364 = vmatprep.subr.mxu0 0.0
    %365 = vmatpush1.msra.mxu0 0.0
    %366 = vmatprep.subr.mxu0 0.0
    %367 = vmatpush1.msra.mxu0 0.0
    %368 = vmatprep.subr.mxu0 0.0
    %369 = vmatpush1.msra.mxu0 0.0
    %370 = vmatprep.subr.mxu0 0.0
    %371 = vmatpush1.msra.mxu0 0.0
    %372 = vmatprep.subr.mxu0 0.0
    %373 = vmatpush1.msra.mxu0 0.0
    %374 = vmatprep.subr.mxu0 0.0
    %375 = vmatpush1.msra.mxu0 0.0
    %376 = vmatprep.subr.mxu0 0.0
    %377 = vmatpush1.msra.mxu0 0.0
    %378 = vmatprep.subr.mxu0 0.0
    %379 = vmatpush1.msra.mxu0 0.0
    %380 = vmatprep.subr.mxu0 0.0
    %381 = vmatpush1.msra.mxu0 0.0
    %382 = vmatprep.subr.mxu0 0.0
    %383 = vmatpush1.msra.mxu0 0.0
    %384 = vmatprep.mubr.f32.mxu0 0.0
    %385 = vmatmul.mubr.f32.gmra.mrb[0].mxu0 %v303
    %v386 = vpop.f32.mrb[0].mxu0
    %v387 = vadd.f32 0.0, %v386
    %v388 = vpop.f32.mrb[0].mxu0
    %389 = vmatprep.mubr.f32.mxu0 0.0
    %390 = vmatmul.mubr.f32.gmra.mrb[0].mxu0 %v306
    %v391 = vpop.f32.mrb[0].mxu0
    %v392 = vadd.f32 0.0, %v391
    %v393 = vpop.f32.mrb[0].mxu0
    %394 = vmatprep.mubr.f32.mxu0 0.0
    %395 = vmatmul.mubr.f32.gmra.mrb[0].mxu0 %v309
    %v396 = vpop.f32.mrb[0].mxu0
    %v397 = vadd.f32 0.0, %v396
    %v398 = vpop.f32.mrb[0].mxu0
    %399 = vmatprep.mubr.f32.mxu0 0.0
    %400 = vmatmul.mubr.f32.gmra.mrb[0].mxu0 %v312
    %v401 = vpop.f32.mrb[0].mxu0
    %v402 = vadd.f32 0.0, %v401
    %v403 = vpop.f32.mrb[0].mxu0
    %404 = vmatprep.mubr.f32.mxu0 0.0
    %405 = vmatmul.mubr.f32.gmra.mrb[0].mxu0 %v315
    %v406 = vpop.f32.mrb[0].mxu0
    %v407 = vadd.f32 0.0, %v406
    %v408 = vpop.f32.mrb[0].mxu0
    %409 = vdwg.mxu0
    %v410 = vlog2.pop %v387
    %v411 = vmul.f32 %v410, 0.6931472
    %v412 = vlog2.pop %v392
    %v413 = vmul.f32 %v412, 0.6931472
    %v414 = vlog2.pop %v397
    %v415 = vmul.f32 %v414, 0.6931472
    %v416 = vlog2.pop %v402
    %v417 = vmul.f32 %v416, 0.6931472
    %v418 = vlog2.pop %v407
    %v419 = vmul.f32 %v418, 0.6931472
    %v420 = vlog2.pop %v81
    %v421 = vmul.f32 %v420, 0.6931472
    %v422 = vlog2.pop %v82
    %v423 = vmul.f32 %v422, 0.6931472
    %v424 = vld [vmem:[%s9] sm:$0x3]
    %v426 = vsel %vm301, %v231, 0
    %v429 = vsel %vm301, %v232, 0
    %v432 = vsel %vm301, %v233, 0
    %v435 = vsel %vm301, %v234, 0
    %v438 = vsel %vm301, %v235, 0
    %v441 = vsel %vm317, %v194, 0
    %443 = vmatprep.subr.mxu0 0.0
    %444 = vmatpush1.msra.mxu0 %v193
    %445 = vmatprep.subr.mxu0 0.0
    %446 = vmatpush1.msra.mxu0 %v441
    %447 = vmatprep.subr.mxu0 0.0
    %448 = vmatpush1.msra.mxu0 0.0
    %449 = vmatprep.subr.mxu0 0.0
    %450 = vmatpush1.msra.mxu0 0.0
    %451 = vmatprep.subr.mxu0 0.0
    %452 = vmatpush1.msra.mxu0 0.0
    %453 = vmatprep.subr.mxu0 0.0
    %454 = vmatpush1.msra.mxu0 0.0
    %455 = vmatprep.subr.mxu0 0.0
    %456 = vmatpush1.msra.mxu0 0.0
    %457 = vmatprep.subr.mxu0 0.0
    %458 = vmatpush1.msra.mxu0 0.0
    %459 = vmatprep.subr.mxu0 0.0
    %460 = vmatpush1.msra.mxu0 0.0
    %461 = vmatprep.subr.mxu0 0.0
    %462 = vmatpush1.msra.mxu0 0.0
    %463 = vmatprep.subr.mxu0 0.0
    %464 = vmatpush1.msra.mxu0 0.0
    %465 = vmatprep.subr.mxu0 0.0
    %466 = vmatpush1.msra.mxu0 0.0
    %467 = vmatprep.subr.mxu0 0.0
    %468 = vmatpush1.msra.mxu0 0.0
    %469 = vmatprep.subr.mxu0 0.0
    %470 = vmatpush1.msra.mxu0 0.0
    %471 = vmatprep.subr.mxu0 0.0
    %472 = vmatpush1.msra.mxu0 0.0
    %473 = vmatprep.subr.mxu0 0.0
    %474 = vmatpush1.msra.mxu0 0.0
    %475 = vmatprep.subr.mxu0 0.0
    %476 = vmatpush1.msra.mxu0 0.0
    %477 = vmatprep.subr.mxu0 0.0
    %478 = vmatpush1.msra.mxu0 0.0
    %479 = vmatprep.subr.mxu0 0.0
    %480 = vmatpush1.msra.mxu0 0.0
    %481 = vmatprep.subr.mxu0 0.0
    %482 = vmatpush1.msra.mxu0 0.0
    %483 = vmatprep.subr.mxu0 0.0
    %484 = vmatpush1.msra.mxu0 0.0
    %485 = vmatprep.subr.mxu0 0.0
    %486 = vmatpush1.msra.mxu0 0.0
    %487 = vmatprep.subr.mxu0 0.0
    %488 = vmatpush1.msra.mxu0 0.0
    %489 = vmatprep.subr.mxu0 0.0
    %490 = vmatpush1.msra.mxu0 0.0
    %491 = vmatprep.subr.mxu0 0.0
    %492 = vmatpush1.msra.mxu0 0.0
    %493 = vmatprep.subr.mxu0 0.0
    %494 = vmatpush1.msra.mxu0 0.0
    %495 = vmatprep.subr.mxu0 0.0
    %496 = vmatpush1.msra.mxu0 0.0
    %497 = vmatprep.subr.mxu0 0.0
    %498 = vmatpush1.msra.mxu0 0.0
    %499 = vmatprep.subr.mxu0 0.0
    %500 = vmatpush1.msra.mxu0 0.0
    %501 = vmatprep.subr.mxu0 0.0
    %502 = vmatpush1.msra.mxu0 0.0
    %503 = vmatprep.subr.mxu0 0.0
    %504 = vmatpush1.msra.mxu0 0.0
    %505 = vmatprep.subr.mxu0 0.0
    %506 = vmatpush1.msra.mxu0 0.0
    %507 = vmatprep.mubr.f32.mxu0 0.0
    %508 = vmatmul.mubr.f32.gmra.mrb[0].mxu0 %v426
    %v509 = vpop.f32.mrb[0].mxu0
    %v510 = vadd.f32 0.0, %v509
    %v511 = vpop.f32.mrb[0].mxu0
    %512 = vmatprep.mubr.f32.mxu0 0.0
    %513 = vmatmul.mubr.f32.gmra.mrb[0].mxu0 %v429
    %v514 = vpop.f32.mrb[0].mxu0
    %v515 = vadd.f32 0.0, %v514
    %v516 = vpop.f32.mrb[0].mxu0
    %517 = vmatprep.mubr.f32.mxu0 0.0
    %518 = vmatmul.mubr.f32.gmra.mrb[0].mxu0 %v432
    %v519 = vpop.f32.mrb[0].mxu0
    %v520 = vadd.f32 0.0, %v519
    %v521 = vpop.f32.mrb[0].mxu0
    %522 = vmatprep.mubr.f32.mxu0 0.0
    %523 = vmatmul.mubr.f32.gmra.mrb[0].mxu0 %v435
    %v524 = vpop.f32.mrb[0].mxu0
    %v525 = vadd.f32 0.0, %v524
    %v526 = vpop.f32.mrb[0].mxu0
    %527 = vmatprep.mubr.f32.mxu0 0.0
    %528 = vmatmul.mubr.f32.gmra.mrb[0].mxu0 %v438
    %v529 = vpop.f32.mrb[0].mxu0
    %v530 = vadd.f32 0.0, %v529
    %v531 = vpop.f32.mrb[0].mxu0
    %532 = vdwg.mxu0
    %533 = vmatprep.subr.mxu0 0.0
    %534 = vmatpush1.msra.mxu0 %v193
    %535 = vmatprep.subr.mxu0 0.0
    %536 = vmatpush1.msra.mxu0 %v441
    %537 = vmatprep.subr.mxu0 0.0
    %538 = vmatpush1.msra.mxu0 0.0
    %539 = vmatprep.subr.mxu0 0.0
    %540 = vmatpush1.msra.mxu0 0.0
    %541 = vmatprep.subr.mxu0 0.0
    %542 = vmatpush1.msra.mxu0 0.0
    %543 = vmatprep.subr.mxu0 0.0
    %544 = vmatpush1.msra.mxu0 0.0
    %545 = vmatprep.subr.mxu0 0.0
    %546 = vmatpush1.msra.mxu0 0.0
    %547 = vmatprep.subr.mxu0 0.0
    %548 = vmatpush1.msra.mxu0 0.0
    %549 = vmatprep.subr.mxu0 0.0
    %550 = vmatpush1.msra.mxu0 0.0
    %551 = vmatprep.subr.mxu0 0.0
    %552 = vmatpush1.msra.mxu0 0.0
    %553 = vmatprep.subr.mxu0 0.0
    %554 = vmatpush1.msra.mxu0 0.0
    %555 = vmatprep.subr.mxu0 0.0
    %556 = vmatpush1.msra.mxu0 0.0
    %557 = vmatprep.subr.mxu0 0.0
    %558 = vmatpush1.msra.mxu0 0.0
    %559 = vmatprep.subr.mxu0 0.0
    %560 = vmatpush1.msra.mxu0 0.0
    %561 = vmatprep.subr.mxu0 0.0
    %562 = vmatpush1.msra.mxu0 0.0
    %563 = vmatprep.subr.mxu0 0.0
    %564 = vmatpush1.msra.mxu0 0.0
    %565 = vmatprep.subr.mxu0 0.0
    %566 = vmatpush1.msra.mxu0 0.0
    %567 = vmatprep.subr.mxu0 0.0
    %568 = vmatpush1.msra.mxu0 0.0
    %569 = vmatprep.subr.mxu0 0.0
    %570 = vmatpush1.msra.mxu0 0.0
    %571 = vmatprep.subr.mxu0 0.0
    %572 = vmatpush1.msra.mxu0 0.0
    %573 = vmatprep.subr.mxu0 0.0
    %574 = vmatpush1.msra.mxu0 0.0
    %575 = vmatprep.subr.mxu0 0.0
    %576 = vmatpush1.msra.mxu0 0.0
    %577 = vmatprep.subr.mxu0 0.0
    %578 = vmatpush1.msra.mxu0 0.0
    %579 = vmatprep.subr.mxu0 0.0
    %580 = vmatpush1.msra.mxu0 0.0
    %581 = vmatprep.subr.mxu0 0.0
    %582 = vmatpush1.msra.mxu0 0.0
    %583 = vmatprep.subr.mxu0 0.0
    %584 = vmatpush1.msra.mxu0 0.0
    %585 = vmatprep.subr.mxu0 0.0
    %586 = vmatpush1.msra.mxu0 0.0
    %587 = vmatprep.subr.mxu0 0.0
    %588 = vmatpush1.msra.mxu0 0.0
    %589 = vmatprep.subr.mxu0 0.0
    %590 = vmatpush1.msra.mxu0 0.0
    %591 = vmatprep.subr.mxu0 0.0
    %592 = vmatpush1.msra.mxu0 0.0
    %593 = vmatprep.subr.mxu0 0.0
    %594 = vmatpush1.msra.mxu0 0.0
    %595 = vmatprep.subr.mxu0 0.0
    %596 = vmatpush1.msra.mxu0 0.0
    %597 = vmatprep.mubr.f32.mxu0 0.0
    %598 = vmatmul.mubr.f32.gmra.mrb[0].mxu0 %v303
    %v599 = vpop.f32.mrb[0].mxu0
    %v600 = vadd.f32 0.0, %v599
    %v601 = vpop.f32.mrb[0].mxu0
    %602 = vmatprep.mubr.f32.mxu0 0.0
    %603 = vmatmul.mubr.f32.gmra.mrb[0].mxu0 %v306
    %v604 = vpop.f32.mrb[0].mxu0
    %v605 = vadd.f32 0.0, %v604
    %v606 = vpop.f32.mrb[0].mxu0
    %607 = vmatprep.mubr.f32.mxu0 0.0
    %608 = vmatmul.mubr.f32.gmra.mrb[0].mxu0 %v309
    %v609 = vpop.f32.mrb[0].mxu0
    %v610 = vadd.f32 0.0, %v609
    %v611 = vpop.f32.mrb[0].mxu0
    %612 = vmatprep.mubr.f32.mxu0 0.0
    %613 = vmatmul.mubr.f32.gmra.mrb[0].mxu0 %v312
    %v614 = vpop.f32.mrb[0].mxu0
    %v615 = vadd.f32 0.0, %v614
    %v616 = vpop.f32.mrb[0].mxu0
    %617 = vmatprep.mubr.f32.mxu0 0.0
    %618 = vmatmul.mubr.f32.gmra.mrb[0].mxu0 %v315
    %v619 = vpop.f32.mrb[0].mxu0
    %v620 = vadd.f32 0.0, %v619
    %v621 = vpop.f32.mrb[0].mxu0
    %622 = vdwg.mxu0
    %628 = vrot.lane.b32.xlu0 %v600, 32
    %v629 = vpop.permute.xlu0 %628
    %630 = vrot.lane.b32.xlu0 %v605, 32
    %v631 = vpop.permute.xlu0 %630
    %632 = vrot.lane.b32.xlu0 %v610, 32
    %v633 = vpop.permute.xlu0 %632
    %634 = vrot.lane.b32.xlu0 %v615, 32
    %v635 = vpop.permute.xlu0 %634
    %636 = vrot.lane.b32.xlu0 %v620, 32
    %v637 = vpop.permute.xlu0 %636
    %vm643 = vcmask 261120
    %v644 = vsel %vm643, %v510, %v629
    %v645 = vsel %vm643, %v515, %v631
    %v646 = vsel %vm643, %v520, %v633
    %v647 = vsel %vm643, %v525, %v635
    %v648 = vsel %vm643, %v530, %v637
    %v649 = vld [vmem:[%s10] sm:$0xff]
    %v650 = vld [vmem:[%s10 + $0x8] sm:$0xff]
    %v651 = vld [vmem:[%s10 + $0x10] sm:$0xff]
    %v652 = vld [vmem:[%s10 + $0x18] sm:$0xff]
    %v653 = vld [vmem:[%s10 + $0x20] sm:$0xff]
    %v654 = vld [vmem:[%s10 + $0x28] sm:$0xff]
    %v655 = vld [vmem:[%s10 + $0x30] sm:$0xff]
    %v656 = vld [vmem:[%s10 + $0x38] sm:$0xff]
    %v657 = vld [vmem:[%s10 + $0x40] sm:$0xff]
    %v658 = vld [vmem:[%s10 + $0x48] sm:$0xff]
    %v659 = vld [vmem:[%s10 + $0x50] sm:$0xff]
    %v660 = vld [vmem:[%s10 + $0x58] sm:$0xff]
    %v661 = vld [vmem:[%s10 + $0x60] sm:$0xff]
    %v662 = vld [vmem:[%s10 + $0x68] sm:$0xff]
    %v663 = vld [vmem:[%s10 + $0x70] sm:$0xff]
    %v664 = vld [vmem:[%s10 + $0x78] sm:$0xff]
    %v665 = vld [vmem:[%s11] sm:$0x3]
    %v666 = vld [vmem:[%s12] sm:$0xff]
    %v667 = vld [vmem:[%s12 + $0x8] sm:$0xff]
    %v668 = vld [vmem:[%s12 + $0x10] sm:$0xff]
    %v669 = vld [vmem:[%s12 + $0x18] sm:$0xff]
    %v670 = vld [vmem:[%s12 + $0x20] sm:$0xff]
    %v671 = vld [vmem:[%s12 + $0x28] sm:$0xff]
    %v672 = vld [vmem:[%s12 + $0x30] sm:$0xff]
    %v673 = vld [vmem:[%s12 + $0x38] sm:$0xff]
    %v674 = vld [vmem:[%s12 + $0x40] sm:$0xff]
    %v675 = vld [vmem:[%s12 + $0x48] sm:$0xff]
    %v676 = vld [vmem:[%s12 + $0x50] sm:$0xff]
    %v677 = vld [vmem:[%s12 + $0x58] sm:$0xff]
    %v678 = vld [vmem:[%s12 + $0x60] sm:$0xff]
    %v679 = vld [vmem:[%s12 + $0x68] sm:$0xff]
    %v680 = vld [vmem:[%s12 + $0x70] sm:$0xff]
    %v681 = vld [vmem:[%s12 + $0x78] sm:$0xff]
    %v682 = vld [vmem:[%s13] sm:$0x1]
    %v683 = vld [vmem:[%s14] sm:$0xff]
    %v684 = vld [vmem:[%s14 + $0x8] sm:$0xff]
    %v685 = vld [vmem:[%s14 + $0x10] sm:$0xff]
    %v686 = vld [vmem:[%s14 + $0x18] sm:$0xff]
    %v687 = vld [vmem:[%s14 + $0x20] sm:$0xff]
    %v688 = vld [vmem:[%s14 + $0x28] sm:$0xff]
    %v689 = vld [vmem:[%s14 + $0x30] sm:$0xff]
    %v690 = vld [vmem:[%s14 + $0x38] sm:$0xff]
    %v691 = vld [vmem:[%s14 + $0x40] sm:$0xff]
    %v692 = vld [vmem:[%s14 + $0x48] sm:$0xff]
    %v693 = vld [vmem:[%s14 + $0x50] sm:$0xff]
    %v694 = vld [vmem:[%s14 + $0x58] sm:$0xff]
    %v695 = vld [vmem:[%s14 + $0x60] sm:$0xff]
    %v696 = vld [vmem:[%s14 + $0x68] sm:$0xff]
    %v697 = vld [vmem:[%s14 + $0x70] sm:$0xff]
    %v698 = vld [vmem:[%s14 + $0x78] sm:$0xff]
    %v699 = vld [vmem:[%s15] sm:$0x3]
    %v700 = vld [vmem:[%s16] sm:$0x1]
    %v702 = vlaneseq
    %v703 = vshrl.u32 %v702, 7
    %v704 = vsub.s32 0, %v703
    %v705 = vrot.slane %v665, %v704
    %v706 = vlaneseq
    %v707 = vshrl.u32 %v706, 7
    %v708 = vsub.s32 1, %v707
    %v709 = vrot.slane %v665, %v708
    %vm712 = vcmask 523264
    %v714 = vsel %vm712, %v644, 0
    %v717 = vsel %vm712, %v645, 0
    %v720 = vsel %vm712, %v646, 0
    %v723 = vsel %vm712, %v647, 0
    %v726 = vsel %vm712, %v648, 0
    %728 = vmatprep.subr.mxu0 %v650
    %729 = vmatpush1.msra.mxu0 %v649
    %730 = vmatprep.subr.mxu0 %v652
    %731 = vmatpush1.msra.mxu0 %v651
    %732 = vmatprep.subr.mxu0 %v654
    %733 = vmatpush1.msra.mxu0 %v653
    %734 = vmatprep.subr.mxu0 %v656
    %735 = vmatpush1.msra.mxu0 %v655
    %736 = vmatprep.subr.mxu0 %v658
    %737 = vmatpush1.msra.mxu0 %v657
    %738 = vmatprep.subr.mxu0 %v660
    %739 = vmatpush1.msra.mxu0 %v659
    %740 = vmatprep.subr.mxu0 %v662
    %741 = vmatpush1.msra.mxu0 %v661
    %742 = vmatprep.subr.mxu0 %v664
    %743 = vmatpush1.msra.mxu0 %v663
    %744 = vmatprep.subr.mxu0 0.0
    %745 = vmatpush1.msra.mxu0 0.0
    %746 = vmatprep.subr.mxu0 0.0
    %747 = vmatpush1.msra.mxu0 0.0
    %748 = vmatprep.subr.mxu0 0.0
    %749 = vmatpush1.msra.mxu0 0.0
    %750 = vmatprep.subr.mxu0 0.0
    %751 = vmatpush1.msra.mxu0 0.0
    %752 = vmatprep.subr.mxu0 0.0
    %753 = vmatpush1.msra.mxu0 0.0
    %754 = vmatprep.subr.mxu0 0.0
    %755 = vmatpush1.msra.mxu0 0.0
    %756 = vmatprep.subr.mxu0 0.0
    %757 = vmatpush1.msra.mxu0 0.0
    %758 = vmatprep.subr.mxu0 0.0
    %759 = vmatpush1.msra.mxu0 0.0
    %760 = vmatprep.subr.mxu0 0.0
    %761 = vmatpush1.msra.mxu0 0.0
    %762 = vmatprep.subr.mxu0 0.0
    %763 = vmatpush1.msra.mxu0 0.0
    %764 = vmatprep.subr.mxu0 0.0
    %765 = vmatpush1.msra.mxu0 0.0
    %766 = vmatprep.subr.mxu0 0.0
    %767 = vmatpush1.msra.mxu0 0.0
    %768 = vmatprep.subr.mxu0 0.0
    %769 = vmatpush1.msra.mxu0 0.0
    %770 = vmatprep.subr.mxu0 0.0
    %771 = vmatpush1.msra.mxu0 0.0
    %772 = vmatprep.subr.mxu0 0.0
    %773 = vmatpush1.msra.mxu0 0.0
    %774 = vmatprep.subr.mxu0 0.0
    %775 = vmatpush1.msra.mxu0 0.0
    %776 = vmatprep.subr.mxu0 0.0
    %777 = vmatpush1.msra.mxu0 0.0
    %778 = vmatprep.subr.mxu0 0.0
    %779 = vmatpush1.msra.mxu0 0.0
    %780 = vmatprep.subr.mxu0 0.0
    %781 = vmatpush1.msra.mxu0 0.0
    %782 = vmatprep.subr.mxu0 0.0
    %783 = vmatpush1.msra.mxu0 0.0
    %784 = vmatprep.subr.mxu0 0.0
    %785 = vmatpush1.msra.mxu0 0.0
    %786 = vmatprep.subr.mxu0 0.0
    %787 = vmatpush1.msra.mxu0 0.0
    %788 = vmatprep.subr.mxu0 0.0
    %789 = vmatpush1.msra.mxu0 0.0
    %790 = vmatprep.subr.mxu0 0.0
    %791 = vmatpush1.msra.mxu0 0.0
    %792 = vmatprep.mubr.f32.mxu0 0.0
    %793 = vmatmul.mubr.f32.gmra.mrb[0].mxu0 %v714
    %v794 = vpop.f32.mrb[0].mxu0
    %v795 = vadd.f32 %v705, %v794
    %v796 = vpop.f32.mrb[0].mxu0
    %v797 = vadd.f32 %v709, %v796
    %798 = vmatprep.mubr.f32.mxu0 0.0
    %799 = vmatmul.mubr.f32.gmra.mrb[0].mxu0 %v717
    %v800 = vpop.f32.mrb[0].mxu0
    %v801 = vadd.f32 %v705, %v800
    %v802 = vpop.f32.mrb[0].mxu0
    %v803 = vadd.f32 %v709, %v802
    %804 = vmatprep.mubr.f32.mxu0 0.0
    %805 = vmatmul.mubr.f32.gmra.mrb[0].mxu0 %v720
    %v806 = vpop.f32.mrb[0].mxu0
    %v807 = vadd.f32 %v705, %v806
    %v808 = vpop.f32.mrb[0].mxu0
    %v809 = vadd.f32 %v709, %v808
    %810 = vmatprep.mubr.f32.mxu0 0.0
    %811 = vmatmul.mubr.f32.gmra.mrb[0].mxu0 %v723
    %v812 = vpop.f32.mrb[0].mxu0
    %v813 = vadd.f32 %v705, %v812
    %v814 = vpop.f32.mrb[0].mxu0
    %v815 = vadd.f32 %v709, %v814
    %816 = vmatprep.mubr.f32.mxu0 0.0
    %817 = vmatmul.mubr.f32.gmra.mrb[0].mxu0 %v726
    %v818 = vpop.f32.mrb[0].mxu0
    %v819 = vadd.f32 %v705, %v818
    %v820 = vpop.f32.mrb[0].mxu0
    %v821 = vadd.f32 %v709, %v820
    %822 = vdwg.mxu0
    %vm823 = vcmp.gt.f32.partialorder %v795, 0.0
    %vm824 = vcmp.gt.f32.partialorder %v797, 0.0
    %vm825 = vcmp.gt.f32.partialorder %v801, 0.0
    %vm826 = vcmp.gt.f32.partialorder %v803, 0.0
    %vm827 = vcmp.gt.f32.partialorder %v807, 0.0
    %vm828 = vcmp.gt.f32.partialorder %v809, 0.0
    %vm829 = vcmp.gt.f32.partialorder %v813, 0.0
    %vm830 = vcmp.gt.f32.partialorder %v815, 0.0
    %vm831 = vcmp.gt.f32.partialorder %v819, 0.0
    %vm832 = vcmp.gt.f32.partialorder %v821, 0.0
    %v833 = vmul.f32 %v795, 0.01
    %v834 = vmul.f32 %v797, 0.01
    %v835 = vmul.f32 %v801, 0.01
    %v836 = vmul.f32 %v803, 0.01
    %v837 = vmul.f32 %v807, 0.01
    %v838 = vmul.f32 %v809, 0.01
    %v839 = vmul.f32 %v813, 0.01
    %v840 = vmul.f32 %v815, 0.01
    %v841 = vmul.f32 %v819, 0.01
    %v842 = vmul.f32 %v821, 0.01
    %v843 = vsel %vm823, %v795, %v833
    %v844 = vsel %vm824, %v797, %v834
    %v845 = vsel %vm825, %v801, %v835
    %v846 = vsel %vm826, %v803, %v836
    %v847 = vsel %vm827, %v807, %v837
    %v848 = vsel %vm828, %v809, %v838
    %v849 = vsel %vm829, %v813, %v839
    %v850 = vsel %vm830, %v815, %v840
    %v851 = vsel %vm831, %v819, %v841
    %v852 = vsel %vm832, %v821, %v842
    %v854 = vlaneseq
    %v855 = vshrl.u32 %v854, 7
    %v856 = vsub.s32 0, %v855
    %v857 = vrot.slane %v682, %v856
    %859 = vmatprep.subr.mxu0 0.0
    %860 = vmatpush1.msra.mxu0 %v666
    %861 = vmatprep.subr.mxu0 0.0
    %862 = vmatpush1.msra.mxu0 %v667
    %863 = vmatprep.subr.mxu0 0.0
    %864 = vmatpush1.msra.mxu0 %v668
    %865 = vmatprep.subr.mxu0 0.0
    %866 = vmatpush1.msra.mxu0 %v669
    %867 = vmatprep.subr.mxu0 0.0
    %868 = vmatpush1.msra.mxu0 %v670
    %869 = vmatprep.subr.mxu0 0.0
    %870 = vmatpush1.msra.mxu0 %v671
    %871 = vmatprep.subr.mxu0 0.0
    %872 = vmatpush1.msra.mxu0 %v672
    %873 = vmatprep.subr.mxu0 0.0
    %874 = vmatpush1.msra.mxu0 %v673
    %875 = vmatprep.subr.mxu0 0.0
    %876 = vmatpush1.msra.mxu0 %v674
    %877 = vmatprep.subr.mxu0 0.0
    %878 = vmatpush1.msra.mxu0 %v675
    %879 = vmatprep.subr.mxu0 0.0
    %880 = vmatpush1.msra.mxu0 %v676
    %881 = vmatprep.subr.mxu0 0.0
    %882 = vmatpush1.msra.mxu0 %v677
    %883 = vmatprep.subr.mxu0 0.0
    %884 = vmatpush1.msra.mxu0 %v678
    %885 = vmatprep.subr.mxu0 0.0
    %886 = vmatpush1.msra.mxu0 %v679
    %887 = vmatprep.subr.mxu0 0.0
    %888 = vmatpush1.msra.mxu0 %v680
    %889 = vmatprep.subr.mxu0 0.0
    %890 = vmatpush1.msra.mxu0 %v681
    %891 = vmatprep.subr.mxu0 0.0
    %892 = vmatpush1.msra.mxu0 0.0
    %893 = vmatprep.subr.mxu0 0.0
    %894 = vmatpush1.msra.mxu0 0.0
    %895 = vmatprep.subr.mxu0 0.0
    %896 = vmatpush1.msra.mxu0 0.0
    %897 = vmatprep.subr.mxu0 0.0
    %898 = vmatpush1.msra.mxu0 0.0
    %899 = vmatprep.subr.mxu0 0.0
    %900 = vmatpush1.msra.mxu0 0.0
    %901 = vmatprep.subr.mxu0 0.0
    %902 = vmatpush1.msra.mxu0 0.0
    %903 = vmatprep.subr.mxu0 0.0
    %904 = vmatpush1.msra.mxu0 0.0
    %905 = vmatprep.subr.mxu0 0.0
    %906 = vmatpush1.msra.mxu0 0.0
    %907 = vmatprep.subr.mxu0 0.0
    %908 = vmatpush1.msra.mxu0 0.0
    %909 = vmatprep.subr.mxu0 0.0
    %910 = vmatpush1.msra.mxu0 0.0
    %911 = vmatprep.subr.mxu0 0.0
    %912 = vmatpush1.msra.mxu0 0.0
    %913 = vmatprep.subr.mxu0 0.0
    %914 = vmatpush1.msra.mxu0 0.0
    %915 = vmatprep.subr.mxu0 0.0
    %916 = vmatpush1.msra.mxu0 0.0
    %917 = vmatprep.subr.mxu0 0.0
    %918 = vmatpush1.msra.mxu0 0.0
    %919 = vmatprep.subr.mxu0 0.0
    %920 = vmatpush1.msra.mxu0 0.0
    %921 = vmatprep.subr.mxu0 0.0
    %922 = vmatpush1.msra.mxu0 0.0
    %923 = vmatprep.mubr.f32.mxu0 0.0
    %924 = vmatmul.mubr.f32.gmra.mrb[0].mxu0 %v843
    %v925 = vpop.f32.mrb[0].mxu0
    %v926 = vadd.f32 %v857, %v925
    %v927 = vpop.f32.mrb[0].mxu0
    %928 = vmatprep.mubr.f32.mxu0 0.0
    %929 = vmatmul.mubr.f32.gmra.mrb[0].mxu0 %v845
    %v930 = vpop.f32.mrb[0].mxu0
    %v931 = vadd.f32 %v857, %v930
    %v932 = vpop.f32.mrb[0].mxu0
    %933 = vmatprep.mubr.f32.mxu0 0.0
    %934 = vmatmul.mubr.f32.gmra.mrb[0].mxu0 %v847
    %v935 = vpop.f32.mrb[0].mxu0
    %v936 = vadd.f32 %v857, %v935
    %v937 = vpop.f32.mrb[0].mxu0
    %938 = vmatprep.mubr.f32.mxu0 0.0
    %939 = vmatmul.mubr.f32.gmra.mrb[0].mxu0 %v849
    %v940 = vpop.f32.mrb[0].mxu0
    %v941 = vadd.f32 %v857, %v940
    %v942 = vpop.f32.mrb[0].mxu0
    %943 = vmatprep.mubr.f32.mxu0 0.0
    %944 = vmatmul.mubr.f32.gmra.mrb[0].mxu0 %v851
    %v945 = vpop.f32.mrb[0].mxu0
    %v946 = vadd.f32 %v857, %v945
    %v947 = vpop.f32.mrb[0].mxu0
    %948 = vdwg.mxu0
    %950 = vset.pattern.permute.xlu0 0
    %951 = vperm.xlu0 %950, %v926
    %v952 = vpop.permute.xlu0 %951
    %955 = vset.pattern.permute.xlu0 0
    %956 = vperm.xlu0 %955, %v931
    %v957 = vpop.permute.xlu0 %956
    %960 = vset.pattern.permute.xlu0 0
    %961 = vperm.xlu0 %960, %v936
    %v962 = vpop.permute.xlu0 %961
    %965 = vset.pattern.permute.xlu0 0
    %966 = vperm.xlu0 %965, %v941
    %v967 = vpop.permute.xlu0 %966
    %970 = vset.pattern.permute.xlu0 0
    %971 = vperm.xlu0 %970, %v946
    %v972 = vpop.permute.xlu0 %971
    %v974 = vsel %vm221, %v952, -1e+30
    %v975 = vsel %vm222, %v957, -1e+30
    %v976 = vsel %vm223, %v962, -1e+30
    %v977 = vsel %vm224, %v967, -1e+30
    %v978 = vsel %vm225, %v972, -1e+30
    %v979 = vsel %vm301, %v974, -inf
    %v980 = vsel %vm301, %v975, -inf
    %v981 = vsel %vm301, %v976, -inf
    %v982 = vsel %vm301, %v977, -inf
    %vm983 = vcmask 74752
    %v984 = vsel %vm983, %v978, -inf
    %v985 = vmax.f32 %v979, %v984
    %v986 = vmax.f32 %v985, %v980
    %v987 = vmax.f32 %v981, %v982
    %v988 = vmax.f32 %v986, %v987
    %v989 = vrot.slane %v988, 4
    %v990 = vmax.f32 %v988, %v989
    %v991 = vrot.slane %v990, 2
    %v992 = vmax.f32 %v990, %v991
    %v993 = vrot.slane %v992, 1
    %v994 = vmax.f32 %v992, %v993
    %v995 = vmul.f32 %v231, %v994
    %v996 = vmul.f32 %v232, %v994
    %v997 = vmul.f32 %v233, %v994
    %v998 = vmul.f32 %v234, %v994
    %v999 = vmul.f32 %v235, %v994
    %v1000 = vsel %vm301, %v995, 0.0
    %1001 = vadd.xlane.f32.xlu0 %v1000
    %v1002 = vpop.xlane.xlu0 %1001
    %v1003 = vsel %vm301, %v996, 0.0
    %1004 = vadd.xlane.f32.xlu0 %v1003
    %v1005 = vpop.xlane.xlu0 %1004
    %v1006 = vsel %vm301, %v997, 0.0
    %1007 = vadd.xlane.f32.xlu0 %v1006
    %v1008 = vpop.xlane.xlu0 %1007
    %v1009 = vsel %vm301, %v998, 0.0
    %1010 = vadd.xlane.f32.xlu0 %v1009
    %v1011 = vpop.xlane.xlu0 %1010
    %v1012 = vsel %vm983, %v999, 0.0
    %1013 = vadd.xlane.f32.xlu0 %v1012
    %v1014 = vpop.xlane.xlu0 %1013
    %1015 = vset.pattern.permute.xlu0 1
    %1016 = vperm.xlu0 %1015, %v926
    %v1017 = vpop.permute.xlu0 %1016
    %1019 = vset.pattern.permute.xlu0 1
    %1020 = vperm.xlu0 %1019, %v931
    %v1021 = vpop.permute.xlu0 %1020
    %1023 = vset.pattern.permute.xlu0 1
    %1024 = vperm.xlu0 %1023, %v936
    %v1025 = vpop.permute.xlu0 %1024
    %1027 = vset.pattern.permute.xlu0 1
    %1028 = vperm.xlu0 %1027, %v941
    %v1029 = vpop.permute.xlu0 %1028
    %1031 = vset.pattern.permute.xlu0 1
    %1032 = vperm.xlu0 %1031, %v946
    %v1033 = vpop.permute.xlu0 %1032
    %v1035 = vsel %vm221, %v1017, -1e+30
    %v1036 = vsel %vm222, %v1021, -1e+30
    %v1037 = vsel %vm223, %v1025, -1e+30
    %v1038 = vsel %vm224, %v1029, -1e+30
    %v1039 = vsel %vm225, %v1033, -1e+30
    %v1040 = vsel %vm301, %v1035, -inf
    %v1041 = vsel %vm301, %v1036, -inf
    %v1042 = vsel %vm301, %v1037, -inf
    %v1043 = vsel %vm301, %v1038, -inf
    %v1044 = vsel %vm983, %v1039, -inf
    %v1045 = vmax.f32 %v1040, %v1044
    %v1046 = vmax.f32 %v1045, %v1041
    %v1047 = vmax.f32 %v1042, %v1043
    %v1048 = vmax.f32 %v1046, %v1047
    %v1049 = vrot.slane %v1048, 4
    %v1050 = vmax.f32 %v1048, %v1049
    %v1051 = vrot.slane %v1050, 2
    %v1052 = vmax.f32 %v1050, %v1051
    %v1053 = vrot.slane %v1052, 1
    %v1054 = vmax.f32 %v1052, %v1053
    %v1055 = vmul.f32 %v231, %v1054
    %v1056 = vmul.f32 %v232, %v1054
    %v1057 = vmul.f32 %v233, %v1054
    %v1058 = vmul.f32 %v234, %v1054
    %v1059 = vmul.f32 %v235, %v1054
    %v1060 = vsel %vm301, %v1055, 0.0
    %1061 = vadd.xlane.f32.xlu0 %v1060
    %v1062 = vpop.xlane.xlu0 %1061
    %v1063 = vsel %vm301, %v1056, 0.0
    %1064 = vadd.xlane.f32.xlu0 %v1063
    %v1065 = vpop.xlane.xlu0 %1064
    %v1066 = vsel %vm301, %v1057, 0.0
    %1067 = vadd.xlane.f32.xlu0 %v1066
    %v1068 = vpop.xlane.xlu0 %1067
    %v1069 = vsel %vm301, %v1058, 0.0
    %1070 = vadd.xlane.f32.xlu0 %v1069
    %v1071 = vpop.xlane.xlu0 %1070
    %v1072 = vsel %vm983, %v1059, 0.0
    %1073 = vadd.xlane.f32.xlu0 %v1072
    %v1074 = vpop.xlane.xlu0 %1073
    %vm1075 = vcmask 7168
    %v1076 = vsel %vm1075, %v1002, %v1062
    %v1077 = vsel %vm1075, %v1005, %v1065
    %v1078 = vsel %vm1075, %v1008, %v1068
    %v1079 = vsel %vm1075, %v1011, %v1071
    %v1080 = vsel %vm1075, %v1014, %v1074
    %v1082 = vlaneseq
    %v1083 = vshrl.u32 %v1082, 7
    %v1084 = vsub.s32 0, %v1083
    %v1085 = vrot.slane %v700, %v1084
    %1088 = vset.pattern.permute.xlu0 0
    %1089 = vperm.xlu0 %1088, %v411
    %v1090 = vpop.permute.xlu0 %1089
    %1093 = vset.pattern.permute.xlu0 0
    %1094 = vperm.xlu0 %1093, %v413
    %v1095 = vpop.permute.xlu0 %1094
    %1098 = vset.pattern.permute.xlu0 0
    %1099 = vperm.xlu0 %1098, %v415
    %v1100 = vpop.permute.xlu0 %1099
    %1103 = vset.pattern.permute.xlu0 0
    %1104 = vperm.xlu0 %1103, %v417
    %v1105 = vpop.permute.xlu0 %1104
    %1108 = vset.pattern.permute.xlu0 0
    %1109 = vperm.xlu0 %1108, %v419
    %v1110 = vpop.permute.xlu0 %1109
    %v1112 = vmul.f32 %v1085, %v1090
    %v1113 = vmul.f32 %v1085, %v1095
    %v1114 = vmul.f32 %v1085, %v1100
    %v1115 = vmul.f32 %v1085, %v1105
    %v1116 = vmul.f32 %v1085, %v1110
    %v1117 = vmul.f32 %v1112, 1.442695
    %v1118 = vpow.pop %v1117
    %v1119 = vmul.f32 %v1113, 1.442695
    %v1120 = vpow.pop %v1119
    %v1121 = vmul.f32 %v1114, 1.442695
    %v1122 = vpow.pop %v1121
    %v1123 = vmul.f32 %v1115, 1.442695
    %v1124 = vpow.pop %v1123
    %v1125 = vmul.f32 %v1116, 1.442695
    %v1126 = vpow.pop %v1125
    %v1127 = vsub.f32 %v926, %v1076
    %v1128 = vsub.f32 %v931, %v1077
    %v1129 = vsub.f32 %v936, %v1078
    %v1130 = vsub.f32 %v941, %v1079
    %v1131 = vsub.f32 %v946, %v1080
    %v1132 = vmul.f32 %v1127, 1.442695
    %v1133 = vpow.pop %v1132
    %v1134 = vmul.f32 %v1128, 1.442695
    %v1135 = vpow.pop %v1134
    %v1136 = vmul.f32 %v1129, 1.442695
    %v1137 = vpow.pop %v1136
    %v1138 = vmul.f32 %v1130, 1.442695
    %v1139 = vpow.pop %v1138
    %v1140 = vmul.f32 %v1131, 1.442695
    %v1141 = vpow.pop %v1140
    %v1142 = vmul.f32 %v1118, %v1133
    %v1143 = vmul.f32 %v1120, %v1135
    %v1144 = vmul.f32 %v1122, %v1137
    %v1145 = vmul.f32 %v1124, %v1139
    %v1146 = vmul.f32 %v1126, %v1141
    %vm1147 = vcmask 277504
    %v1149 = vsel %vm1147, %v277, 0
    %v1152 = vsel %vm1147, %v278, 0
    %v1155 = vsel %vm317, %v1146, 0
    %1157 = vmatprep.subr.mxu0 0.0
    %1158 = vmatpush1.msra.mxu0 %v1142
    %1159 = vmatprep.subr.mxu0 0.0
    %1160 = vmatpush1.msra.mxu0 %v1143
    %1161 = vmatprep.subr.mxu0 0.0
    %1162 = vmatpush1.msra.mxu0 %v1144
    %1163 = vmatprep.subr.mxu0 0.0
    %1164 = vmatpush1.msra.mxu0 %v1145
    %1165 = vmatprep.subr.mxu0 0.0
    %1166 = vmatpush1.msra.mxu0 %v1155
    %1167 = vmatprep.subr.mxu0 0.0
    %1168 = vmatpush1.msra.mxu0 0.0
    %1169 = vmatprep.subr.mxu0 0.0
    %1170 = vmatpush1.msra.mxu0 0.0
    %1171 = vmatprep.subr.mxu0 0.0
    %1172 = vmatpush1.msra.mxu0 0.0
    %1173 = vmatprep.subr.mxu0 0.0
    %1174 = vmatpush1.msra.mxu0 0.0
    %1175 = vmatprep.subr.mxu0 0.0
    %1176 = vmatpush1.msra.mxu0 0.0
    %1177 = vmatprep.subr.mxu0 0.0
    %1178 = vmatpush1.msra.mxu0 0.0
    %1179 = vmatprep.subr.mxu0 0.0
    %1180 = vmatpush1.msra.mxu0 0.0
    %1181 = vmatprep.subr.mxu0 0.0
    %1182 = vmatpush1.msra.mxu0 0.0
    %1183 = vmatprep.subr.mxu0 0.0
    %1184 = vmatpush1.msra.mxu0 0.0
    %1185 = vmatprep.subr.mxu0 0.0
    %1186 = vmatpush1.msra.mxu0 0.0
    %1187 = vmatprep.subr.mxu0 0.0
    %1188 = vmatpush1.msra.mxu0 0.0
    %1189 = vmatprep.subr.mxu0 0.0
    %1190 = vmatpush1.msra.mxu0 0.0
    %1191 = vmatprep.subr.mxu0 0.0
    %1192 = vmatpush1.msra.mxu0 0.0
    %1193 = vmatprep.subr.mxu0 0.0
    %1194 = vmatpush1.msra.mxu0 0.0
    %1195 = vmatprep.subr.mxu0 0.0
    %1196 = vmatpush1.msra.mxu0 0.0
    %1197 = vmatprep.subr.mxu0 0.0
    %1198 = vmatpush1.msra.mxu0 0.0
    %1199 = vmatprep.subr.mxu0 0.0
    %1200 = vmatpush1.msra.mxu0 0.0
    %1201 = vmatprep.subr.mxu0 0.0
    %1202 = vmatpush1.msra.mxu0 0.0
    %1203 = vmatprep.subr.mxu0 0.0
    %1204 = vmatpush1.msra.mxu0 0.0
    %1205 = vmatprep.subr.mxu0 0.0
    %1206 = vmatpush1.msra.mxu0 0.0
    %1207 = vmatprep.subr.mxu0 0.0
    %1208 = vmatpush1.msra.mxu0 0.0
    %1209 = vmatprep.subr.mxu0 0.0
    %1210 = vmatpush1.msra.mxu0 0.0
    %1211 = vmatprep.subr.mxu0 0.0
    %1212 = vmatpush1.msra.mxu0 0.0
    %1213 = vmatprep.subr.mxu0 0.0
    %1214 = vmatpush1.msra.mxu0 0.0
    %1215 = vmatprep.subr.mxu0 0.0
    %1216 = vmatpush1.msra.mxu0 0.0
    %1217 = vmatprep.subr.mxu0 0.0
    %1218 = vmatpush1.msra.mxu0 0.0
    %1219 = vmatprep.subr.mxu0 0.0
    %1220 = vmatpush1.msra.mxu0 0.0
    %1221 = vmatprep.mubr.f32.mxu0 0.0
    %1222 = vmatmul.mubr.f32.gmra.mrb[0].mxu0 %v1149
    %v1223 = vpop.f32.mrb[0].mxu0
    %v1224 = vadd.f32 0.0, %v1223
    %v1225 = vpop.f32.mrb[0].mxu0
    %1226 = vmatprep.mubr.f32.mxu0 0.0
    %1227 = vmatmul.mubr.f32.gmra.mrb[0].mxu0 %v1152
    %v1228 = vpop.f32.mrb[0].mxu0
    %v1229 = vadd.f32 0.0, %v1228
    %v1230 = vpop.f32.mrb[0].mxu0
    %1231 = vdwg.mxu0
    %v1233 = vsel %vm317, %v1229, 0
    %1235 = vmatprep.subr.mxu0 0.0
    %1236 = vmatpush1.msra.mxu0 %v1224
    %1237 = vmatprep.subr.mxu0 0.0
    %1238 = vmatpush1.msra.mxu0 %v1233
    %1239 = vmatprep.subr.mxu0 0.0
    %1240 = vmatpush1.msra.mxu0 0.0
    %1241 = vmatprep.subr.mxu0 0.0
    %1242 = vmatpush1.msra.mxu0 0.0
    %1243 = vmatprep.subr.mxu0 0.0
    %1244 = vmatpush1.msra.mxu0 0.0
    %1245 = vmatprep.subr.mxu0 0.0
    %1246 = vmatpush1.msra.mxu0 0.0
    %1247 = vmatprep.subr.mxu0 0.0
    %1248 = vmatpush1.msra.mxu0 0.0
    %1249 = vmatprep.subr.mxu0 0.0
    %1250 = vmatpush1.msra.mxu0 0.0
    %1251 = vmatprep.subr.mxu0 0.0
    %1252 = vmatpush1.msra.mxu0 0.0
    %1253 = vmatprep.subr.mxu0 0.0
    %1254 = vmatpush1.msra.mxu0 0.0
    %1255 = vmatprep.subr.mxu0 0.0
    %1256 = vmatpush1.msra.mxu0 0.0
    %1257 = vmatprep.subr.mxu0 0.0
    %1258 = vmatpush1.msra.mxu0 0.0
    %1259 = vmatprep.subr.mxu0 0.0
    %1260 = vmatpush1.msra.mxu0 0.0
    %1261 = vmatprep.subr.mxu0 0.0
    %1262 = vmatpush1.msra.mxu0 0.0
    %1263 = vmatprep.subr.mxu0 0.0
    %1264 = vmatpush1.msra.mxu0 0.0
    %1265 = vmatprep.subr.mxu0 0.0
    %1266 = vmatpush1.msra.mxu0 0.0
    %1267 = vmatprep.subr.mxu0 0.0
    %1268 = vmatpush1.msra.mxu0 0.0
    %1269 = vmatprep.subr.mxu0 0.0
    %1270 = vmatpush1.msra.mxu0 0.0
    %1271 = vmatprep.subr.mxu0 0.0
    %1272 = vmatpush1.msra.mxu0 0.0
    %1273 = vmatprep.subr.mxu0 0.0
    %1274 = vmatpush1.msra.mxu0 0.0
    %1275 = vmatprep.subr.mxu0 0.0
    %1276 = vmatpush1.msra.mxu0 0.0
    %1277 = vmatprep.subr.mxu0 0.0
    %1278 = vmatpush1.msra.mxu0 0.0
    %1279 = vmatprep.subr.mxu0 0.0
    %1280 = vmatpush1.msra.mxu0 0.0
    %1281 = vmatprep.subr.mxu0 0.0
    %1282 = vmatpush1.msra.mxu0 0.0
    %1283 = vmatprep.subr.mxu0 0.0
    %1284 = vmatpush1.msra.mxu0 0.0
    %1285 = vmatprep.subr.mxu0 0.0
    %1286 = vmatpush1.msra.mxu0 0.0
    %1287 = vmatprep.subr.mxu0 0.0
    %1288 = vmatpush1.msra.mxu0 0.0
    %1289 = vmatprep.subr.mxu0 0.0
    %1290 = vmatpush1.msra.mxu0 0.0
    %1291 = vmatprep.subr.mxu0 0.0
    %1292 = vmatpush1.msra.mxu0 0.0
    %1293 = vmatprep.subr.mxu0 0.0
    %1294 = vmatpush1.msra.mxu0 0.0
    %1295 = vmatprep.subr.mxu0 0.0
    %1296 = vmatpush1.msra.mxu0 0.0
    %1297 = vmatprep.subr.mxu0 0.0
    %1298 = vmatpush1.msra.mxu0 0.0
    %1299 = vmatprep.mubr.f32.mxu0 0.0
    %1300 = vmatmul.mubr.f32.gmra.mrb[0].mxu0 %v426
    %v1301 = vpop.f32.mrb[0].mxu0
    %v1302 = vadd.f32 1e-10, %v1301
    %v1303 = vpop.f32.mrb[0].mxu0
    %1304 = vmatprep.mubr.f32.mxu0 0.0
    %1305 = vmatmul.mubr.f32.gmra.mrb[0].mxu0 %v429
    %v1306 = vpop.f32.mrb[0].mxu0
    %v1307 = vadd.f32 1e-10, %v1306
    %v1308 = vpop.f32.mrb[0].mxu0
    %1309 = vmatprep.mubr.f32.mxu0 0.0
    %1310 = vmatmul.mubr.f32.gmra.mrb[0].mxu0 %v432
    %v1311 = vpop.f32.mrb[0].mxu0
    %v1312 = vadd.f32 1e-10, %v1311
    %v1313 = vpop.f32.mrb[0].mxu0
    %1314 = vmatprep.mubr.f32.mxu0 0.0
    %1315 = vmatmul.mubr.f32.gmra.mrb[0].mxu0 %v435
    %v1316 = vpop.f32.mrb[0].mxu0
    %v1317 = vadd.f32 1e-10, %v1316
    %v1318 = vpop.f32.mrb[0].mxu0
    %1319 = vmatprep.mubr.f32.mxu0 0.0
    %1320 = vmatmul.mubr.f32.gmra.mrb[0].mxu0 %v438
    %v1321 = vpop.f32.mrb[0].mxu0
    %v1322 = vadd.f32 1e-10, %v1321
    %v1323 = vpop.f32.mrb[0].mxu0
    %1324 = vdwg.mxu0
    %v1325 = vrcp.pop %v1302
    %v1326 = vmul.f32 %v1142, %v1325
    %v1327 = vrcp.pop %v1307
    %v1328 = vmul.f32 %v1143, %v1327
    %v1329 = vrcp.pop %v1312
    %v1330 = vmul.f32 %v1144, %v1329
    %v1331 = vrcp.pop %v1317
    %v1332 = vmul.f32 %v1145, %v1331
    %v1333 = vrcp.pop %v1322
    %v1334 = vmul.f32 %v1146, %v1333
    %vm1335 = vcmask 15360
    %v1337 = vsel %vm1335, %v1326, 0
    %v1340 = vsel %vm1335, %v1328, 0
    %v1343 = vsel %vm1335, %v1330, 0
    %v1346 = vsel %vm1335, %v1332, 0
    %v1349 = vsel %vm1335, %v1334, 0
    %v1352 = vsel %vm317, %v424, 0
    %1354 = vmatprep.subr.mxu0 0.0
    %1355 = vmatpush1.msra.mxu0 %v1352
    %1356 = vmatprep.subr.mxu0 0.0
    %1357 = vmatpush1.msra.mxu0 0.0
    %1358 = vmatprep.subr.mxu0 0.0
    %1359 = vmatpush1.msra.mxu0 0.0
    %1360 = vmatprep.subr.mxu0 0.0
    %1361 = vmatpush1.msra.mxu0 0.0
    %1362 = vmatprep.subr.mxu0 0.0
    %1363 = vmatpush1.msra.mxu0 0.0
    %1364 = vmatprep.subr.mxu0 0.0
    %1365 = vmatpush1.msra.mxu0 0.0
    %1366 = vmatprep.subr.mxu0 0.0
    %1367 = vmatpush1.msra.mxu0 0.0
    %1368 = vmatprep.subr.mxu0 0.0
    %1369 = vmatpush1.msra.mxu0 0.0
    %1370 = vmatprep.subr.mxu0 0.0
    %1371 = vmatpush1.msra.mxu0 0.0
    %1372 = vmatprep.subr.mxu0 0.0
    %1373 = vmatpush1.msra.mxu0 0.0
    %1374 = vmatprep.subr.mxu0 0.0
    %1375 = vmatpush1.msra.mxu0 0.0
    %1376 = vmatprep.subr.mxu0 0.0
    %1377 = vmatpush1.msra.mxu0 0.0
    %1378 = vmatprep.subr.mxu0 0.0
    %1379 = vmatpush1.msra.mxu0 0.0
    %1380 = vmatprep.subr.mxu0 0.0
    %1381 = vmatpush1.msra.mxu0 0.0
    %1382 = vmatprep.subr.mxu0 0.0
    %1383 = vmatpush1.msra.mxu0 0.0
    %1384 = vmatprep.subr.mxu0 0.0
    %1385 = vmatpush1.msra.mxu0 0.0
    %1386 = vmatprep.subr.mxu0 0.0
    %1387 = vmatpush1.msra.mxu0 0.0
    %1388 = vmatprep.subr.mxu0 0.0
    %1389 = vmatpush1.msra.mxu0 0.0
    %1390 = vmatprep.subr.mxu0 0.0
    %1391 = vmatpush1.msra.mxu0 0.0
    %1392 = vmatprep.subr.mxu0 0.0
    %1393 = vmatpush1.msra.mxu0 0.0
    %1394 = vmatprep.subr.mxu0 0.0
    %1395 = vmatpush1.msra.mxu0 0.0
    %1396 = vmatprep.subr.mxu0 0.0
    %1397 = vmatpush1.msra.mxu0 0.0
    %1398 = vmatprep.subr.mxu0 0.0
    %1399 = vmatpush1.msra.mxu0 0.0
    %1400 = vmatprep.subr.mxu0 0.0
    %1401 = vmatpush1.msra.mxu0 0.0
    %1402 = vmatprep.subr.mxu0 0.0
    %1403 = vmatpush1.msra.mxu0 0.0
    %1404 = vmatprep.subr.mxu0 0.0
    %1405 = vmatpush1.msra.mxu0 0.0
    %1406 = vmatprep.subr.mxu0 0.0
    %1407 = vmatpush1.msra.mxu0 0.0
    %1408 = vmatprep.subr.mxu0 0.0
    %1409 = vmatpush1.msra.mxu0 0.0
    %1410 = vmatprep.subr.mxu0 0.0
    %1411 = vmatpush1.msra.mxu0 0.0
    %1412 = vmatprep.subr.mxu0 0.0
    %1413 = vmatpush1.msra.mxu0 0.0
    %1414 = vmatprep.subr.mxu0 0.0
    %1415 = vmatpush1.msra.mxu0 0.0
    %1416 = vmatprep.subr.mxu0 0.0
    %1417 = vmatpush1.msra.mxu0 0.0
    %1418 = vmatprep.mubr.f32.mxu0 0.0
    %1419 = vmatmul.mubr.f32.gmra.mrb[0].mxu0 %v1337
    %v1420 = vpop.f32.mrb[0].mxu0
    %v1421 = vadd.f32 0.0, %v1420
    %v1422 = vpop.f32.mrb[0].mxu0
    %1423 = vmatprep.mubr.f32.mxu0 0.0
    %1424 = vmatmul.mubr.f32.gmra.mrb[0].mxu0 %v1340
    %v1425 = vpop.f32.mrb[0].mxu0
    %v1426 = vadd.f32 0.0, %v1425
    %v1427 = vpop.f32.mrb[0].mxu0
    %1428 = vmatprep.mubr.f32.mxu0 0.0
    %1429 = vmatmul.mubr.f32.gmra.mrb[0].mxu0 %v1343
    %v1430 = vpop.f32.mrb[0].mxu0
    %v1431 = vadd.f32 0.0, %v1430
    %v1432 = vpop.f32.mrb[0].mxu0
    %1433 = vmatprep.mubr.f32.mxu0 0.0
    %1434 = vmatmul.mubr.f32.gmra.mrb[0].mxu0 %v1346
    %v1435 = vpop.f32.mrb[0].mxu0
    %v1436 = vadd.f32 0.0, %v1435
    %v1437 = vpop.f32.mrb[0].mxu0
    %1438 = vmatprep.mubr.f32.mxu0 0.0
    %1439 = vmatmul.mubr.f32.gmra.mrb[0].mxu0 %v1349
    %v1440 = vpop.f32.mrb[0].mxu0
    %v1441 = vadd.f32 0.0, %v1440
    %v1442 = vpop.f32.mrb[0].mxu0
    %1443 = vdwg.mxu0
    %v1444 = vmul.f32 %v1421, %v844
    %v1445 = vmul.f32 %v1426, %v846
    %v1446 = vmul.f32 %v1431, %v848
    %v1447 = vmul.f32 %v1436, %v850
    %v1448 = vmul.f32 %v1441, %v852
    %v1450 = vsel %vm317, %v699, 0
    %1452 = vmatprep.subr.mxu0 0.0
    %1453 = vmatpush1.msra.mxu0 %v1450
    %1454 = vmatprep.subr.mxu0 0.0
    %1455 = vmatpush1.msra.mxu0 0.0
    %1456 = vmatprep.subr.mxu0 0.0
    %1457 = vmatpush1.msra.mxu0 0.0
    %1458 = vmatprep.subr.mxu0 0.0
    %1459 = vmatpush1.msra.mxu0 0.0
    %1460 = vmatprep.subr.mxu0 0.0
    %1461 = vmatpush1.msra.mxu0 0.0
    %1462 = vmatprep.subr.mxu0 0.0
    %1463 = vmatpush1.msra.mxu0 0.0
    %1464 = vmatprep.subr.mxu0 0.0
    %1465 = vmatpush1.msra.mxu0 0.0
    %1466 = vmatprep.subr.mxu0 0.0
    %1467 = vmatpush1.msra.mxu0 0.0
    %1468 = vmatprep.subr.mxu0 0.0
    %1469 = vmatpush1.msra.mxu0 0.0
    %1470 = vmatprep.subr.mxu0 0.0
    %1471 = vmatpush1.msra.mxu0 0.0
    %1472 = vmatprep.subr.mxu0 0.0
    %1473 = vmatpush1.msra.mxu0 0.0
    %1474 = vmatprep.subr.mxu0 0.0
    %1475 = vmatpush1.msra.mxu0 0.0
    %1476 = vmatprep.subr.mxu0 0.0
    %1477 = vmatpush1.msra.mxu0 0.0
    %1478 = vmatprep.subr.mxu0 0.0
    %1479 = vmatpush1.msra.mxu0 0.0
    %1480 = vmatprep.subr.mxu0 0.0
    %1481 = vmatpush1.msra.mxu0 0.0
    %1482 = vmatprep.subr.mxu0 0.0
    %1483 = vmatpush1.msra.mxu0 0.0
    %1484 = vmatprep.subr.mxu0 0.0
    %1485 = vmatpush1.msra.mxu0 0.0
    %1486 = vmatprep.subr.mxu0 0.0
    %1487 = vmatpush1.msra.mxu0 0.0
    %1488 = vmatprep.subr.mxu0 0.0
    %1489 = vmatpush1.msra.mxu0 0.0
    %1490 = vmatprep.subr.mxu0 0.0
    %1491 = vmatpush1.msra.mxu0 0.0
    %1492 = vmatprep.subr.mxu0 0.0
    %1493 = vmatpush1.msra.mxu0 0.0
    %1494 = vmatprep.subr.mxu0 0.0
    %1495 = vmatpush1.msra.mxu0 0.0
    %1496 = vmatprep.subr.mxu0 0.0
    %1497 = vmatpush1.msra.mxu0 0.0
    %1498 = vmatprep.subr.mxu0 0.0
    %1499 = vmatpush1.msra.mxu0 0.0
    %1500 = vmatprep.subr.mxu0 0.0
    %1501 = vmatpush1.msra.mxu0 0.0
    %1502 = vmatprep.subr.mxu0 0.0
    %1503 = vmatpush1.msra.mxu0 0.0
    %1504 = vmatprep.subr.mxu0 0.0
    %1505 = vmatpush1.msra.mxu0 0.0
    %1506 = vmatprep.subr.mxu0 0.0
    %1507 = vmatpush1.msra.mxu0 0.0
    %1508 = vmatprep.subr.mxu0 0.0
    %1509 = vmatpush1.msra.mxu0 0.0
    %1510 = vmatprep.subr.mxu0 0.0
    %1511 = vmatpush1.msra.mxu0 0.0
    %1512 = vmatprep.subr.mxu0 0.0
    %1513 = vmatpush1.msra.mxu0 0.0
    %1514 = vmatprep.subr.mxu0 0.0
    %1515 = vmatpush1.msra.mxu0 0.0
    %1516 = vmatprep.mubr.f32.mxu0 0.0
    %1517 = vmatmul.mubr.f32.gmra.mrb[0].mxu0 %v1337
    %v1518 = vpop.f32.mrb[0].mxu0
    %v1519 = vadd.f32 0.0, %v1518
    %v1520 = vpop.f32.mrb[0].mxu0
    %1521 = vmatprep.mubr.f32.mxu0 0.0
    %1522 = vmatmul.mubr.f32.gmra.mrb[0].mxu0 %v1340
    %v1523 = vpop.f32.mrb[0].mxu0
    %v1524 = vadd.f32 0.0, %v1523
    %v1525 = vpop.f32.mrb[0].mxu0
    %1526 = vmatprep.mubr.f32.mxu0 0.0
    %1527 = vmatmul.mubr.f32.gmra.mrb[0].mxu0 %v1343
    %v1528 = vpop.f32.mrb[0].mxu0
    %v1529 = vadd.f32 0.0, %v1528
    %v1530 = vpop.f32.mrb[0].mxu0
    %1531 = vmatprep.mubr.f32.mxu0 0.0
    %1532 = vmatmul.mubr.f32.gmra.mrb[0].mxu0 %v1346
    %v1533 = vpop.f32.mrb[0].mxu0
    %v1534 = vadd.f32 0.0, %v1533
    %v1535 = vpop.f32.mrb[0].mxu0
    %1536 = vmatprep.mubr.f32.mxu0 0.0
    %1537 = vmatmul.mubr.f32.gmra.mrb[0].mxu0 %v1349
    %v1538 = vpop.f32.mrb[0].mxu0
    %v1539 = vadd.f32 0.0, %v1538
    %v1540 = vpop.f32.mrb[0].mxu0
    %1541 = vdwg.mxu0
    %1542 = vmatprep.subr.mxu0 0.0
    %1543 = vmatpush1.msra.mxu0 %v683
    %1544 = vmatprep.subr.mxu0 0.0
    %1545 = vmatpush1.msra.mxu0 %v684
    %1546 = vmatprep.subr.mxu0 0.0
    %1547 = vmatpush1.msra.mxu0 %v685
    %1548 = vmatprep.subr.mxu0 0.0
    %1549 = vmatpush1.msra.mxu0 %v686
    %1550 = vmatprep.subr.mxu0 0.0
    %1551 = vmatpush1.msra.mxu0 %v687
    %1552 = vmatprep.subr.mxu0 0.0
    %1553 = vmatpush1.msra.mxu0 %v688
    %1554 = vmatprep.subr.mxu0 0.0
    %1555 = vmatpush1.msra.mxu0 %v689
    %1556 = vmatprep.subr.mxu0 0.0
    %1557 = vmatpush1.msra.mxu0 %v690
    %1558 = vmatprep.subr.mxu0 0.0
    %1559 = vmatpush1.msra.mxu0 %v691
    %1560 = vmatprep.subr.mxu0 0.0
    %1561 = vmatpush1.msra.mxu0 %v692
    %1562 = vmatprep.subr.mxu0 0.0
    %1563 = vmatpush1.msra.mxu0 %v693
    %1564 = vmatprep.subr.mxu0 0.0
    %1565 = vmatpush1.msra.mxu0 %v694
    %1566 = vmatprep.subr.mxu0 0.0
    %1567 = vmatpush1.msra.mxu0 %v695
    %1568 = vmatprep.subr.mxu0 0.0
    %1569 = vmatpush1.msra.mxu0 %v696
    %1570 = vmatprep.subr.mxu0 0.0
    %1571 = vmatpush1.msra.mxu0 %v697
    %1572 = vmatprep.subr.mxu0 0.0
    %1573 = vmatpush1.msra.mxu0 %v698
    %1574 = vmatprep.subr.mxu0 0.0
    %1575 = vmatpush1.msra.mxu0 0.0
    %1576 = vmatprep.subr.mxu0 0.0
    %1577 = vmatpush1.msra.mxu0 0.0
    %1578 = vmatprep.subr.mxu0 0.0
    %1579 = vmatpush1.msra.mxu0 0.0
    %1580 = vmatprep.subr.mxu0 0.0
    %1581 = vmatpush1.msra.mxu0 0.0
    %1582 = vmatprep.subr.mxu0 0.0
    %1583 = vmatpush1.msra.mxu0 0.0
    %1584 = vmatprep.subr.mxu0 0.0
    %1585 = vmatpush1.msra.mxu0 0.0
    %1586 = vmatprep.subr.mxu0 0.0
    %1587 = vmatpush1.msra.mxu0 0.0
    %1588 = vmatprep.subr.mxu0 0.0
    %1589 = vmatpush1.msra.mxu0 0.0
    %1590 = vmatprep.subr.mxu0 0.0
    %1591 = vmatpush1.msra.mxu0 0.0
    %1592 = vmatprep.subr.mxu0 0.0
    %1593 = vmatpush1.msra.mxu0 0.0
    %1594 = vmatprep.subr.mxu0 0.0
    %1595 = vmatpush1.msra.mxu0 0.0
    %1596 = vmatprep.subr.mxu0 0.0
    %1597 = vmatpush1.msra.mxu0 0.0
    %1598 = vmatprep.subr.mxu0 0.0
    %1599 = vmatpush1.msra.mxu0 0.0
    %1600 = vmatprep.subr.mxu0 0.0
    %1601 = vmatpush1.msra.mxu0 0.0
    %1602 = vmatprep.subr.mxu0 0.0
    %1603 = vmatpush1.msra.mxu0 0.0
    %1604 = vmatprep.subr.mxu0 0.0
    %1605 = vmatpush1.msra.mxu0 0.0
    %1606 = vmatprep.mubr.f32.mxu0 0.0
    %1607 = vmatmul.mubr.f32.gmra.mrb[0].mxu0 %v1444
    %v1608 = vpop.f32.mrb[0].mxu0
    %v1609 = vadd.f32 %v1519, %v1608
    %v1610 = vpop.f32.mrb[0].mxu0
    %1611 = vmatprep.mubr.f32.mxu0 0.0
    %1612 = vmatmul.mubr.f32.gmra.mrb[0].mxu0 %v1445
    %v1613 = vpop.f32.mrb[0].mxu0
    %v1614 = vadd.f32 %v1524, %v1613
    %v1615 = vpop.f32.mrb[0].mxu0
    %1616 = vmatprep.mubr.f32.mxu0 0.0
    %1617 = vmatmul.mubr.f32.gmra.mrb[0].mxu0 %v1446
    %v1618 = vpop.f32.mrb[0].mxu0
    %v1619 = vadd.f32 %v1529, %v1618
    %v1620 = vpop.f32.mrb[0].mxu0
    %1621 = vmatprep.mubr.f32.mxu0 0.0
    %1622 = vmatmul.mubr.f32.gmra.mrb[0].mxu0 %v1447
    %v1623 = vpop.f32.mrb[0].mxu0
    %v1624 = vadd.f32 %v1534, %v1623
    %v1625 = vpop.f32.mrb[0].mxu0
    %1626 = vmatprep.mubr.f32.mxu0 0.0
    %1627 = vmatmul.mubr.f32.gmra.mrb[0].mxu0 %v1448
    %v1628 = vpop.f32.mrb[0].mxu0
    %v1629 = vadd.f32 %v1539, %v1628
    %v1630 = vpop.f32.mrb[0].mxu0
    %1631 = vdwg.mxu0
    %v1633 = vsel %vm317, %v1629, 0
    %1635 = vmatprep.subr.mxu0 0.0
    %1636 = vmatpush1.msra.mxu0 %v1609
    %1637 = vmatprep.subr.mxu0 0.0
    %1638 = vmatpush1.msra.mxu0 %v1614
    %1639 = vmatprep.subr.mxu0 0.0
    %1640 = vmatpush1.msra.mxu0 %v1619
    %1641 = vmatprep.subr.mxu0 0.0
    %1642 = vmatpush1.msra.mxu0 %v1624
    %1643 = vmatprep.subr.mxu0 0.0
    %1644 = vmatpush1.msra.mxu0 %v1633
    %1645 = vmatprep.subr.mxu0 0.0
    %1646 = vmatpush1.msra.mxu0 0.0
    %1647 = vmatprep.subr.mxu0 0.0
    %1648 = vmatpush1.msra.mxu0 0.0
    %1649 = vmatprep.subr.mxu0 0.0
    %1650 = vmatpush1.msra.mxu0 0.0
    %1651 = vmatprep.subr.mxu0 0.0
    %1652 = vmatpush1.msra.mxu0 0.0
    %1653 = vmatprep.subr.mxu0 0.0
    %1654 = vmatpush1.msra.mxu0 0.0
    %1655 = vmatprep.subr.mxu0 0.0
    %1656 = vmatpush1.msra.mxu0 0.0
    %1657 = vmatprep.subr.mxu0 0.0
    %1658 = vmatpush1.msra.mxu0 0.0
    %1659 = vmatprep.subr.mxu0 0.0
    %1660 = vmatpush1.msra.mxu0 0.0
    %1661 = vmatprep.subr.mxu0 0.0
    %1662 = vmatpush1.msra.mxu0 0.0
    %1663 = vmatprep.subr.mxu0 0.0
    %1664 = vmatpush1.msra.mxu0 0.0
    %1665 = vmatprep.subr.mxu0 0.0
    %1666 = vmatpush1.msra.mxu0 0.0
    %1667 = vmatprep.subr.mxu0 0.0
    %1668 = vmatpush1.msra.mxu0 0.0
    %1669 = vmatprep.subr.mxu0 0.0
    %1670 = vmatpush1.msra.mxu0 0.0
    %1671 = vmatprep.subr.mxu0 0.0
    %1672 = vmatpush1.msra.mxu0 0.0
    %1673 = vmatprep.subr.mxu0 0.0
    %1674 = vmatpush1.msra.mxu0 0.0
    %1675 = vmatprep.subr.mxu0 0.0
    %1676 = vmatpush1.msra.mxu0 0.0
    %1677 = vmatprep.subr.mxu0 0.0
    %1678 = vmatpush1.msra.mxu0 0.0
    %1679 = vmatprep.subr.mxu0 0.0
    %1680 = vmatpush1.msra.mxu0 0.0
    %1681 = vmatprep.subr.mxu0 0.0
    %1682 = vmatpush1.msra.mxu0 0.0
    %1683 = vmatprep.subr.mxu0 0.0
    %1684 = vmatpush1.msra.mxu0 0.0
    %1685 = vmatprep.subr.mxu0 0.0
    %1686 = vmatpush1.msra.mxu0 0.0
    %1687 = vmatprep.subr.mxu0 0.0
    %1688 = vmatpush1.msra.mxu0 0.0
    %1689 = vmatprep.subr.mxu0 0.0
    %1690 = vmatpush1.msra.mxu0 0.0
    %1691 = vmatprep.subr.mxu0 0.0
    %1692 = vmatpush1.msra.mxu0 0.0
    %1693 = vmatprep.subr.mxu0 0.0
    %1694 = vmatpush1.msra.mxu0 0.0
    %1695 = vmatprep.subr.mxu0 0.0
    %1696 = vmatpush1.msra.mxu0 0.0
    %1697 = vmatprep.subr.mxu0 0.0
    %1698 = vmatpush1.msra.mxu0 0.0
    %1699 = vmatprep.mubr.f32.mxu0 0.0
    %1700 = vmatmul.mubr.f32.gmra.mrb[0].mxu0 %v1149
    %v1701 = vpop.f32.mrb[0].mxu0
    %v1702 = vadd.f32 0.0, %v1701
    %v1703 = vpop.f32.mrb[0].mxu0
    %1704 = vmatprep.mubr.f32.mxu0 0.0
    %1705 = vmatmul.mubr.f32.gmra.mrb[0].mxu0 %v1152
    %v1706 = vpop.f32.mrb[0].mxu0
    %v1707 = vadd.f32 0.0, %v1706
    %v1708 = vpop.f32.mrb[0].mxu0
    %1709 = vdwg.mxu0
    %v1710 = vmul.f32 %v1702, 0.5
    %v1711 = vmul.f32 %v1707, 0.5
    %v1712 = vadd.f32 %v1710, %v193
    %v1713 = vadd.f32 %v1711, %v194
    %v1715 = vsel %vm317, %v1713, 0
    %1717 = vmatprep.subr.mxu0 0.0
    %1718 = vmatpush1.msra.mxu0 %v1712
    %1719 = vmatprep.subr.mxu0 0.0
    %1720 = vmatpush1.msra.mxu0 %v1715
    %1721 = vmatprep.subr.mxu0 0.0
    %1722 = vmatpush1.msra.mxu0 0.0
    %1723 = vmatprep.subr.mxu0 0.0
    %1724 = vmatpush1.msra.mxu0 0.0
    %1725 = vmatprep.subr.mxu0 0.0
    %1726 = vmatpush1.msra.mxu0 0.0
    %1727 = vmatprep.subr.mxu0 0.0
    %1728 = vmatpush1.msra.mxu0 0.0
    %1729 = vmatprep.subr.mxu0 0.0
    %1730 = vmatpush1.msra.mxu0 0.0
    %1731 = vmatprep.subr.mxu0 0.0
    %1732 = vmatpush1.msra.mxu0 0.0
    %1733 = vmatprep.subr.mxu0 0.0
    %1734 = vmatpush1.msra.mxu0 0.0
    %1735 = vmatprep.subr.mxu0 0.0
    %1736 = vmatpush1.msra.mxu0 0.0
    %1737 = vmatprep.subr.mxu0 0.0
    %1738 = vmatpush1.msra.mxu0 0.0
    %1739 = vmatprep.subr.mxu0 0.0
    %1740 = vmatpush1.msra.mxu0 0.0
    %1741 = vmatprep.subr.mxu0 0.0
    %1742 = vmatpush1.msra.mxu0 0.0
    %1743 = vmatprep.subr.mxu0 0.0
    %1744 = vmatpush1.msra.mxu0 0.0
    %1745 = vmatprep.subr.mxu0 0.0
    %1746 = vmatpush1.msra.mxu0 0.0
    %1747 = vmatprep.subr.mxu0 0.0
    %1748 = vmatpush1.msra.mxu0 0.0
    %1749 = vmatprep.subr.mxu0 0.0
    %1750 = vmatpush1.msra.mxu0 0.0
    %1751 = vmatprep.subr.mxu0 0.0
    %1752 = vmatpush1.msra.mxu0 0.0
    %1753 = vmatprep.subr.mxu0 0.0
    %1754 = vmatpush1.msra.mxu0 0.0
    %1755 = vmatprep.subr.mxu0 0.0
    %1756 = vmatpush1.msra.mxu0 0.0
    %1757 = vmatprep.subr.mxu0 0.0
    %1758 = vmatpush1.msra.mxu0 0.0
    %1759 = vmatprep.subr.mxu0 0.0
    %1760 = vmatpush1.msra.mxu0 0.0
    %1761 = vmatprep.subr.mxu0 0.0
    %1762 = vmatpush1.msra.mxu0 0.0
    %1763 = vmatprep.subr.mxu0 0.0
    %1764 = vmatpush1.msra.mxu0 0.0
    %1765 = vmatprep.subr.mxu0 0.0
    %1766 = vmatpush1.msra.mxu0 0.0
    %1767 = vmatprep.subr.mxu0 0.0
    %1768 = vmatpush1.msra.mxu0 0.0
    %1769 = vmatprep.subr.mxu0 0.0
    %1770 = vmatpush1.msra.mxu0 0.0
    %1771 = vmatprep.subr.mxu0 0.0
    %1772 = vmatpush1.msra.mxu0 0.0
    %1773 = vmatprep.subr.mxu0 0.0
    %1774 = vmatpush1.msra.mxu0 0.0
    %1775 = vmatprep.subr.mxu0 0.0
    %1776 = vmatpush1.msra.mxu0 0.0
    %1777 = vmatprep.subr.mxu0 0.0
    %1778 = vmatpush1.msra.mxu0 0.0
    %1779 = vmatprep.subr.mxu0 0.0
    %1780 = vmatpush1.msra.mxu0 0.0
    %1781 = vmatprep.mubr.f32.mxu0 0.0
    %1782 = vmatmul.mubr.f32.gmra.mrb[0].mxu0 %v426
    %v1783 = vpop.f32.mrb[0].mxu0
    %v1784 = vadd.f32 0.0, %v1783
    %v1785 = vpop.f32.mrb[0].mxu0
    %1786 = vmatprep.mubr.f32.mxu0 0.0
    %1787 = vmatmul.mubr.f32.gmra.mrb[0].mxu0 %v429
    %v1788 = vpop.f32.mrb[0].mxu0
    %v1789 = vadd.f32 0.0, %v1788
    %v1790 = vpop.f32.mrb[0].mxu0
    %1791 = vmatprep.mubr.f32.mxu0 0.0
    %1792 = vmatmul.mubr.f32.gmra.mrb[0].mxu0 %v432
    %v1793 = vpop.f32.mrb[0].mxu0
    %v1794 = vadd.f32 0.0, %v1793
    %v1795 = vpop.f32.mrb[0].mxu0
    %1796 = vmatprep.mubr.f32.mxu0 0.0
    %1797 = vmatmul.mubr.f32.gmra.mrb[0].mxu0 %v435
    %v1798 = vpop.f32.mrb[0].mxu0
    %v1799 = vadd.f32 0.0, %v1798
    %v1800 = vpop.f32.mrb[0].mxu0
    %1801 = vmatprep.mubr.f32.mxu0 0.0
    %1802 = vmatmul.mubr.f32.gmra.mrb[0].mxu0 %v438
    %v1803 = vpop.f32.mrb[0].mxu0
    %v1804 = vadd.f32 0.0, %v1803
    %v1805 = vpop.f32.mrb[0].mxu0
    %1806 = vdwg.mxu0
    %1807 = vmatprep.subr.mxu0 0.0
    %1808 = vmatpush1.msra.mxu0 %v1712
    %1809 = vmatprep.subr.mxu0 0.0
    %1810 = vmatpush1.msra.mxu0 %v1715
    %1811 = vmatprep.subr.mxu0 0.0
    %1812 = vmatpush1.msra.mxu0 0.0
    %1813 = vmatprep.subr.mxu0 0.0
    %1814 = vmatpush1.msra.mxu0 0.0
    %1815 = vmatprep.subr.mxu0 0.0
    %1816 = vmatpush1.msra.mxu0 0.0
    %1817 = vmatprep.subr.mxu0 0.0
    %1818 = vmatpush1.msra.mxu0 0.0
    %1819 = vmatprep.subr.mxu0 0.0
    %1820 = vmatpush1.msra.mxu0 0.0
    %1821 = vmatprep.subr.mxu0 0.0
    %1822 = vmatpush1.msra.mxu0 0.0
    %1823 = vmatprep.subr.mxu0 0.0
    %1824 = vmatpush1.msra.mxu0 0.0
    %1825 = vmatprep.subr.mxu0 0.0
    %1826 = vmatpush1.msra.mxu0 0.0
    %1827 = vmatprep.subr.mxu0 0.0
    %1828 = vmatpush1.msra.mxu0 0.0
    %1829 = vmatprep.subr.mxu0 0.0
    %1830 = vmatpush1.msra.mxu0 0.0
    %1831 = vmatprep.subr.mxu0 0.0
    %1832 = vmatpush1.msra.mxu0 0.0
    %1833 = vmatprep.subr.mxu0 0.0
    %1834 = vmatpush1.msra.mxu0 0.0
    %1835 = vmatprep.subr.mxu0 0.0
    %1836 = vmatpush1.msra.mxu0 0.0
    %1837 = vmatprep.subr.mxu0 0.0
    %1838 = vmatpush1.msra.mxu0 0.0
    %1839 = vmatprep.subr.mxu0 0.0
    %1840 = vmatpush1.msra.mxu0 0.0
    %1841 = vmatprep.subr.mxu0 0.0
    %1842 = vmatpush1.msra.mxu0 0.0
    %1843 = vmatprep.subr.mxu0 0.0
    %1844 = vmatpush1.msra.mxu0 0.0
    %1845 = vmatprep.subr.mxu0 0.0
    %1846 = vmatpush1.msra.mxu0 0.0
    %1847 = vmatprep.subr.mxu0 0.0
    %1848 = vmatpush1.msra.mxu0 0.0
    %1849 = vmatprep.subr.mxu0 0.0
    %1850 = vmatpush1.msra.mxu0 0.0
    %1851 = vmatprep.subr.mxu0 0.0
    %1852 = vmatpush1.msra.mxu0 0.0
    %1853 = vmatprep.subr.mxu0 0.0
    %1854 = vmatpush1.msra.mxu0 0.0
    %1855 = vmatprep.subr.mxu0 0.0
    %1856 = vmatpush1.msra.mxu0 0.0
    %1857 = vmatprep.subr.mxu0 0.0
    %1858 = vmatpush1.msra.mxu0 0.0
    %1859 = vmatprep.subr.mxu0 0.0
    %1860 = vmatpush1.msra.mxu0 0.0
    %1861 = vmatprep.subr.mxu0 0.0
    %1862 = vmatpush1.msra.mxu0 0.0
    %1863 = vmatprep.subr.mxu0 0.0
    %1864 = vmatpush1.msra.mxu0 0.0
    %1865 = vmatprep.subr.mxu0 0.0
    %1866 = vmatpush1.msra.mxu0 0.0
    %1867 = vmatprep.subr.mxu0 0.0
    %1868 = vmatpush1.msra.mxu0 0.0
    %1869 = vmatprep.subr.mxu0 0.0
    %1870 = vmatpush1.msra.mxu0 0.0
    %1871 = vmatprep.mubr.f32.mxu0 0.0
    %1872 = vmatmul.mubr.f32.gmra.mrb[0].mxu0 %v303
    %v1873 = vpop.f32.mrb[0].mxu0
    %v1874 = vadd.f32 0.0, %v1873
    %v1875 = vpop.f32.mrb[0].mxu0
    %1876 = vmatprep.mubr.f32.mxu0 0.0
    %1877 = vmatmul.mubr.f32.gmra.mrb[0].mxu0 %v306
    %v1878 = vpop.f32.mrb[0].mxu0
    %v1879 = vadd.f32 0.0, %v1878
    %v1880 = vpop.f32.mrb[0].mxu0
    %1881 = vmatprep.mubr.f32.mxu0 0.0
    %1882 = vmatmul.mubr.f32.gmra.mrb[0].mxu0 %v309
    %v1883 = vpop.f32.mrb[0].mxu0
    %v1884 = vadd.f32 0.0, %v1883
    %v1885 = vpop.f32.mrb[0].mxu0
    %1886 = vmatprep.mubr.f32.mxu0 0.0
    %1887 = vmatmul.mubr.f32.gmra.mrb[0].mxu0 %v312
    %v1888 = vpop.f32.mrb[0].mxu0
    %v1889 = vadd.f32 0.0, %v1888
    %v1890 = vpop.f32.mrb[0].mxu0
    %1891 = vmatprep.mubr.f32.mxu0 0.0
    %1892 = vmatmul.mubr.f32.gmra.mrb[0].mxu0 %v315
    %v1893 = vpop.f32.mrb[0].mxu0
    %v1894 = vadd.f32 0.0, %v1893
    %v1895 = vpop.f32.mrb[0].mxu0
    %1896 = vdwg.mxu0
    %1902 = vrot.lane.b32.xlu0 %v1874, 32
    %v1903 = vpop.permute.xlu0 %1902
    %1904 = vrot.lane.b32.xlu0 %v1879, 32
    %v1905 = vpop.permute.xlu0 %1904
    %1906 = vrot.lane.b32.xlu0 %v1884, 32
    %v1907 = vpop.permute.xlu0 %1906
    %1908 = vrot.lane.b32.xlu0 %v1889, 32
    %v1909 = vpop.permute.xlu0 %1908
    %1910 = vrot.lane.b32.xlu0 %v1894, 32
    %v1911 = vpop.permute.xlu0 %1910
    %v1917 = vsel %vm643, %v1784, %v1903
    %v1918 = vsel %vm643, %v1789, %v1905
    %v1919 = vsel %vm643, %v1794, %v1907
    %v1920 = vsel %vm643, %v1799, %v1909
    %v1921 = vsel %vm643, %v1804, %v1911
    %s1922 = scalar_lea.vmem %s10, 128
    %v1923 = vld [vmem:[%s1922] sm:$0xff]
    %v1924 = vld [vmem:[%s1922 + $0x8] sm:$0xff]
    %v1925 = vld [vmem:[%s1922 + $0x10] sm:$0xff]
    %v1926 = vld [vmem:[%s1922 + $0x18] sm:$0xff]
    %v1927 = vld [vmem:[%s1922 + $0x20] sm:$0xff]
    %v1928 = vld [vmem:[%s1922 + $0x28] sm:$0xff]
    %v1929 = vld [vmem:[%s1922 + $0x30] sm:$0xff]
    %v1930 = vld [vmem:[%s1922 + $0x38] sm:$0xff]
    %v1931 = vld [vmem:[%s1922 + $0x40] sm:$0xff]
    %v1932 = vld [vmem:[%s1922 + $0x48] sm:$0xff]
    %v1933 = vld [vmem:[%s1922 + $0x50] sm:$0xff]
    %v1934 = vld [vmem:[%s1922 + $0x58] sm:$0xff]
    %v1935 = vld [vmem:[%s1922 + $0x60] sm:$0xff]
    %v1936 = vld [vmem:[%s1922 + $0x68] sm:$0xff]
    %v1937 = vld [vmem:[%s1922 + $0x70] sm:$0xff]
    %v1938 = vld [vmem:[%s1922 + $0x78] sm:$0xff]
    %s1939 = scalar_lea.vmem %s11, 2
    %v1940 = vld [vmem:[%s1939] sm:$0x3]
    %s1941 = scalar_lea.vmem %s12, 128
    %v1942 = vld [vmem:[%s1941] sm:$0xff]
    %v1943 = vld [vmem:[%s1941 + $0x8] sm:$0xff]
    %v1944 = vld [vmem:[%s1941 + $0x10] sm:$0xff]
    %v1945 = vld [vmem:[%s1941 + $0x18] sm:$0xff]
    %v1946 = vld [vmem:[%s1941 + $0x20] sm:$0xff]
    %v1947 = vld [vmem:[%s1941 + $0x28] sm:$0xff]
    %v1948 = vld [vmem:[%s1941 + $0x30] sm:$0xff]
    %v1949 = vld [vmem:[%s1941 + $0x38] sm:$0xff]
    %v1950 = vld [vmem:[%s1941 + $0x40] sm:$0xff]
    %v1951 = vld [vmem:[%s1941 + $0x48] sm:$0xff]
    %v1952 = vld [vmem:[%s1941 + $0x50] sm:$0xff]
    %v1953 = vld [vmem:[%s1941 + $0x58] sm:$0xff]
    %v1954 = vld [vmem:[%s1941 + $0x60] sm:$0xff]
    %v1955 = vld [vmem:[%s1941 + $0x68] sm:$0xff]
    %v1956 = vld [vmem:[%s1941 + $0x70] sm:$0xff]
    %v1957 = vld [vmem:[%s1941 + $0x78] sm:$0xff]
    %s1958 = scalar_lea.vmem %s13, 1
    %v1959 = vld [vmem:[%s1958] sm:$0x1]
    %s1960 = scalar_lea.vmem %s14, 128
    %v1961 = vld [vmem:[%s1960] sm:$0xff]
    %v1962 = vld [vmem:[%s1960 + $0x8] sm:$0xff]
    %v1963 = vld [vmem:[%s1960 + $0x10] sm:$0xff]
    %v1964 = vld [vmem:[%s1960 + $0x18] sm:$0xff]
    %v1965 = vld [vmem:[%s1960 + $0x20] sm:$0xff]
    %v1966 = vld [vmem:[%s1960 + $0x28] sm:$0xff]
    %v1967 = vld [vmem:[%s1960 + $0x30] sm:$0xff]
    %v1968 = vld [vmem:[%s1960 + $0x38] sm:$0xff]
    %v1969 = vld [vmem:[%s1960 + $0x40] sm:$0xff]
    %v1970 = vld [vmem:[%s1960 + $0x48] sm:$0xff]
    %v1971 = vld [vmem:[%s1960 + $0x50] sm:$0xff]
    %v1972 = vld [vmem:[%s1960 + $0x58] sm:$0xff]
    %v1973 = vld [vmem:[%s1960 + $0x60] sm:$0xff]
    %v1974 = vld [vmem:[%s1960 + $0x68] sm:$0xff]
    %v1975 = vld [vmem:[%s1960 + $0x70] sm:$0xff]
    %v1976 = vld [vmem:[%s1960 + $0x78] sm:$0xff]
    %s1977 = scalar_lea.vmem %s15, 2
    %v1978 = vld [vmem:[%s1977] sm:$0x3]
    %s1979 = scalar_lea.vmem %s16, 1
    %v1980 = vld [vmem:[%s1979] sm:$0x1]
    %v1982 = vlaneseq
    %v1983 = vshrl.u32 %v1982, 7
    %v1984 = vsub.s32 0, %v1983
    %v1985 = vrot.slane %v1940, %v1984
    %v1986 = vlaneseq
    %v1987 = vshrl.u32 %v1986, 7
    %v1988 = vsub.s32 1, %v1987
    %v1989 = vrot.slane %v1940, %v1988
    %v1993 = vsel %vm712, %v1917, 0
    %v1996 = vsel %vm712, %v1918, 0
    %v1999 = vsel %vm712, %v1919, 0
    %v2002 = vsel %vm712, %v1920, 0
    %v2005 = vsel %vm712, %v1921, 0
    %2007 = vmatprep.subr.mxu0 %v1924
    %2008 = vmatpush1.msra.mxu0 %v1923
    %2009 = vmatprep.subr.mxu0 %v1926
    %2010 = vmatpush1.msra.mxu0 %v1925
    %2011 = vmatprep.subr.mxu0 %v1928
    %2012 = vmatpush1.msra.mxu0 %v1927
    %2013 = vmatprep.subr.mxu0 %v1930
    %2014 = vmatpush1.msra.mxu0 %v1929
    %2015 = vmatprep.subr.mxu0 %v1932
    %2016 = vmatpush1.msra.mxu0 %v1931
    %2017 = vmatprep.subr.mxu0 %v1934
    %2018 = vmatpush1.msra.mxu0 %v1933
    %2019 = vmatprep.subr.mxu0 %v1936
    %2020 = vmatpush1.msra.mxu0 %v1935
    %2021 = vmatprep.subr.mxu0 %v1938
    %2022 = vmatpush1.msra.mxu0 %v1937
    %2023 = vmatprep.subr.mxu0 0.0
    %2024 = vmatpush1.msra.mxu0 0.0
    %2025 = vmatprep.subr.mxu0 0.0
    %2026 = vmatpush1.msra.mxu0 0.0
    %2027 = vmatprep.subr.mxu0 0.0
    %2028 = vmatpush1.msra.mxu0 0.0
    %2029 = vmatprep.subr.mxu0 0.0
    %2030 = vmatpush1.msra.mxu0 0.0
    %2031 = vmatprep.subr.mxu0 0.0
    %2032 = vmatpush1.msra.mxu0 0.0
    %2033 = vmatprep.subr.mxu0 0.0
    %2034 = vmatpush1.msra.mxu0 0.0
    %2035 = vmatprep.subr.mxu0 0.0
    %2036 = vmatpush1.msra.mxu0 0.0
    %2037 = vmatprep.subr.mxu0 0.0
    %2038 = vmatpush1.msra.mxu0 0.0
    %2039 = vmatprep.subr.mxu0 0.0
    %2040 = vmatpush1.msra.mxu0 0.0
    %2041 = vmatprep.subr.mxu0 0.0
    %2042 = vmatpush1.msra.mxu0 0.0
    %2043 = vmatprep.subr.mxu0 0.0
    %2044 = vmatpush1.msra.mxu0 0.0
    %2045 = vmatprep.subr.mxu0 0.0
    %2046 = vmatpush1.msra.mxu0 0.0
    %2047 = vmatprep.subr.mxu0 0.0
    %2048 = vmatpush1.msra.mxu0 0.0
    %2049 = vmatprep.subr.mxu0 0.0
    %2050 = vmatpush1.msra.mxu0 0.0
    %2051 = vmatprep.subr.mxu0 0.0
    %2052 = vmatpush1.msra.mxu0 0.0
    %2053 = vmatprep.subr.mxu0 0.0
    %2054 = vmatpush1.msra.mxu0 0.0
    %2055 = vmatprep.subr.mxu0 0.0
    %2056 = vmatpush1.msra.mxu0 0.0
    %2057 = vmatprep.subr.mxu0 0.0
    %2058 = vmatpush1.msra.mxu0 0.0
    %2059 = vmatprep.subr.mxu0 0.0
    %2060 = vmatpush1.msra.mxu0 0.0
    %2061 = vmatprep.subr.mxu0 0.0
    %2062 = vmatpush1.msra.mxu0 0.0
    %2063 = vmatprep.subr.mxu0 0.0
    %2064 = vmatpush1.msra.mxu0 0.0
    %2065 = vmatprep.subr.mxu0 0.0
    %2066 = vmatpush1.msra.mxu0 0.0
    %2067 = vmatprep.subr.mxu0 0.0
    %2068 = vmatpush1.msra.mxu0 0.0
    %2069 = vmatprep.subr.mxu0 0.0
    %2070 = vmatpush1.msra.mxu0 0.0
    %2071 = vmatprep.mubr.f32.mxu0 0.0
    %2072 = vmatmul.mubr.f32.gmra.mrb[0].mxu0 %v1993
    %v2073 = vpop.f32.mrb[0].mxu0
    %v2074 = vadd.f32 %v1985, %v2073
    %v2075 = vpop.f32.mrb[0].mxu0
    %v2076 = vadd.f32 %v1989, %v2075
    %2077 = vmatprep.mubr.f32.mxu0 0.0
    %2078 = vmatmul.mubr.f32.gmra.mrb[0].mxu0 %v1996
    %v2079 = vpop.f32.mrb[0].mxu0
    %v2080 = vadd.f32 %v1985, %v2079
    %v2081 = vpop.f32.mrb[0].mxu0
    %v2082 = vadd.f32 %v1989, %v2081
    %2083 = vmatprep.mubr.f32.mxu0 0.0
    %2084 = vmatmul.mubr.f32.gmra.mrb[0].mxu0 %v1999
    %v2085 = vpop.f32.mrb[0].mxu0
    %v2086 = vadd.f32 %v1985, %v2085
    %v2087 = vpop.f32.mrb[0].mxu0
    %v2088 = vadd.f32 %v1989, %v2087
    %2089 = vmatprep.mubr.f32.mxu0 0.0
    %2090 = vmatmul.mubr.f32.gmra.mrb[0].mxu0 %v2002
    %v2091 = vpop.f32.mrb[0].mxu0
    %v2092 = vadd.f32 %v1985, %v2091
    %v2093 = vpop.f32.mrb[0].mxu0
    %v2094 = vadd.f32 %v1989, %v2093
    %2095 = vmatprep.mubr.f32.mxu0 0.0
    %2096 = vmatmul.mubr.f32.gmra.mrb[0].mxu0 %v2005
    %v2097 = vpop.f32.mrb[0].mxu0
    %v2098 = vadd.f32 %v1985, %v2097
    %v2099 = vpop.f32.mrb[0].mxu0
    %v2100 = vadd.f32 %v1989, %v2099
    %2101 = vdwg.mxu0
    %vm2102 = vcmp.gt.f32.partialorder %v2074, 0.0
    %vm2103 = vcmp.gt.f32.partialorder %v2076, 0.0
    %vm2104 = vcmp.gt.f32.partialorder %v2080, 0.0
    %vm2105 = vcmp.gt.f32.partialorder %v2082, 0.0
    %vm2106 = vcmp.gt.f32.partialorder %v2086, 0.0
    %vm2107 = vcmp.gt.f32.partialorder %v2088, 0.0
    %vm2108 = vcmp.gt.f32.partialorder %v2092, 0.0
    %vm2109 = vcmp.gt.f32.partialorder %v2094, 0.0
    %vm2110 = vcmp.gt.f32.partialorder %v2098, 0.0
    %vm2111 = vcmp.gt.f32.partialorder %v2100, 0.0
    %v2112 = vmul.f32 %v2074, 0.01
    %v2113 = vmul.f32 %v2076, 0.01
    %v2114 = vmul.f32 %v2080, 0.01
    %v2115 = vmul.f32 %v2082, 0.01
    %v2116 = vmul.f32 %v2086, 0.01
    %v2117 = vmul.f32 %v2088, 0.01
    %v2118 = vmul.f32 %v2092, 0.01
    %v2119 = vmul.f32 %v2094, 0.01
    %v2120 = vmul.f32 %v2098, 0.01
    %v2121 = vmul.f32 %v2100, 0.01
    %v2122 = vsel %vm2102, %v2074, %v2112
    %v2123 = vsel %vm2103, %v2076, %v2113
    %v2124 = vsel %vm2104, %v2080, %v2114
    %v2125 = vsel %vm2105, %v2082, %v2115
    %v2126 = vsel %vm2106, %v2086, %v2116
    %v2127 = vsel %vm2107, %v2088, %v2117
    %v2128 = vsel %vm2108, %v2092, %v2118
    %v2129 = vsel %vm2109, %v2094, %v2119
    %v2130 = vsel %vm2110, %v2098, %v2120
    %v2131 = vsel %vm2111, %v2100, %v2121
    %v2133 = vlaneseq
    %v2134 = vshrl.u32 %v2133, 7
    %v2135 = vsub.s32 0, %v2134
    %v2136 = vrot.slane %v1959, %v2135
    %2138 = vmatprep.subr.mxu0 0.0
    %2139 = vmatpush1.msra.mxu0 %v1942
    %2140 = vmatprep.subr.mxu0 0.0
    %2141 = vmatpush1.msra.mxu0 %v1943
    %2142 = vmatprep.subr.mxu0 0.0
    %2143 = vmatpush1.msra.mxu0 %v1944
    %2144 = vmatprep.subr.mxu0 0.0
    %2145 = vmatpush1.msra.mxu0 %v1945
    %2146 = vmatprep.subr.mxu0 0.0
    %2147 = vmatpush1.msra.mxu0 %v1946
    %2148 = vmatprep.subr.mxu0 0.0
    %2149 = vmatpush1.msra.mxu0 %v1947
    %2150 = vmatprep.subr.mxu0 0.0
    %2151 = vmatpush1.msra.mxu0 %v1948
    %2152 = vmatprep.subr.mxu0 0.0
    %2153 = vmatpush1.msra.mxu0 %v1949
    %2154 = vmatprep.subr.mxu0 0.0
    %2155 = vmatpush1.msra.mxu0 %v1950
    %2156 = vmatprep.subr.mxu0 0.0
    %2157 = vmatpush1.msra.mxu0 %v1951
    %2158 = vmatprep.subr.mxu0 0.0
    %2159 = vmatpush1.msra.mxu0 %v1952
    %2160 = vmatprep.subr.mxu0 0.0
    %2161 = vmatpush1.msra.mxu0 %v1953
    %2162 = vmatprep.subr.mxu0 0.0
    %2163 = vmatpush1.msra.mxu0 %v1954
    %2164 = vmatprep.subr.mxu0 0.0
    %2165 = vmatpush1.msra.mxu0 %v1955
    %2166 = vmatprep.subr.mxu0 0.0
    %2167 = vmatpush1.msra.mxu0 %v1956
    %2168 = vmatprep.subr.mxu0 0.0
    %2169 = vmatpush1.msra.mxu0 %v1957
    %2170 = vmatprep.subr.mxu0 0.0
    %2171 = vmatpush1.msra.mxu0 0.0
    %2172 = vmatprep.subr.mxu0 0.0
    %2173 = vmatpush1.msra.mxu0 0.0
    %2174 = vmatprep.subr.mxu0 0.0
    %2175 = vmatpush1.msra.mxu0 0.0
    %2176 = vmatprep.subr.mxu0 0.0
    %2177 = vmatpush1.msra.mxu0 0.0
    %2178 = vmatprep.subr.mxu0 0.0
    %2179 = vmatpush1.msra.mxu0 0.0
    %2180 = vmatprep.subr.mxu0 0.0
    %2181 = vmatpush1.msra.mxu0 0.0
    %2182 = vmatprep.subr.mxu0 0.0
    %2183 = vmatpush1.msra.mxu0 0.0
    %2184 = vmatprep.subr.mxu0 0.0
    %2185 = vmatpush1.msra.mxu0 0.0
    %2186 = vmatprep.subr.mxu0 0.0
    %2187 = vmatpush1.msra.mxu0 0.0
    %2188 = vmatprep.subr.mxu0 0.0
    %2189 = vmatpush1.msra.mxu0 0.0
    %2190 = vmatprep.subr.mxu0 0.0
    %2191 = vmatpush1.msra.mxu0 0.0
    %2192 = vmatprep.subr.mxu0 0.0
    %2193 = vmatpush1.msra.mxu0 0.0
    %2194 = vmatprep.subr.mxu0 0.0
    %2195 = vmatpush1.msra.mxu0 0.0
    %2196 = vmatprep.subr.mxu0 0.0
    %2197 = vmatpush1.msra.mxu0 0.0
    %2198 = vmatprep.subr.mxu0 0.0
    %2199 = vmatpush1.msra.mxu0 0.0
    %2200 = vmatprep.subr.mxu0 0.0
    %2201 = vmatpush1.msra.mxu0 0.0
    %2202 = vmatprep.mubr.f32.mxu0 0.0
    %2203 = vmatmul.mubr.f32.gmra.mrb[0].mxu0 %v2122
    %v2204 = vpop.f32.mrb[0].mxu0
    %v2205 = vadd.f32 %v2136, %v2204
    %v2206 = vpop.f32.mrb[0].mxu0
    %2207 = vmatprep.mubr.f32.mxu0 0.0
    %2208 = vmatmul.mubr.f32.gmra.mrb[0].mxu0 %v2124
    %v2209 = vpop.f32.mrb[0].mxu0
    %v2210 = vadd.f32 %v2136, %v2209
    %v2211 = vpop.f32.mrb[0].mxu0
    %2212 = vmatprep.mubr.f32.mxu0 0.0
    %2213 = vmatmul.mubr.f32.gmra.mrb[0].mxu0 %v2126
    %v2214 = vpop.f32.mrb[0].mxu0
    %v2215 = vadd.f32 %v2136, %v2214
    %v2216 = vpop.f32.mrb[0].mxu0
    %2217 = vmatprep.mubr.f32.mxu0 0.0
    %2218 = vmatmul.mubr.f32.gmra.mrb[0].mxu0 %v2128
    %v2219 = vpop.f32.mrb[0].mxu0
    %v2220 = vadd.f32 %v2136, %v2219
    %v2221 = vpop.f32.mrb[0].mxu0
    %2222 = vmatprep.mubr.f32.mxu0 0.0
    %2223 = vmatmul.mubr.f32.gmra.mrb[0].mxu0 %v2130
    %v2224 = vpop.f32.mrb[0].mxu0
    %v2225 = vadd.f32 %v2136, %v2224
    %v2226 = vpop.f32.mrb[0].mxu0
    %2227 = vdwg.mxu0
    %2229 = vset.pattern.permute.xlu0 0
    %2230 = vperm.xlu0 %2229, %v2205
    %v2231 = vpop.permute.xlu0 %2230
    %2234 = vset.pattern.permute.xlu0 0
    %2235 = vperm.xlu0 %2234, %v2210
    %v2236 = vpop.permute.xlu0 %2235
    %2239 = vset.pattern.permute.xlu0 0
    %2240 = vperm.xlu0 %2239, %v2215
    %v2241 = vpop.permute.xlu0 %2240
    %2244 = vset.pattern.permute.xlu0 0
    %2245 = vperm.xlu0 %2244, %v2220
    %v2246 = vpop.permute.xlu0 %2245
    %2249 = vset.pattern.permute.xlu0 0
    %2250 = vperm.xlu0 %2249, %v2225
    %v2251 = vpop.permute.xlu0 %2250
    %v2253 = vsel %vm221, %v2231, -1e+30
    %v2254 = vsel %vm222, %v2236, -1e+30
    %v2255 = vsel %vm223, %v2241, -1e+30
    %v2256 = vsel %vm224, %v2246, -1e+30
    %v2257 = vsel %vm225, %v2251, -1e+30
    %v2258 = vsel %vm301, %v2253, -inf
    %v2259 = vsel %vm301, %v2254, -inf
    %v2260 = vsel %vm301, %v2255, -inf
    %v2261 = vsel %vm301, %v2256, -inf
    %v2262 = vsel %vm983, %v2257, -inf
    %v2263 = vmax.f32 %v2258, %v2262
    %v2264 = vmax.f32 %v2263, %v2259
    %v2265 = vmax.f32 %v2260, %v2261
    %v2266 = vmax.f32 %v2264, %v2265
    %v2267 = vrot.slane %v2266, 4
    %v2268 = vmax.f32 %v2266, %v2267
    %v2269 = vrot.slane %v2268, 2
    %v2270 = vmax.f32 %v2268, %v2269
    %v2271 = vrot.slane %v2270, 1
    %v2272 = vmax.f32 %v2270, %v2271
    %v2273 = vmul.f32 %v231, %v2272
    %v2274 = vmul.f32 %v232, %v2272
    %v2275 = vmul.f32 %v233, %v2272
    %v2276 = vmul.f32 %v234, %v2272
    %v2277 = vmul.f32 %v235, %v2272
    %v2278 = vsel %vm301, %v2273, 0.0
    %2279 = vadd.xlane.f32.xlu0 %v2278
    %v2280 = vpop.xlane.xlu0 %2279
    %v2281 = vsel %vm301, %v2274, 0.0
    %2282 = vadd.xlane.f32.xlu0 %v2281
    %v2283 = vpop.xlane.xlu0 %2282
    %v2284 = vsel %vm301, %v2275, 0.0
    %2285 = vadd.xlane.f32.xlu0 %v2284
    %v2286 = vpop.xlane.xlu0 %2285
    %v2287 = vsel %vm301, %v2276, 0.0
    %2288 = vadd.xlane.f32.xlu0 %v2287
    %v2289 = vpop.xlane.xlu0 %2288
    %v2290 = vsel %vm983, %v2277, 0.0
    %2291 = vadd.xlane.f32.xlu0 %v2290
    %v2292 = vpop.xlane.xlu0 %2291
    %2293 = vset.pattern.permute.xlu0 1
    %2294 = vperm.xlu0 %2293, %v2205
    %v2295 = vpop.permute.xlu0 %2294
    %2297 = vset.pattern.permute.xlu0 1
    %2298 = vperm.xlu0 %2297, %v2210
    %v2299 = vpop.permute.xlu0 %2298
    %2301 = vset.pattern.permute.xlu0 1
    %2302 = vperm.xlu0 %2301, %v2215
    %v2303 = vpop.permute.xlu0 %2302
    %2305 = vset.pattern.permute.xlu0 1
    %2306 = vperm.xlu0 %2305, %v2220
    %v2307 = vpop.permute.xlu0 %2306
    %2309 = vset.pattern.permute.xlu0 1
    %2310 = vperm.xlu0 %2309, %v2225
    %v2311 = vpop.permute.xlu0 %2310
    %v2313 = vsel %vm221, %v2295, -1e+30
    %v2314 = vsel %vm222, %v2299, -1e+30
    %v2315 = vsel %vm223, %v2303, -1e+30
    %v2316 = vsel %vm224, %v2307, -1e+30
    %v2317 = vsel %vm225, %v2311, -1e+30
    %v2318 = vsel %vm301, %v2313, -inf
    %v2319 = vsel %vm301, %v2314, -inf
    %v2320 = vsel %vm301, %v2315, -inf
    %v2321 = vsel %vm301, %v2316, -inf
    %v2322 = vsel %vm983, %v2317, -inf
    %v2323 = vmax.f32 %v2318, %v2322
    %v2324 = vmax.f32 %v2323, %v2319
    %v2325 = vmax.f32 %v2320, %v2321
    %v2326 = vmax.f32 %v2324, %v2325
    %v2327 = vrot.slane %v2326, 4
    %v2328 = vmax.f32 %v2326, %v2327
    %v2329 = vrot.slane %v2328, 2
    %v2330 = vmax.f32 %v2328, %v2329
    %v2331 = vrot.slane %v2330, 1
    %v2332 = vmax.f32 %v2330, %v2331
    %v2333 = vmul.f32 %v231, %v2332
    %v2334 = vmul.f32 %v232, %v2332
    %v2335 = vmul.f32 %v233, %v2332
    %v2336 = vmul.f32 %v234, %v2332
    %v2337 = vmul.f32 %v235, %v2332
    %v2338 = vsel %vm301, %v2333, 0.0
    %2339 = vadd.xlane.f32.xlu0 %v2338
    %v2340 = vpop.xlane.xlu0 %2339
    %v2341 = vsel %vm301, %v2334, 0.0
    %2342 = vadd.xlane.f32.xlu0 %v2341
    %v2343 = vpop.xlane.xlu0 %2342
    %v2344 = vsel %vm301, %v2335, 0.0
    %2345 = vadd.xlane.f32.xlu0 %v2344
    %v2346 = vpop.xlane.xlu0 %2345
    %v2347 = vsel %vm301, %v2336, 0.0
    %2348 = vadd.xlane.f32.xlu0 %v2347
    %v2349 = vpop.xlane.xlu0 %2348
    %v2350 = vsel %vm983, %v2337, 0.0
    %2351 = vadd.xlane.f32.xlu0 %v2350
    %v2352 = vpop.xlane.xlu0 %2351
    %v2353 = vsel %vm1075, %v2280, %v2340
    %v2354 = vsel %vm1075, %v2283, %v2343
    %v2355 = vsel %vm1075, %v2286, %v2346
    %v2356 = vsel %vm1075, %v2289, %v2349
    %v2357 = vsel %vm1075, %v2292, %v2352
    %v2359 = vlaneseq
    %v2360 = vshrl.u32 %v2359, 7
    %v2361 = vsub.s32 0, %v2360
    %v2362 = vrot.slane %v1980, %v2361
    %v2364 = vmul.f32 %v2362, %v1090
    %v2365 = vmul.f32 %v2362, %v1095
    %v2366 = vmul.f32 %v2362, %v1100
    %v2367 = vmul.f32 %v2362, %v1105
    %v2368 = vmul.f32 %v2362, %v1110
    %v2369 = vmul.f32 %v2364, 1.442695
    %v2370 = vpow.pop %v2369
    %v2371 = vmul.f32 %v2365, 1.442695
    %v2372 = vpow.pop %v2371
    %v2373 = vmul.f32 %v2366, 1.442695
    %v2374 = vpow.pop %v2373
    %v2375 = vmul.f32 %v2367, 1.442695
    %v2376 = vpow.pop %v2375
    %v2377 = vmul.f32 %v2368, 1.442695
    %v2378 = vpow.pop %v2377
    %v2379 = vsub.f32 %v2205, %v2353
    %v2380 = vsub.f32 %v2210, %v2354
    %v2381 = vsub.f32 %v2215, %v2355
    %v2382 = vsub.f32 %v2220, %v2356
    %v2383 = vsub.f32 %v2225, %v2357
    %v2384 = vmul.f32 %v2379, 1.442695
    %v2385 = vpow.pop %v2384
    %v2386 = vmul.f32 %v2380, 1.442695
    %v2387 = vpow.pop %v2386
    %v2388 = vmul.f32 %v2381, 1.442695
    %v2389 = vpow.pop %v2388
    %v2390 = vmul.f32 %v2382, 1.442695
    %v2391 = vpow.pop %v2390
    %v2392 = vmul.f32 %v2383, 1.442695
    %v2393 = vpow.pop %v2392
    %v2394 = vmul.f32 %v2370, %v2385
    %v2395 = vmul.f32 %v2372, %v2387
    %v2396 = vmul.f32 %v2374, %v2389
    %v2397 = vmul.f32 %v2376, %v2391
    %v2398 = vmul.f32 %v2378, %v2393
    %v2400 = vsel %vm317, %v2398, 0
    %2402 = vmatprep.subr.mxu0 0.0
    %2403 = vmatpush1.msra.mxu0 %v2394
    %2404 = vmatprep.subr.mxu0 0.0
    %2405 = vmatpush1.msra.mxu0 %v2395
    %2406 = vmatprep.subr.mxu0 0.0
    %2407 = vmatpush1.msra.mxu0 %v2396
    %2408 = vmatprep.subr.mxu0 0.0
    %2409 = vmatpush1.msra.mxu0 %v2397
    %2410 = vmatprep.subr.mxu0 0.0
    %2411 = vmatpush1.msra.mxu0 %v2400
    %2412 = vmatprep.subr.mxu0 0.0
    %2413 = vmatpush1.msra.mxu0 0.0
    %2414 = vmatprep.subr.mxu0 0.0
    %2415 = vmatpush1.msra.mxu0 0.0
    %2416 = vmatprep.subr.mxu0 0.0
    %2417 = vmatpush1.msra.mxu0 0.0
    %2418 = vmatprep.subr.mxu0 0.0
    %2419 = vmatpush1.msra.mxu0 0.0
    %2420 = vmatprep.subr.mxu0 0.0
    %2421 = vmatpush1.msra.mxu0 0.0
    %2422 = vmatprep.subr.mxu0 0.0
    %2423 = vmatpush1.msra.mxu0 0.0
    %2424 = vmatprep.subr.mxu0 0.0
    %2425 = vmatpush1.msra.mxu0 0.0
    %2426 = vmatprep.subr.mxu0 0.0
    %2427 = vmatpush1.msra.mxu0 0.0
    %2428 = vmatprep.subr.mxu0 0.0
    %2429 = vmatpush1.msra.mxu0 0.0
    %2430 = vmatprep.subr.mxu0 0.0
    %2431 = vmatpush1.msra.mxu0 0.0
    %2432 = vmatprep.subr.mxu0 0.0
    %2433 = vmatpush1.msra.mxu0 0.0
    %2434 = vmatprep.subr.mxu0 0.0
    %2435 = vmatpush1.msra.mxu0 0.0
    %2436 = vmatprep.subr.mxu0 0.0
    %2437 = vmatpush1.msra.mxu0 0.0
    %2438 = vmatprep.subr.mxu0 0.0
    %2439 = vmatpush1.msra.mxu0 0.0
    %2440 = vmatprep.subr.mxu0 0.0
    %2441 = vmatpush1.msra.mxu0 0.0
    %2442 = vmatprep.subr.mxu0 0.0
    %2443 = vmatpush1.msra.mxu0 0.0
    %2444 = vmatprep.subr.mxu0 0.0
    %2445 = vmatpush1.msra.mxu0 0.0
    %2446 = vmatprep.subr.mxu0 0.0
    %2447 = vmatpush1.msra.mxu0 0.0
    %2448 = vmatprep.subr.mxu0 0.0
    %2449 = vmatpush1.msra.mxu0 0.0
    %2450 = vmatprep.subr.mxu0 0.0
    %2451 = vmatpush1.msra.mxu0 0.0
    %2452 = vmatprep.subr.mxu0 0.0
    %2453 = vmatpush1.msra.mxu0 0.0
    %2454 = vmatprep.subr.mxu0 0.0
    %2455 = vmatpush1.msra.mxu0 0.0
    %2456 = vmatprep.subr.mxu0 0.0
    %2457 = vmatpush1.msra.mxu0 0.0
    %2458 = vmatprep.subr.mxu0 0.0
    %2459 = vmatpush1.msra.mxu0 0.0
    %2460 = vmatprep.subr.mxu0 0.0
    %2461 = vmatpush1.msra.mxu0 0.0
    %2462 = vmatprep.subr.mxu0 0.0
    %2463 = vmatpush1.msra.mxu0 0.0
    %2464 = vmatprep.subr.mxu0 0.0
    %2465 = vmatpush1.msra.mxu0 0.0
    %2466 = vmatprep.mubr.f32.mxu0 0.0
    %2467 = vmatmul.mubr.f32.gmra.mrb[0].mxu0 %v1149
    %v2468 = vpop.f32.mrb[0].mxu0
    %v2469 = vadd.f32 0.0, %v2468
    %v2470 = vpop.f32.mrb[0].mxu0
    %2471 = vmatprep.mubr.f32.mxu0 0.0
    %2472 = vmatmul.mubr.f32.gmra.mrb[0].mxu0 %v1152
    %v2473 = vpop.f32.mrb[0].mxu0
    %v2474 = vadd.f32 0.0, %v2473
    %v2475 = vpop.f32.mrb[0].mxu0
    %2476 = vdwg.mxu0
    %v2478 = vsel %vm317, %v2474, 0
    %2480 = vmatprep.subr.mxu0 0.0
    %2481 = vmatpush1.msra.mxu0 %v2469
    %2482 = vmatprep.subr.mxu0 0.0
    %2483 = vmatpush1.msra.mxu0 %v2478
    %2484 = vmatprep.subr.mxu0 0.0
    %2485 = vmatpush1.msra.mxu0 0.0
    %2486 = vmatprep.subr.mxu0 0.0
    %2487 = vmatpush1.msra.mxu0 0.0
    %2488 = vmatprep.subr.mxu0 0.0
    %2489 = vmatpush1.msra.mxu0 0.0
    %2490 = vmatprep.subr.mxu0 0.0
    %2491 = vmatpush1.msra.mxu0 0.0
    %2492 = vmatprep.subr.mxu0 0.0
    %2493 = vmatpush1.msra.mxu0 0.0
    %2494 = vmatprep.subr.mxu0 0.0
    %2495 = vmatpush1.msra.mxu0 0.0
    %2496 = vmatprep.subr.mxu0 0.0
    %2497 = vmatpush1.msra.mxu0 0.0
    %2498 = vmatprep.subr.mxu0 0.0
    %2499 = vmatpush1.msra.mxu0 0.0
    %2500 = vmatprep.subr.mxu0 0.0
    %2501 = vmatpush1.msra.mxu0 0.0
    %2502 = vmatprep.subr.mxu0 0.0
    %2503 = vmatpush1.msra.mxu0 0.0
    %2504 = vmatprep.subr.mxu0 0.0
    %2505 = vmatpush1.msra.mxu0 0.0
    %2506 = vmatprep.subr.mxu0 0.0
    %2507 = vmatpush1.msra.mxu0 0.0
    %2508 = vmatprep.subr.mxu0 0.0
    %2509 = vmatpush1.msra.mxu0 0.0
    %2510 = vmatprep.subr.mxu0 0.0
    %2511 = vmatpush1.msra.mxu0 0.0
    %2512 = vmatprep.subr.mxu0 0.0
    %2513 = vmatpush1.msra.mxu0 0.0
    %2514 = vmatprep.subr.mxu0 0.0
    %2515 = vmatpush1.msra.mxu0 0.0
    %2516 = vmatprep.subr.mxu0 0.0
    %2517 = vmatpush1.msra.mxu0 0.0
    %2518 = vmatprep.subr.mxu0 0.0
    %2519 = vmatpush1.msra.mxu0 0.0
    %2520 = vmatprep.subr.mxu0 0.0
    %2521 = vmatpush1.msra.mxu0 0.0
    %2522 = vmatprep.subr.mxu0 0.0
    %2523 = vmatpush1.msra.mxu0 0.0
    %2524 = vmatprep.subr.mxu0 0.0
    %2525 = vmatpush1.msra.mxu0 0.0
    %2526 = vmatprep.subr.mxu0 0.0
    %2527 = vmatpush1.msra.mxu0 0.0
    %2528 = vmatprep.subr.mxu0 0.0
    %2529 = vmatpush1.msra.mxu0 0.0
    %2530 = vmatprep.subr.mxu0 0.0
    %2531 = vmatpush1.msra.mxu0 0.0
    %2532 = vmatprep.subr.mxu0 0.0
    %2533 = vmatpush1.msra.mxu0 0.0
    %2534 = vmatprep.subr.mxu0 0.0
    %2535 = vmatpush1.msra.mxu0 0.0
    %2536 = vmatprep.subr.mxu0 0.0
    %2537 = vmatpush1.msra.mxu0 0.0
    %2538 = vmatprep.subr.mxu0 0.0
    %2539 = vmatpush1.msra.mxu0 0.0
    %2540 = vmatprep.subr.mxu0 0.0
    %2541 = vmatpush1.msra.mxu0 0.0
    %2542 = vmatprep.subr.mxu0 0.0
    %2543 = vmatpush1.msra.mxu0 0.0
    %2544 = vmatprep.mubr.f32.mxu0 0.0
    %2545 = vmatmul.mubr.f32.gmra.mrb[0].mxu0 %v426
    %v2546 = vpop.f32.mrb[0].mxu0
    %v2547 = vadd.f32 1e-10, %v2546
    %v2548 = vpop.f32.mrb[0].mxu0
    %2549 = vmatprep.mubr.f32.mxu0 0.0
    %2550 = vmatmul.mubr.f32.gmra.mrb[0].mxu0 %v429
    %v2551 = vpop.f32.mrb[0].mxu0
    %v2552 = vadd.f32 1e-10, %v2551
    %v2553 = vpop.f32.mrb[0].mxu0
    %2554 = vmatprep.mubr.f32.mxu0 0.0
    %2555 = vmatmul.mubr.f32.gmra.mrb[0].mxu0 %v432
    %v2556 = vpop.f32.mrb[0].mxu0
    %v2557 = vadd.f32 1e-10, %v2556
    %v2558 = vpop.f32.mrb[0].mxu0
    %2559 = vmatprep.mubr.f32.mxu0 0.0
    %2560 = vmatmul.mubr.f32.gmra.mrb[0].mxu0 %v435
    %v2561 = vpop.f32.mrb[0].mxu0
    %v2562 = vadd.f32 1e-10, %v2561
    %v2563 = vpop.f32.mrb[0].mxu0
    %2564 = vmatprep.mubr.f32.mxu0 0.0
    %2565 = vmatmul.mubr.f32.gmra.mrb[0].mxu0 %v438
    %v2566 = vpop.f32.mrb[0].mxu0
    %v2567 = vadd.f32 1e-10, %v2566
    %v2568 = vpop.f32.mrb[0].mxu0
    %2569 = vdwg.mxu0
    %v2570 = vrcp.pop %v2547
    %v2571 = vmul.f32 %v2394, %v2570
    %v2572 = vrcp.pop %v2552
    %v2573 = vmul.f32 %v2395, %v2572
    %v2574 = vrcp.pop %v2557
    %v2575 = vmul.f32 %v2396, %v2574
    %v2576 = vrcp.pop %v2562
    %v2577 = vmul.f32 %v2397, %v2576
    %v2578 = vrcp.pop %v2567
    %v2579 = vmul.f32 %v2398, %v2578
    %v2581 = vsel %vm1335, %v2571, 0
    %v2584 = vsel %vm1335, %v2573, 0
    %v2587 = vsel %vm1335, %v2575, 0
    %v2590 = vsel %vm1335, %v2577, 0
    %v2593 = vsel %vm1335, %v2579, 0
    %2595 = vmatprep.subr.mxu0 0.0
    %2596 = vmatpush1.msra.mxu0 %v1352
    %2597 = vmatprep.subr.mxu0 0.0
    %2598 = vmatpush1.msra.mxu0 0.0
    %2599 = vmatprep.subr.mxu0 0.0
    %2600 = vmatpush1.msra.mxu0 0.0
    %2601 = vmatprep.subr.mxu0 0.0
    %2602 = vmatpush1.msra.mxu0 0.0
    %2603 = vmatprep.subr.mxu0 0.0
    %2604 = vmatpush1.msra.mxu0 0.0
    %2605 = vmatprep.subr.mxu0 0.0
    %2606 = vmatpush1.msra.mxu0 0.0
    %2607 = vmatprep.subr.mxu0 0.0
    %2608 = vmatpush1.msra.mxu0 0.0
    %2609 = vmatprep.subr.mxu0 0.0
    %2610 = vmatpush1.msra.mxu0 0.0
    %2611 = vmatprep.subr.mxu0 0.0
    %2612 = vmatpush1.msra.mxu0 0.0
    %2613 = vmatprep.subr.mxu0 0.0
    %2614 = vmatpush1.msra.mxu0 0.0
    %2615 = vmatprep.subr.mxu0 0.0
    %2616 = vmatpush1.msra.mxu0 0.0
    %2617 = vmatprep.subr.mxu0 0.0
    %2618 = vmatpush1.msra.mxu0 0.0
    %2619 = vmatprep.subr.mxu0 0.0
    %2620 = vmatpush1.msra.mxu0 0.0
    %2621 = vmatprep.subr.mxu0 0.0
    %2622 = vmatpush1.msra.mxu0 0.0
    %2623 = vmatprep.subr.mxu0 0.0
    %2624 = vmatpush1.msra.mxu0 0.0
    %2625 = vmatprep.subr.mxu0 0.0
    %2626 = vmatpush1.msra.mxu0 0.0
    %2627 = vmatprep.subr.mxu0 0.0
    %2628 = vmatpush1.msra.mxu0 0.0
    %2629 = vmatprep.subr.mxu0 0.0
    %2630 = vmatpush1.msra.mxu0 0.0
    %2631 = vmatprep.subr.mxu0 0.0
    %2632 = vmatpush1.msra.mxu0 0.0
    %2633 = vmatprep.subr.mxu0 0.0
    %2634 = vmatpush1.msra.mxu0 0.0
    %2635 = vmatprep.subr.mxu0 0.0
    %2636 = vmatpush1.msra.mxu0 0.0
    %2637 = vmatprep.subr.mxu0 0.0
    %2638 = vmatpush1.msra.mxu0 0.0
    %2639 = vmatprep.subr.mxu0 0.0
    %2640 = vmatpush1.msra.mxu0 0.0
    %2641 = vmatprep.subr.mxu0 0.0
    %2642 = vmatpush1.msra.mxu0 0.0
    %2643 = vmatprep.subr.mxu0 0.0
    %2644 = vmatpush1.msra.mxu0 0.0
    %2645 = vmatprep.subr.mxu0 0.0
    %2646 = vmatpush1.msra.mxu0 0.0
    %2647 = vmatprep.subr.mxu0 0.0
    %2648 = vmatpush1.msra.mxu0 0.0
    %2649 = vmatprep.subr.mxu0 0.0
    %2650 = vmatpush1.msra.mxu0 0.0
    %2651 = vmatprep.subr.mxu0 0.0
    %2652 = vmatpush1.msra.mxu0 0.0
    %2653 = vmatprep.subr.mxu0 0.0
    %2654 = vmatpush1.msra.mxu0 0.0
    %2655 = vmatprep.subr.mxu0 0.0
    %2656 = vmatpush1.msra.mxu0 0.0
    %2657 = vmatprep.subr.mxu0 0.0
    %2658 = vmatpush1.msra.mxu0 0.0
    %2659 = vmatprep.mubr.f32.mxu0 0.0
    %2660 = vmatmul.mubr.f32.gmra.mrb[0].mxu0 %v2581
    %v2661 = vpop.f32.mrb[0].mxu0
    %v2662 = vadd.f32 0.0, %v2661
    %v2663 = vpop.f32.mrb[0].mxu0
    %2664 = vmatprep.mubr.f32.mxu0 0.0
    %2665 = vmatmul.mubr.f32.gmra.mrb[0].mxu0 %v2584
    %v2666 = vpop.f32.mrb[0].mxu0
    %v2667 = vadd.f32 0.0, %v2666
    %v2668 = vpop.f32.mrb[0].mxu0
    %2669 = vmatprep.mubr.f32.mxu0 0.0
    %2670 = vmatmul.mubr.f32.gmra.mrb[0].mxu0 %v2587
    %v2671 = vpop.f32.mrb[0].mxu0
    %v2672 = vadd.f32 0.0, %v2671
    %v2673 = vpop.f32.mrb[0].mxu0
    %2674 = vmatprep.mubr.f32.mxu0 0.0
    %2675 = vmatmul.mubr.f32.gmra.mrb[0].mxu0 %v2590
    %v2676 = vpop.f32.mrb[0].mxu0
    %v2677 = vadd.f32 0.0, %v2676
    %v2678 = vpop.f32.mrb[0].mxu0
    %2679 = vmatprep.mubr.f32.mxu0 0.0
    %2680 = vmatmul.mubr.f32.gmra.mrb[0].mxu0 %v2593
    %v2681 = vpop.f32.mrb[0].mxu0
    %v2682 = vadd.f32 0.0, %v2681
    %v2683 = vpop.f32.mrb[0].mxu0
    %2684 = vdwg.mxu0
    %v2685 = vmul.f32 %v2662, %v2123
    %v2686 = vmul.f32 %v2667, %v2125
    %v2687 = vmul.f32 %v2672, %v2127
    %v2688 = vmul.f32 %v2677, %v2129
    %v2689 = vmul.f32 %v2682, %v2131
    %v2691 = vsel %vm317, %v1978, 0
    %2693 = vmatprep.subr.mxu0 0.0
    %2694 = vmatpush1.msra.mxu0 %v2691
    %2695 = vmatprep.subr.mxu0 0.0
    %2696 = vmatpush1.msra.mxu0 0.0
    %2697 = vmatprep.subr.mxu0 0.0
    %2698 = vmatpush1.msra.mxu0 0.0
    %2699 = vmatprep.subr.mxu0 0.0
    %2700 = vmatpush1.msra.mxu0 0.0
    %2701 = vmatprep.subr.mxu0 0.0
    %2702 = vmatpush1.msra.mxu0 0.0
    %2703 = vmatprep.subr.mxu0 0.0
    %2704 = vmatpush1.msra.mxu0 0.0
    %2705 = vmatprep.subr.mxu0 0.0
    %2706 = vmatpush1.msra.mxu0 0.0
    %2707 = vmatprep.subr.mxu0 0.0
    %2708 = vmatpush1.msra.mxu0 0.0
    %2709 = vmatprep.subr.mxu0 0.0
    %2710 = vmatpush1.msra.mxu0 0.0
    %2711 = vmatprep.subr.mxu0 0.0
    %2712 = vmatpush1.msra.mxu0 0.0
    %2713 = vmatprep.subr.mxu0 0.0
    %2714 = vmatpush1.msra.mxu0 0.0
    %2715 = vmatprep.subr.mxu0 0.0
    %2716 = vmatpush1.msra.mxu0 0.0
    %2717 = vmatprep.subr.mxu0 0.0
    %2718 = vmatpush1.msra.mxu0 0.0
    %2719 = vmatprep.subr.mxu0 0.0
    %2720 = vmatpush1.msra.mxu0 0.0
    %2721 = vmatprep.subr.mxu0 0.0
    %2722 = vmatpush1.msra.mxu0 0.0
    %2723 = vmatprep.subr.mxu0 0.0
    %2724 = vmatpush1.msra.mxu0 0.0
    %2725 = vmatprep.subr.mxu0 0.0
    %2726 = vmatpush1.msra.mxu0 0.0
    %2727 = vmatprep.subr.mxu0 0.0
    %2728 = vmatpush1.msra.mxu0 0.0
    %2729 = vmatprep.subr.mxu0 0.0
    %2730 = vmatpush1.msra.mxu0 0.0
    %2731 = vmatprep.subr.mxu0 0.0
    %2732 = vmatpush1.msra.mxu0 0.0
    %2733 = vmatprep.subr.mxu0 0.0
    %2734 = vmatpush1.msra.mxu0 0.0
    %2735 = vmatprep.subr.mxu0 0.0
    %2736 = vmatpush1.msra.mxu0 0.0
    %2737 = vmatprep.subr.mxu0 0.0
    %2738 = vmatpush1.msra.mxu0 0.0
    %2739 = vmatprep.subr.mxu0 0.0
    %2740 = vmatpush1.msra.mxu0 0.0
    %2741 = vmatprep.subr.mxu0 0.0
    %2742 = vmatpush1.msra.mxu0 0.0
    %2743 = vmatprep.subr.mxu0 0.0
    %2744 = vmatpush1.msra.mxu0 0.0
    %2745 = vmatprep.subr.mxu0 0.0
    %2746 = vmatpush1.msra.mxu0 0.0
    %2747 = vmatprep.subr.mxu0 0.0
    %2748 = vmatpush1.msra.mxu0 0.0
    %2749 = vmatprep.subr.mxu0 0.0
    %2750 = vmatpush1.msra.mxu0 0.0
    %2751 = vmatprep.subr.mxu0 0.0
    %2752 = vmatpush1.msra.mxu0 0.0
    %2753 = vmatprep.subr.mxu0 0.0
    %2754 = vmatpush1.msra.mxu0 0.0
    %2755 = vmatprep.subr.mxu0 0.0
    %2756 = vmatpush1.msra.mxu0 0.0
    %2757 = vmatprep.mubr.f32.mxu0 0.0
    %2758 = vmatmul.mubr.f32.gmra.mrb[0].mxu0 %v2581
    %v2759 = vpop.f32.mrb[0].mxu0
    %v2760 = vadd.f32 0.0, %v2759
    %v2761 = vpop.f32.mrb[0].mxu0
    %2762 = vmatprep.mubr.f32.mxu0 0.0
    %2763 = vmatmul.mubr.f32.gmra.mrb[0].mxu0 %v2584
    %v2764 = vpop.f32.mrb[0].mxu0
    %v2765 = vadd.f32 0.0, %v2764
    %v2766 = vpop.f32.mrb[0].mxu0
    %2767 = vmatprep.mubr.f32.mxu0 0.0
    %2768 = vmatmul.mubr.f32.gmra.mrb[0].mxu0 %v2587
    %v2769 = vpop.f32.mrb[0].mxu0
    %v2770 = vadd.f32 0.0, %v2769
    %v2771 = vpop.f32.mrb[0].mxu0
    %2772 = vmatprep.mubr.f32.mxu0 0.0
    %2773 = vmatmul.mubr.f32.gmra.mrb[0].mxu0 %v2590
    %v2774 = vpop.f32.mrb[0].mxu0
    %v2775 = vadd.f32 0.0, %v2774
    %v2776 = vpop.f32.mrb[0].mxu0
    %2777 = vmatprep.mubr.f32.mxu0 0.0
    %2778 = vmatmul.mubr.f32.gmra.mrb[0].mxu0 %v2593
    %v2779 = vpop.f32.mrb[0].mxu0
    %v2780 = vadd.f32 0.0, %v2779
    %v2781 = vpop.f32.mrb[0].mxu0
    %2782 = vdwg.mxu0
    %2783 = vmatprep.subr.mxu0 0.0
    %2784 = vmatpush1.msra.mxu0 %v1961
    %2785 = vmatprep.subr.mxu0 0.0
    %2786 = vmatpush1.msra.mxu0 %v1962
    %2787 = vmatprep.subr.mxu0 0.0
    %2788 = vmatpush1.msra.mxu0 %v1963
    %2789 = vmatprep.subr.mxu0 0.0
    %2790 = vmatpush1.msra.mxu0 %v1964
    %2791 = vmatprep.subr.mxu0 0.0
    %2792 = vmatpush1.msra.mxu0 %v1965
    %2793 = vmatprep.subr.mxu0 0.0
    %2794 = vmatpush1.msra.mxu0 %v1966
    %2795 = vmatprep.subr.mxu0 0.0
    %2796 = vmatpush1.msra.mxu0 %v1967
    %2797 = vmatprep.subr.mxu0 0.0
    %2798 = vmatpush1.msra.mxu0 %v1968
    %2799 = vmatprep.subr.mxu0 0.0
    %2800 = vmatpush1.msra.mxu0 %v1969
    %2801 = vmatprep.subr.mxu0 0.0
    %2802 = vmatpush1.msra.mxu0 %v1970
    %2803 = vmatprep.subr.mxu0 0.0
    %2804 = vmatpush1.msra.mxu0 %v1971
    %2805 = vmatprep.subr.mxu0 0.0
    %2806 = vmatpush1.msra.mxu0 %v1972
    %2807 = vmatprep.subr.mxu0 0.0
    %2808 = vmatpush1.msra.mxu0 %v1973
    %2809 = vmatprep.subr.mxu0 0.0
    %2810 = vmatpush1.msra.mxu0 %v1974
    %2811 = vmatprep.subr.mxu0 0.0
    %2812 = vmatpush1.msra.mxu0 %v1975
    %2813 = vmatprep.subr.mxu0 0.0
    %2814 = vmatpush1.msra.mxu0 %v1976
    %2815 = vmatprep.subr.mxu0 0.0
    %2816 = vmatpush1.msra.mxu0 0.0
    %2817 = vmatprep.subr.mxu0 0.0
    %2818 = vmatpush1.msra.mxu0 0.0
    %2819 = vmatprep.subr.mxu0 0.0
    %2820 = vmatpush1.msra.mxu0 0.0
    %2821 = vmatprep.subr.mxu0 0.0
    %2822 = vmatpush1.msra.mxu0 0.0
    %2823 = vmatprep.subr.mxu0 0.0
    %2824 = vmatpush1.msra.mxu0 0.0
    %2825 = vmatprep.subr.mxu0 0.0
    %2826 = vmatpush1.msra.mxu0 0.0
    %2827 = vmatprep.subr.mxu0 0.0
    %2828 = vmatpush1.msra.mxu0 0.0
    %2829 = vmatprep.subr.mxu0 0.0
    %2830 = vmatpush1.msra.mxu0 0.0
    %2831 = vmatprep.subr.mxu0 0.0
    %2832 = vmatpush1.msra.mxu0 0.0
    %2833 = vmatprep.subr.mxu0 0.0
    %2834 = vmatpush1.msra.mxu0 0.0
    %2835 = vmatprep.subr.mxu0 0.0
    %2836 = vmatpush1.msra.mxu0 0.0
    %2837 = vmatprep.subr.mxu0 0.0
    %2838 = vmatpush1.msra.mxu0 0.0
    %2839 = vmatprep.subr.mxu0 0.0
    %2840 = vmatpush1.msra.mxu0 0.0
    %2841 = vmatprep.subr.mxu0 0.0
    %2842 = vmatpush1.msra.mxu0 0.0
    %2843 = vmatprep.subr.mxu0 0.0
    %2844 = vmatpush1.msra.mxu0 0.0
    %2845 = vmatprep.subr.mxu0 0.0
    %2846 = vmatpush1.msra.mxu0 0.0
    %2847 = vmatprep.mubr.f32.mxu0 0.0
    %2848 = vmatmul.mubr.f32.gmra.mrb[0].mxu0 %v2685
    %v2849 = vpop.f32.mrb[0].mxu0
    %v2850 = vadd.f32 %v2760, %v2849
    %v2851 = vpop.f32.mrb[0].mxu0
    %2852 = vmatprep.mubr.f32.mxu0 0.0
    %2853 = vmatmul.mubr.f32.gmra.mrb[0].mxu0 %v2686
    %v2854 = vpop.f32.mrb[0].mxu0
    %v2855 = vadd.f32 %v2765, %v2854
    %v2856 = vpop.f32.mrb[0].mxu0
    %2857 = vmatprep.mubr.f32.mxu0 0.0
    %2858 = vmatmul.mubr.f32.gmra.mrb[0].mxu0 %v2687
    %v2859 = vpop.f32.mrb[0].mxu0
    %v2860 = vadd.f32 %v2770, %v2859
    %v2861 = vpop.f32.mrb[0].mxu0
    %2862 = vmatprep.mubr.f32.mxu0 0.0
    %2863 = vmatmul.mubr.f32.gmra.mrb[0].mxu0 %v2688
    %v2864 = vpop.f32.mrb[0].mxu0
    %v2865 = vadd.f32 %v2775, %v2864
    %v2866 = vpop.f32.mrb[0].mxu0
    %2867 = vmatprep.mubr.f32.mxu0 0.0
    %2868 = vmatmul.mubr.f32.gmra.mrb[0].mxu0 %v2689
    %v2869 = vpop.f32.mrb[0].mxu0
    %v2870 = vadd.f32 %v2780, %v2869
    %v2871 = vpop.f32.mrb[0].mxu0
    %2872 = vdwg.mxu0
    %v2874 = vsel %vm317, %v2870, 0
    %2876 = vmatprep.subr.mxu0 0.0
    %2877 = vmatpush1.msra.mxu0 %v2850
    %2878 = vmatprep.subr.mxu0 0.0
    %2879 = vmatpush1.msra.mxu0 %v2855
    %2880 = vmatprep.subr.mxu0 0.0
    %2881 = vmatpush1.msra.mxu0 %v2860
    %2882 = vmatprep.subr.mxu0 0.0
    %2883 = vmatpush1.msra.mxu0 %v2865
    %2884 = vmatprep.subr.mxu0 0.0
    %2885 = vmatpush1.msra.mxu0 %v2874
    %2886 = vmatprep.subr.mxu0 0.0
    %2887 = vmatpush1.msra.mxu0 0.0
    %2888 = vmatprep.subr.mxu0 0.0
    %2889 = vmatpush1.msra.mxu0 0.0
    %2890 = vmatprep.subr.mxu0 0.0
    %2891 = vmatpush1.msra.mxu0 0.0
    %2892 = vmatprep.subr.mxu0 0.0
    %2893 = vmatpush1.msra.mxu0 0.0
    %2894 = vmatprep.subr.mxu0 0.0
    %2895 = vmatpush1.msra.mxu0 0.0
    %2896 = vmatprep.subr.mxu0 0.0
    %2897 = vmatpush1.msra.mxu0 0.0
    %2898 = vmatprep.subr.mxu0 0.0
    %2899 = vmatpush1.msra.mxu0 0.0
    %2900 = vmatprep.subr.mxu0 0.0
    %2901 = vmatpush1.msra.mxu0 0.0
    %2902 = vmatprep.subr.mxu0 0.0
    %2903 = vmatpush1.msra.mxu0 0.0
    %2904 = vmatprep.subr.mxu0 0.0
    %2905 = vmatpush1.msra.mxu0 0.0
    %2906 = vmatprep.subr.mxu0 0.0
    %2907 = vmatpush1.msra.mxu0 0.0
    %2908 = vmatprep.subr.mxu0 0.0
    %2909 = vmatpush1.msra.mxu0 0.0
    %2910 = vmatprep.subr.mxu0 0.0
    %2911 = vmatpush1.msra.mxu0 0.0
    %2912 = vmatprep.subr.mxu0 0.0
    %2913 = vmatpush1.msra.mxu0 0.0
    %2914 = vmatprep.subr.mxu0 0.0
    %2915 = vmatpush1.msra.mxu0 0.0
    %2916 = vmatprep.subr.mxu0 0.0
    %2917 = vmatpush1.msra.mxu0 0.0
    %2918 = vmatprep.subr.mxu0 0.0
    %2919 = vmatpush1.msra.mxu0 0.0
    %2920 = vmatprep.subr.mxu0 0.0
    %2921 = vmatpush1.msra.mxu0 0.0
    %2922 = vmatprep.subr.mxu0 0.0
    %2923 = vmatpush1.msra.mxu0 0.0
    %2924 = vmatprep.subr.mxu0 0.0
    %2925 = vmatpush1.msra.mxu0 0.0
    %2926 = vmatprep.subr.mxu0 0.0
    %2927 = vmatpush1.msra.mxu0 0.0
    %2928 = vmatprep.subr.mxu0 0.0
    %2929 = vmatpush1.msra.mxu0 0.0
    %2930 = vmatprep.subr.mxu0 0.0
    %2931 = vmatpush1.msra.mxu0 0.0
    %2932 = vmatprep.subr.mxu0 0.0
    %2933 = vmatpush1.msra.mxu0 0.0
    %2934 = vmatprep.subr.mxu0 0.0
    %2935 = vmatpush1.msra.mxu0 0.0
    %2936 = vmatprep.subr.mxu0 0.0
    %2937 = vmatpush1.msra.mxu0 0.0
    %2938 = vmatprep.subr.mxu0 0.0
    %2939 = vmatpush1.msra.mxu0 0.0
    %2940 = vmatprep.mubr.f32.mxu0 0.0
    %2941 = vmatmul.mubr.f32.gmra.mrb[0].mxu0 %v1149
    %v2942 = vpop.f32.mrb[0].mxu0
    %v2943 = vadd.f32 0.0, %v2942
    %v2944 = vpop.f32.mrb[0].mxu0
    %2945 = vmatprep.mubr.f32.mxu0 0.0
    %2946 = vmatmul.mubr.f32.gmra.mrb[0].mxu0 %v1152
    %v2947 = vpop.f32.mrb[0].mxu0
    %v2948 = vadd.f32 0.0, %v2947
    %v2949 = vpop.f32.mrb[0].mxu0
    %2950 = vdwg.mxu0
    %v2951 = vmul.f32 %v2943, 0.5
    %v2952 = vmul.f32 %v2948, 0.5
    %v2953 = vadd.f32 %v2951, %v1712
    %v2954 = vadd.f32 %v2952, %v1713
    %v2955 = vld [vmem:[%s18] sm:$0xff]
    %v2956 = vld [vmem:[%s18 + $0x8] sm:$0xff]
    %v2957 = vld [vmem:[%s18 + $0x10] sm:$0xff]
    %v2958 = vld [vmem:[%s18 + $0x18] sm:$0xff]
    %v2959 = vld [vmem:[%s18 + $0x20] sm:$0xff]
    %v2960 = vld [vmem:[%s18 + $0x28] sm:$0xff]
    %v2961 = vld [vmem:[%s18 + $0x30] sm:$0xff]
    %v2962 = vld [vmem:[%s18 + $0x38] sm:$0xff]
    %v2963 = vld [vmem:[%s19] sm:$0x3]
    %v2964 = vld [vmem:[%s20] sm:$0xff]
    %v2965 = vld [vmem:[%s20 + $0x8] sm:$0xff]
    %v2966 = vld [vmem:[%s20 + $0x10] sm:$0xff]
    %v2967 = vld [vmem:[%s20 + $0x18] sm:$0xff]
    %v2968 = vld [vmem:[%s20 + $0x20] sm:$0xff]
    %v2969 = vld [vmem:[%s20 + $0x28] sm:$0xff]
    %v2970 = vld [vmem:[%s20 + $0x30] sm:$0xff]
    %v2971 = vld [vmem:[%s20 + $0x38] sm:$0xff]
    %v2972 = vld [vmem:[%s20 + $0x40] sm:$0xff]
    %v2973 = vld [vmem:[%s20 + $0x48] sm:$0xff]
    %v2974 = vld [vmem:[%s20 + $0x50] sm:$0xff]
    %v2975 = vld [vmem:[%s20 + $0x58] sm:$0xff]
    %v2976 = vld [vmem:[%s20 + $0x60] sm:$0xff]
    %v2977 = vld [vmem:[%s20 + $0x68] sm:$0xff]
    %v2978 = vld [vmem:[%s20 + $0x70] sm:$0xff]
    %v2979 = vld [vmem:[%s20 + $0x78] sm:$0xff]
    %v2980 = vld [vmem:[%s21] sm:$0x1]
    %v2981 = vld [vmem:[%s22] sm:$0xff]
    %v2982 = vld [vmem:[%s22 + $0x8] sm:$0xff]
    %v2983 = vld [vmem:[%s22 + $0x10] sm:$0xff]
    %v2984 = vld [vmem:[%s22 + $0x18] sm:$0xff]
    %v2985 = vld [vmem:[%s22 + $0x20] sm:$0xff]
    %v2986 = vld [vmem:[%s22 + $0x28] sm:$0xff]
    %v2987 = vld [vmem:[%s22 + $0x30] sm:$0xff]
    %v2988 = vld [vmem:[%s22 + $0x38] sm:$0xff]
    %v2989 = vld [vmem:[%s22 + $0x40] sm:$0xff]
    %v2990 = vld [vmem:[%s22 + $0x48] sm:$0xff]
    %v2991 = vld [vmem:[%s22 + $0x50] sm:$0xff]
    %v2992 = vld [vmem:[%s22 + $0x58] sm:$0xff]
    %v2993 = vld [vmem:[%s22 + $0x60] sm:$0xff]
    %v2994 = vld [vmem:[%s22 + $0x68] sm:$0xff]
    %v2995 = vld [vmem:[%s22 + $0x70] sm:$0xff]
    %v2996 = vld [vmem:[%s22 + $0x78] sm:$0xff]
    %v2997 = vld [vmem:[%s23] sm:$0x3]
    %v2998 = vld [vmem:[%s24] sm:$0x1]
    %v2999 = vld [vmem:[%s17] sm:$0x3]
    %v3001 = vlaneseq
    %v3002 = vshrl.u32 %v3001, 7
    %v3003 = vsub.s32 0, %v3002
    %v3004 = vrot.slane %v2963, %v3003
    %v3005 = vlaneseq
    %v3006 = vshrl.u32 %v3005, 7
    %v3007 = vsub.s32 1, %v3006
    %v3008 = vrot.slane %v2963, %v3007
    %v3012 = vsel %vm643, %v2953, 0
    %v3015 = vsel %vm643, %v2954, 0
    %3017 = vmatprep.subr.mxu0 %v2956
    %3018 = vmatpush1.msra.mxu0 %v2955
    %3019 = vmatprep.subr.mxu0 %v2958
    %3020 = vmatpush1.msra.mxu0 %v2957
    %3021 = vmatprep.subr.mxu0 %v2960
    %3022 = vmatpush1.msra.mxu0 %v2959
    %3023 = vmatprep.subr.mxu0 %v2962
    %3024 = vmatpush1.msra.mxu0 %v2961
    %3025 = vmatprep.subr.mxu0 0.0
    %3026 = vmatpush1.msra.mxu0 0.0
    %3027 = vmatprep.subr.mxu0 0.0
    %3028 = vmatpush1.msra.mxu0 0.0
    %3029 = vmatprep.subr.mxu0 0.0
    %3030 = vmatpush1.msra.mxu0 0.0
    %3031 = vmatprep.subr.mxu0 0.0
    %3032 = vmatpush1.msra.mxu0 0.0
    %3033 = vmatprep.subr.mxu0 0.0
    %3034 = vmatpush1.msra.mxu0 0.0
    %3035 = vmatprep.subr.mxu0 0.0
    %3036 = vmatpush1.msra.mxu0 0.0
    %3037 = vmatprep.subr.mxu0 0.0
    %3038 = vmatpush1.msra.mxu0 0.0
    %3039 = vmatprep.subr.mxu0 0.0
    %3040 = vmatpush1.msra.mxu0 0.0
    %3041 = vmatprep.subr.mxu0 0.0
    %3042 = vmatpush1.msra.mxu0 0.0
    %3043 = vmatprep.subr.mxu0 0.0
    %3044 = vmatpush1.msra.mxu0 0.0
    %3045 = vmatprep.subr.mxu0 0.0
    %3046 = vmatpush1.msra.mxu0 0.0
    %3047 = vmatprep.subr.mxu0 0.0
    %3048 = vmatpush1.msra.mxu0 0.0
    %3049 = vmatprep.subr.mxu0 0.0
    %3050 = vmatpush1.msra.mxu0 0.0
    %3051 = vmatprep.subr.mxu0 0.0
    %3052 = vmatpush1.msra.mxu0 0.0
    %3053 = vmatprep.subr.mxu0 0.0
    %3054 = vmatpush1.msra.mxu0 0.0
    %3055 = vmatprep.subr.mxu0 0.0
    %3056 = vmatpush1.msra.mxu0 0.0
    %3057 = vmatprep.subr.mxu0 0.0
    %3058 = vmatpush1.msra.mxu0 0.0
    %3059 = vmatprep.subr.mxu0 0.0
    %3060 = vmatpush1.msra.mxu0 0.0
    %3061 = vmatprep.subr.mxu0 0.0
    %3062 = vmatpush1.msra.mxu0 0.0
    %3063 = vmatprep.subr.mxu0 0.0
    %3064 = vmatpush1.msra.mxu0 0.0
    %3065 = vmatprep.subr.mxu0 0.0
    %3066 = vmatpush1.msra.mxu0 0.0
    %3067 = vmatprep.subr.mxu0 0.0
    %3068 = vmatpush1.msra.mxu0 0.0
    %3069 = vmatprep.subr.mxu0 0.0
    %3070 = vmatpush1.msra.mxu0 0.0
    %3071 = vmatprep.subr.mxu0 0.0
    %3072 = vmatpush1.msra.mxu0 0.0
    %3073 = vmatprep.subr.mxu0 0.0
    %3074 = vmatpush1.msra.mxu0 0.0
    %3075 = vmatprep.subr.mxu0 0.0
    %3076 = vmatpush1.msra.mxu0 0.0
    %3077 = vmatprep.subr.mxu0 0.0
    %3078 = vmatpush1.msra.mxu0 0.0
    %3079 = vmatprep.subr.mxu0 0.0
    %3080 = vmatpush1.msra.mxu0 0.0
    %3081 = vmatprep.mubr.f32.mxu0 0.0
    %3082 = vmatmul.mubr.f32.gmra.mrb[0].mxu0 %v3012
    %v3083 = vpop.f32.mrb[0].mxu0
    %v3084 = vadd.f32 %v3004, %v3083
    %v3085 = vpop.f32.mrb[0].mxu0
    %v3086 = vadd.f32 %v3008, %v3085
    %3087 = vmatprep.mubr.f32.mxu0 0.0
    %3088 = vmatmul.mubr.f32.gmra.mrb[0].mxu0 %v3015
    %v3089 = vpop.f32.mrb[0].mxu0
    %v3090 = vadd.f32 %v3004, %v3089
    %v3091 = vpop.f32.mrb[0].mxu0
    %v3092 = vadd.f32 %v3008, %v3091
    %3093 = vdwg.mxu0
    %vm3094 = vcmp.gt.f32.partialorder %v3084, 0.0
    %vm3095 = vcmp.gt.f32.partialorder %v3086, 0.0
    %vm3096 = vcmp.gt.f32.partialorder %v3090, 0.0
    %vm3097 = vcmp.gt.f32.partialorder %v3092, 0.0
    %v3098 = vmul.f32 %v3084, 0.01
    %v3099 = vmul.f32 %v3086, 0.01
    %v3100 = vmul.f32 %v3090, 0.01
    %v3101 = vmul.f32 %v3092, 0.01
    %v3102 = vsel %vm3094, %v3084, %v3098
    %v3103 = vsel %vm3095, %v3086, %v3099
    %v3104 = vsel %vm3096, %v3090, %v3100
    %v3105 = vsel %vm3097, %v3092, %v3101
    %v3107 = vlaneseq
    %v3108 = vshrl.u32 %v3107, 7
    %v3109 = vsub.s32 0, %v3108
    %v3110 = vrot.slane %v2980, %v3109
    %3112 = vmatprep.subr.mxu0 0.0
    %3113 = vmatpush1.msra.mxu0 %v2964
    %3114 = vmatprep.subr.mxu0 0.0
    %3115 = vmatpush1.msra.mxu0 %v2965
    %3116 = vmatprep.subr.mxu0 0.0
    %3117 = vmatpush1.msra.mxu0 %v2966
    %3118 = vmatprep.subr.mxu0 0.0
    %3119 = vmatpush1.msra.mxu0 %v2967
    %3120 = vmatprep.subr.mxu0 0.0
    %3121 = vmatpush1.msra.mxu0 %v2968
    %3122 = vmatprep.subr.mxu0 0.0
    %3123 = vmatpush1.msra.mxu0 %v2969
    %3124 = vmatprep.subr.mxu0 0.0
    %3125 = vmatpush1.msra.mxu0 %v2970
    %3126 = vmatprep.subr.mxu0 0.0
    %3127 = vmatpush1.msra.mxu0 %v2971
    %3128 = vmatprep.subr.mxu0 0.0
    %3129 = vmatpush1.msra.mxu0 %v2972
    %3130 = vmatprep.subr.mxu0 0.0
    %3131 = vmatpush1.msra.mxu0 %v2973
    %3132 = vmatprep.subr.mxu0 0.0
    %3133 = vmatpush1.msra.mxu0 %v2974
    %3134 = vmatprep.subr.mxu0 0.0
    %3135 = vmatpush1.msra.mxu0 %v2975
    %3136 = vmatprep.subr.mxu0 0.0
    %3137 = vmatpush1.msra.mxu0 %v2976
    %3138 = vmatprep.subr.mxu0 0.0
    %3139 = vmatpush1.msra.mxu0 %v2977
    %3140 = vmatprep.subr.mxu0 0.0
    %3141 = vmatpush1.msra.mxu0 %v2978
    %3142 = vmatprep.subr.mxu0 0.0
    %3143 = vmatpush1.msra.mxu0 %v2979
    %3144 = vmatprep.subr.mxu0 0.0
    %3145 = vmatpush1.msra.mxu0 0.0
    %3146 = vmatprep.subr.mxu0 0.0
    %3147 = vmatpush1.msra.mxu0 0.0
    %3148 = vmatprep.subr.mxu0 0.0
    %3149 = vmatpush1.msra.mxu0 0.0
    %3150 = vmatprep.subr.mxu0 0.0
    %3151 = vmatpush1.msra.mxu0 0.0
    %3152 = vmatprep.subr.mxu0 0.0
    %3153 = vmatpush1.msra.mxu0 0.0
    %3154 = vmatprep.subr.mxu0 0.0
    %3155 = vmatpush1.msra.mxu0 0.0
    %3156 = vmatprep.subr.mxu0 0.0
    %3157 = vmatpush1.msra.mxu0 0.0
    %3158 = vmatprep.subr.mxu0 0.0
    %3159 = vmatpush1.msra.mxu0 0.0
    %3160 = vmatprep.subr.mxu0 0.0
    %3161 = vmatpush1.msra.mxu0 0.0
    %3162 = vmatprep.subr.mxu0 0.0
    %3163 = vmatpush1.msra.mxu0 0.0
    %3164 = vmatprep.subr.mxu0 0.0
    %3165 = vmatpush1.msra.mxu0 0.0
    %3166 = vmatprep.subr.mxu0 0.0
    %3167 = vmatpush1.msra.mxu0 0.0
    %3168 = vmatprep.subr.mxu0 0.0
    %3169 = vmatpush1.msra.mxu0 0.0
    %3170 = vmatprep.subr.mxu0 0.0
    %3171 = vmatpush1.msra.mxu0 0.0
    %3172 = vmatprep.subr.mxu0 0.0
    %3173 = vmatpush1.msra.mxu0 0.0
    %3174 = vmatprep.subr.mxu0 0.0
    %3175 = vmatpush1.msra.mxu0 0.0
    %3176 = vmatprep.mubr.f32.mxu0 0.0
    %3177 = vmatmul.mubr.f32.gmra.mrb[0].mxu0 %v3102
    %v3178 = vpop.f32.mrb[0].mxu0
    %v3179 = vadd.f32 %v3110, %v3178
    %v3180 = vpop.f32.mrb[0].mxu0
    %3181 = vmatprep.mubr.f32.mxu0 0.0
    %3182 = vmatmul.mubr.f32.gmra.mrb[0].mxu0 %v3104
    %v3183 = vpop.f32.mrb[0].mxu0
    %v3184 = vadd.f32 %v3110, %v3183
    %v3185 = vpop.f32.mrb[0].mxu0
    %3186 = vdwg.mxu0
    %3188 = vset.pattern.permute.xlu0 0
    %3189 = vperm.xlu0 %3188, %v3179
    %v3190 = vpop.permute.xlu0 %3189
    %3193 = vset.pattern.permute.xlu0 0
    %3194 = vperm.xlu0 %3193, %v3184
    %v3195 = vpop.permute.xlu0 %3194
    %v3197 = vsel %vm288, %v3190, -1e+30
    %v3198 = vsel %vm289, %v3195, -1e+30
    %vm3199 = vcmask 23552
    %v3200 = vsel %vm3199, %v3197, -inf
    %vm3201 = vcmask 17408
    %v3202 = vsel %vm3201, %v3198, -inf
    %v3203 = vmax.f32 %v3200, %v3202
    %v3204 = vrot.slane %v3203, 4
    %v3205 = vmax.f32 %v3203, %v3204
    %v3206 = vrot.slane %v3205, 2
    %v3207 = vmax.f32 %v3205, %v3206
    %v3208 = vrot.slane %v3207, 1
    %v3209 = vmax.f32 %v3207, %v3208
    %v3210 = vmul.f32 %v292, %v3209
    %v3211 = vmul.f32 %v293, %v3209
    %v3212 = vsel %vm3199, %v3210, 0.0
    %3213 = vadd.xlane.f32.xlu0 %v3212
    %v3214 = vpop.xlane.xlu0 %3213
    %v3215 = vsel %vm3201, %v3211, 0.0
    %3216 = vadd.xlane.f32.xlu0 %v3215
    %v3217 = vpop.xlane.xlu0 %3216
    %3218 = vset.pattern.permute.xlu0 1
    %3219 = vperm.xlu0 %3218, %v3179
    %v3220 = vpop.permute.xlu0 %3219
    %3222 = vset.pattern.permute.xlu0 1
    %3223 = vperm.xlu0 %3222, %v3184
    %v3224 = vpop.permute.xlu0 %3223
    %v3226 = vsel %vm288, %v3220, -1e+30
    %v3227 = vsel %vm289, %v3224, -1e+30
    %v3228 = vsel %vm3199, %v3226, -inf
    %v3229 = vsel %vm3201, %v3227, -inf
    %v3230 = vmax.f32 %v3228, %v3229
    %v3231 = vrot.slane %v3230, 4
    %v3232 = vmax.f32 %v3230, %v3231
    %v3233 = vrot.slane %v3232, 2
    %v3234 = vmax.f32 %v3232, %v3233
    %v3235 = vrot.slane %v3234, 1
    %v3236 = vmax.f32 %v3234, %v3235
    %v3237 = vmul.f32 %v292, %v3236
    %v3238 = vmul.f32 %v293, %v3236
    %v3239 = vsel %vm3199, %v3237, 0.0
    %3240 = vadd.xlane.f32.xlu0 %v3239
    %v3241 = vpop.xlane.xlu0 %3240
    %v3242 = vsel %vm3201, %v3238, 0.0
    %3243 = vadd.xlane.f32.xlu0 %v3242
    %v3244 = vpop.xlane.xlu0 %3243
    %v3245 = vsel %vm1075, %v3214, %v3241
    %v3246 = vsel %vm1075, %v3217, %v3244
    %v3248 = vlaneseq
    %v3249 = vshrl.u32 %v3248, 7
    %v3250 = vsub.s32 0, %v3249
    %v3251 = vrot.slane %v2998, %v3250
    %3254 = vset.pattern.permute.xlu0 0
    %3255 = vperm.xlu0 %3254, %v421
    %v3256 = vpop.permute.xlu0 %3255
    %3259 = vset.pattern.permute.xlu0 0
    %3260 = vperm.xlu0 %3259, %v423
    %v3261 = vpop.permute.xlu0 %3260
    %v3263 = vmul.f32 %v3251, %v3256
    %v3264 = vmul.f32 %v3251, %v3261
    %v3265 = vmul.f32 %v3263, 1.442695
    %v3266 = vpow.pop %v3265
    %v3267 = vmul.f32 %v3264, 1.442695
    %v3268 = vpow.pop %v3267
    %v3269 = vsub.f32 %v3179, %v3245
    %v3270 = vsub.f32 %v3184, %v3246
    %v3271 = vmul.f32 %v3269, 1.442695
    %v3272 = vpow.pop %v3271
    %v3273 = vmul.f32 %v3270, 1.442695
    %v3274 = vpow.pop %v3273
    %v3275 = vmul.f32 %v3266, %v3272
    %v3276 = vmul.f32 %v3268, %v3274
    %v3278 = vsel %vm301, %v300, 0
    %v3281 = vsel %vm317, %v3276, 0
    %3283 = vmatprep.subr.mxu0 0.0
    %3284 = vmatpush1.msra.mxu0 %v3275
    %3285 = vmatprep.subr.mxu0 0.0
    %3286 = vmatpush1.msra.mxu0 %v3281
    %3287 = vmatprep.subr.mxu0 0.0
    %3288 = vmatpush1.msra.mxu0 0.0
    %3289 = vmatprep.subr.mxu0 0.0
    %3290 = vmatpush1.msra.mxu0 0.0
    %3291 = vmatprep.subr.mxu0 0.0
    %3292 = vmatpush1.msra.mxu0 0.0
    %3293 = vmatprep.subr.mxu0 0.0
    %3294 = vmatpush1.msra.mxu0 0.0
    %3295 = vmatprep.subr.mxu0 0.0
    %3296 = vmatpush1.msra.mxu0 0.0
    %3297 = vmatprep.subr.mxu0 0.0
    %3298 = vmatpush1.msra.mxu0 0.0
    %3299 = vmatprep.subr.mxu0 0.0
    %3300 = vmatpush1.msra.mxu0 0.0
    %3301 = vmatprep.subr.mxu0 0.0
    %3302 = vmatpush1.msra.mxu0 0.0
    %3303 = vmatprep.subr.mxu0 0.0
    %3304 = vmatpush1.msra.mxu0 0.0
    %3305 = vmatprep.subr.mxu0 0.0
    %3306 = vmatpush1.msra.mxu0 0.0
    %3307 = vmatprep.subr.mxu0 0.0
    %3308 = vmatpush1.msra.mxu0 0.0
    %3309 = vmatprep.subr.mxu0 0.0
    %3310 = vmatpush1.msra.mxu0 0.0
    %3311 = vmatprep.subr.mxu0 0.0
    %3312 = vmatpush1.msra.mxu0 0.0
    %3313 = vmatprep.subr.mxu0 0.0
    %3314 = vmatpush1.msra.mxu0 0.0
    %3315 = vmatprep.subr.mxu0 0.0
    %3316 = vmatpush1.msra.mxu0 0.0
    %3317 = vmatprep.subr.mxu0 0.0
    %3318 = vmatpush1.msra.mxu0 0.0
    %3319 = vmatprep.subr.mxu0 0.0
    %3320 = vmatpush1.msra.mxu0 0.0
    %3321 = vmatprep.subr.mxu0 0.0
    %3322 = vmatpush1.msra.mxu0 0.0
    %3323 = vmatprep.subr.mxu0 0.0
    %3324 = vmatpush1.msra.mxu0 0.0
    %3325 = vmatprep.subr.mxu0 0.0
    %3326 = vmatpush1.msra.mxu0 0.0
    %3327 = vmatprep.subr.mxu0 0.0
    %3328 = vmatpush1.msra.mxu0 0.0
    %3329 = vmatprep.subr.mxu0 0.0
    %3330 = vmatpush1.msra.mxu0 0.0
    %3331 = vmatprep.subr.mxu0 0.0
    %3332 = vmatpush1.msra.mxu0 0.0
    %3333 = vmatprep.subr.mxu0 0.0
    %3334 = vmatpush1.msra.mxu0 0.0
    %3335 = vmatprep.subr.mxu0 0.0
    %3336 = vmatpush1.msra.mxu0 0.0
    %3337 = vmatprep.subr.mxu0 0.0
    %3338 = vmatpush1.msra.mxu0 0.0
    %3339 = vmatprep.subr.mxu0 0.0
    %3340 = vmatpush1.msra.mxu0 0.0
    %3341 = vmatprep.subr.mxu0 0.0
    %3342 = vmatpush1.msra.mxu0 0.0
    %3343 = vmatprep.subr.mxu0 0.0
    %3344 = vmatpush1.msra.mxu0 0.0
    %3345 = vmatprep.subr.mxu0 0.0
    %3346 = vmatpush1.msra.mxu0 0.0
    %3347 = vmatprep.mubr.f32.mxu0 0.0
    %3348 = vmatmul.mubr.f32.gmra.mrb[0].mxu0 %v3278
    %v3349 = vpop.f32.mrb[0].mxu0
    %v3350 = vadd.f32 0.0, %v3349
    %v3351 = vpop.f32.mrb[0].mxu0
    %3352 = vdwg.mxu0
    %v3354 = vsel %vm3199, %v292, 0
    %v3357 = vsel %vm3199, %v293, 0
    %vm3359 = vcmask 1042432
    %v3361 = vsel %vm3359, %v3350, 0
    %3363 = vmatprep.subr.mxu0 0.0
    %3364 = vmatpush1.msra.mxu0 %v3361
    %3365 = vmatprep.subr.mxu0 0.0
    %3366 = vmatpush1.msra.mxu0 0.0
    %3367 = vmatprep.subr.mxu0 0.0
    %3368 = vmatpush1.msra.mxu0 0.0
    %3369 = vmatprep.subr.mxu0 0.0
    %3370 = vmatpush1.msra.mxu0 0.0
    %3371 = vmatprep.subr.mxu0 0.0
    %3372 = vmatpush1.msra.mxu0 0.0
    %3373 = vmatprep.subr.mxu0 0.0
    %3374 = vmatpush1.msra.mxu0 0.0
    %3375 = vmatprep.subr.mxu0 0.0
    %3376 = vmatpush1.msra.mxu0 0.0
    %3377 = vmatprep.subr.mxu0 0.0
    %3378 = vmatpush1.msra.mxu0 0.0
    %3379 = vmatprep.subr.mxu0 0.0
    %3380 = vmatpush1.msra.mxu0 0.0
    %3381 = vmatprep.subr.mxu0 0.0
    %3382 = vmatpush1.msra.mxu0 0.0
    %3383 = vmatprep.subr.mxu0 0.0
    %3384 = vmatpush1.msra.mxu0 0.0
    %3385 = vmatprep.subr.mxu0 0.0
    %3386 = vmatpush1.msra.mxu0 0.0
    %3387 = vmatprep.subr.mxu0 0.0
    %3388 = vmatpush1.msra.mxu0 0.0
    %3389 = vmatprep.subr.mxu0 0.0
    %3390 = vmatpush1.msra.mxu0 0.0
    %3391 = vmatprep.subr.mxu0 0.0
    %3392 = vmatpush1.msra.mxu0 0.0
    %3393 = vmatprep.subr.mxu0 0.0
    %3394 = vmatpush1.msra.mxu0 0.0
    %3395 = vmatprep.subr.mxu0 0.0
    %3396 = vmatpush1.msra.mxu0 0.0
    %3397 = vmatprep.subr.mxu0 0.0
    %3398 = vmatpush1.msra.mxu0 0.0
    %3399 = vmatprep.subr.mxu0 0.0
    %3400 = vmatpush1.msra.mxu0 0.0
    %3401 = vmatprep.subr.mxu0 0.0
    %3402 = vmatpush1.msra.mxu0 0.0
    %3403 = vmatprep.subr.mxu0 0.0
    %3404 = vmatpush1.msra.mxu0 0.0
    %3405 = vmatprep.subr.mxu0 0.0
    %3406 = vmatpush1.msra.mxu0 0.0
    %3407 = vmatprep.subr.mxu0 0.0
    %3408 = vmatpush1.msra.mxu0 0.0
    %3409 = vmatprep.subr.mxu0 0.0
    %3410 = vmatpush1.msra.mxu0 0.0
    %3411 = vmatprep.subr.mxu0 0.0
    %3412 = vmatpush1.msra.mxu0 0.0
    %3413 = vmatprep.subr.mxu0 0.0
    %3414 = vmatpush1.msra.mxu0 0.0
    %3415 = vmatprep.subr.mxu0 0.0
    %3416 = vmatpush1.msra.mxu0 0.0
    %3417 = vmatprep.subr.mxu0 0.0
    %3418 = vmatpush1.msra.mxu0 0.0
    %3419 = vmatprep.subr.mxu0 0.0
    %3420 = vmatpush1.msra.mxu0 0.0
    %3421 = vmatprep.subr.mxu0 0.0
    %3422 = vmatpush1.msra.mxu0 0.0
    %3423 = vmatprep.subr.mxu0 0.0
    %3424 = vmatpush1.msra.mxu0 0.0
    %3425 = vmatprep.subr.mxu0 0.0
    %3426 = vmatpush1.msra.mxu0 0.0
    %3427 = vmatprep.mubr.f32.mxu0 0.0
    %3428 = vmatmul.mubr.f32.gmra.mrb[0].mxu0 %v3354
    %v3429 = vpop.f32.mrb[0].mxu0
    %v3430 = vadd.f32 1e-10, %v3429
    %v3431 = vpop.f32.mrb[0].mxu0
    %3432 = vmatprep.mubr.f32.mxu0 0.0
    %3433 = vmatmul.mubr.f32.gmra.mrb[0].mxu0 %v3357
    %v3434 = vpop.f32.mrb[0].mxu0
    %v3435 = vadd.f32 1e-10, %v3434
    %v3436 = vpop.f32.mrb[0].mxu0
    %3437 = vdwg.mxu0
    %v3438 = vrcp.pop %v3430
    %v3439 = vmul.f32 %v3275, %v3438
    %v3440 = vrcp.pop %v3435
    %v3441 = vmul.f32 %v3276, %v3440
    %v3443 = vsel %vm1335, %v3439, 0
    %v3446 = vsel %vm1335, %v3441, 0
    %v3449 = vsel %vm317, %v2999, 0
    %3451 = vmatprep.subr.mxu0 0.0
    %3452 = vmatpush1.msra.mxu0 %v3449
    %3453 = vmatprep.subr.mxu0 0.0
    %3454 = vmatpush1.msra.mxu0 0.0
    %3455 = vmatprep.subr.mxu0 0.0
    %3456 = vmatpush1.msra.mxu0 0.0
    %3457 = vmatprep.subr.mxu0 0.0
    %3458 = vmatpush1.msra.mxu0 0.0
    %3459 = vmatprep.subr.mxu0 0.0
    %3460 = vmatpush1.msra.mxu0 0.0
    %3461 = vmatprep.subr.mxu0 0.0
    %3462 = vmatpush1.msra.mxu0 0.0
    %3463 = vmatprep.subr.mxu0 0.0
    %3464 = vmatpush1.msra.mxu0 0.0
    %3465 = vmatprep.subr.mxu0 0.0
    %3466 = vmatpush1.msra.mxu0 0.0
    %3467 = vmatprep.subr.mxu0 0.0
    %3468 = vmatpush1.msra.mxu0 0.0
    %3469 = vmatprep.subr.mxu0 0.0
    %3470 = vmatpush1.msra.mxu0 0.0
    %3471 = vmatprep.subr.mxu0 0.0
    %3472 = vmatpush1.msra.mxu0 0.0
    %3473 = vmatprep.subr.mxu0 0.0
    %3474 = vmatpush1.msra.mxu0 0.0
    %3475 = vmatprep.subr.mxu0 0.0
    %3476 = vmatpush1.msra.mxu0 0.0
    %3477 = vmatprep.subr.mxu0 0.0
    %3478 = vmatpush1.msra.mxu0 0.0
    %3479 = vmatprep.subr.mxu0 0.0
    %3480 = vmatpush1.msra.mxu0 0.0
    %3481 = vmatprep.subr.mxu0 0.0
    %3482 = vmatpush1.msra.mxu0 0.0
    %3483 = vmatprep.subr.mxu0 0.0
    %3484 = vmatpush1.msra.mxu0 0.0
    %3485 = vmatprep.subr.mxu0 0.0
    %3486 = vmatpush1.msra.mxu0 0.0
    %3487 = vmatprep.subr.mxu0 0.0
    %3488 = vmatpush1.msra.mxu0 0.0
    %3489 = vmatprep.subr.mxu0 0.0
    %3490 = vmatpush1.msra.mxu0 0.0
    %3491 = vmatprep.subr.mxu0 0.0
    %3492 = vmatpush1.msra.mxu0 0.0
    %3493 = vmatprep.subr.mxu0 0.0
    %3494 = vmatpush1.msra.mxu0 0.0
    %3495 = vmatprep.subr.mxu0 0.0
    %3496 = vmatpush1.msra.mxu0 0.0
    %3497 = vmatprep.subr.mxu0 0.0
    %3498 = vmatpush1.msra.mxu0 0.0
    %3499 = vmatprep.subr.mxu0 0.0
    %3500 = vmatpush1.msra.mxu0 0.0
    %3501 = vmatprep.subr.mxu0 0.0
    %3502 = vmatpush1.msra.mxu0 0.0
    %3503 = vmatprep.subr.mxu0 0.0
    %3504 = vmatpush1.msra.mxu0 0.0
    %3505 = vmatprep.subr.mxu0 0.0
    %3506 = vmatpush1.msra.mxu0 0.0
    %3507 = vmatprep.subr.mxu0 0.0
    %3508 = vmatpush1.msra.mxu0 0.0
    %3509 = vmatprep.subr.mxu0 0.0
    %3510 = vmatpush1.msra.mxu0 0.0
    %3511 = vmatprep.subr.mxu0 0.0
    %3512 = vmatpush1.msra.mxu0 0.0
    %3513 = vmatprep.subr.mxu0 0.0
    %3514 = vmatpush1.msra.mxu0 0.0
    %3515 = vmatprep.mubr.f32.mxu0 0.0
    %3516 = vmatmul.mubr.f32.gmra.mrb[0].mxu0 %v3443
    %v3517 = vpop.f32.mrb[0].mxu0
    %v3518 = vadd.f32 0.0, %v3517
    %v3519 = vpop.f32.mrb[0].mxu0
    %3520 = vmatprep.mubr.f32.mxu0 0.0
    %3521 = vmatmul.mubr.f32.gmra.mrb[0].mxu0 %v3446
    %v3522 = vpop.f32.mrb[0].mxu0
    %v3523 = vadd.f32 0.0, %v3522
    %v3524 = vpop.f32.mrb[0].mxu0
    %3525 = vdwg.mxu0
    %v3526 = vmul.f32 %v3518, %v3103
    %v3527 = vmul.f32 %v3523, %v3105
    %v3529 = vsel %vm317, %v2997, 0
    %3531 = vmatprep.subr.mxu0 0.0
    %3532 = vmatpush1.msra.mxu0 %v3529
    %3533 = vmatprep.subr.mxu0 0.0
    %3534 = vmatpush1.msra.mxu0 0.0
    %3535 = vmatprep.subr.mxu0 0.0
    %3536 = vmatpush1.msra.mxu0 0.0
    %3537 = vmatprep.subr.mxu0 0.0
    %3538 = vmatpush1.msra.mxu0 0.0
    %3539 = vmatprep.subr.mxu0 0.0
    %3540 = vmatpush1.msra.mxu0 0.0
    %3541 = vmatprep.subr.mxu0 0.0
    %3542 = vmatpush1.msra.mxu0 0.0
    %3543 = vmatprep.subr.mxu0 0.0
    %3544 = vmatpush1.msra.mxu0 0.0
    %3545 = vmatprep.subr.mxu0 0.0
    %3546 = vmatpush1.msra.mxu0 0.0
    %3547 = vmatprep.subr.mxu0 0.0
    %3548 = vmatpush1.msra.mxu0 0.0
    %3549 = vmatprep.subr.mxu0 0.0
    %3550 = vmatpush1.msra.mxu0 0.0
    %3551 = vmatprep.subr.mxu0 0.0
    %3552 = vmatpush1.msra.mxu0 0.0
    %3553 = vmatprep.subr.mxu0 0.0
    %3554 = vmatpush1.msra.mxu0 0.0
    %3555 = vmatprep.subr.mxu0 0.0
    %3556 = vmatpush1.msra.mxu0 0.0
    %3557 = vmatprep.subr.mxu0 0.0
    %3558 = vmatpush1.msra.mxu0 0.0
    %3559 = vmatprep.subr.mxu0 0.0
    %3560 = vmatpush1.msra.mxu0 0.0
    %3561 = vmatprep.subr.mxu0 0.0
    %3562 = vmatpush1.msra.mxu0 0.0
    %3563 = vmatprep.subr.mxu0 0.0
    %3564 = vmatpush1.msra.mxu0 0.0
    %3565 = vmatprep.subr.mxu0 0.0
    %3566 = vmatpush1.msra.mxu0 0.0
    %3567 = vmatprep.subr.mxu0 0.0
    %3568 = vmatpush1.msra.mxu0 0.0
    %3569 = vmatprep.subr.mxu0 0.0
    %3570 = vmatpush1.msra.mxu0 0.0
    %3571 = vmatprep.subr.mxu0 0.0
    %3572 = vmatpush1.msra.mxu0 0.0
    %3573 = vmatprep.subr.mxu0 0.0
    %3574 = vmatpush1.msra.mxu0 0.0
    %3575 = vmatprep.subr.mxu0 0.0
    %3576 = vmatpush1.msra.mxu0 0.0
    %3577 = vmatprep.subr.mxu0 0.0
    %3578 = vmatpush1.msra.mxu0 0.0
    %3579 = vmatprep.subr.mxu0 0.0
    %3580 = vmatpush1.msra.mxu0 0.0
    %3581 = vmatprep.subr.mxu0 0.0
    %3582 = vmatpush1.msra.mxu0 0.0
    %3583 = vmatprep.subr.mxu0 0.0
    %3584 = vmatpush1.msra.mxu0 0.0
    %3585 = vmatprep.subr.mxu0 0.0
    %3586 = vmatpush1.msra.mxu0 0.0
    %3587 = vmatprep.subr.mxu0 0.0
    %3588 = vmatpush1.msra.mxu0 0.0
    %3589 = vmatprep.subr.mxu0 0.0
    %3590 = vmatpush1.msra.mxu0 0.0
    %3591 = vmatprep.subr.mxu0 0.0
    %3592 = vmatpush1.msra.mxu0 0.0
    %3593 = vmatprep.subr.mxu0 0.0
    %3594 = vmatpush1.msra.mxu0 0.0
    %3595 = vmatprep.mubr.f32.mxu0 0.0
    %3596 = vmatmul.mubr.f32.gmra.mrb[0].mxu0 %v3443
    %v3597 = vpop.f32.mrb[0].mxu0
    %v3598 = vadd.f32 0.0, %v3597
    %v3599 = vpop.f32.mrb[0].mxu0
    %3600 = vmatprep.mubr.f32.mxu0 0.0
    %3601 = vmatmul.mubr.f32.gmra.mrb[0].mxu0 %v3446
    %v3602 = vpop.f32.mrb[0].mxu0
    %v3603 = vadd.f32 0.0, %v3602
    %v3604 = vpop.f32.mrb[0].mxu0
    %3605 = vdwg.mxu0
    %3606 = vmatprep.subr.mxu0 0.0
    %3607 = vmatpush1.msra.mxu0 %v2981
    %3608 = vmatprep.subr.mxu0 0.0
    %3609 = vmatpush1.msra.mxu0 %v2982
    %3610 = vmatprep.subr.mxu0 0.0
    %3611 = vmatpush1.msra.mxu0 %v2983
    %3612 = vmatprep.subr.mxu0 0.0
    %3613 = vmatpush1.msra.mxu0 %v2984
    %3614 = vmatprep.subr.mxu0 0.0
    %3615 = vmatpush1.msra.mxu0 %v2985
    %3616 = vmatprep.subr.mxu0 0.0
    %3617 = vmatpush1.msra.mxu0 %v2986
    %3618 = vmatprep.subr.mxu0 0.0
    %3619 = vmatpush1.msra.mxu0 %v2987
    %3620 = vmatprep.subr.mxu0 0.0
    %3621 = vmatpush1.msra.mxu0 %v2988
    %3622 = vmatprep.subr.mxu0 0.0
    %3623 = vmatpush1.msra.mxu0 %v2989
    %3624 = vmatprep.subr.mxu0 0.0
    %3625 = vmatpush1.msra.mxu0 %v2990
    %3626 = vmatprep.subr.mxu0 0.0
    %3627 = vmatpush1.msra.mxu0 %v2991
    %3628 = vmatprep.subr.mxu0 0.0
    %3629 = vmatpush1.msra.mxu0 %v2992
    %3630 = vmatprep.subr.mxu0 0.0
    %3631 = vmatpush1.msra.mxu0 %v2993
    %3632 = vmatprep.subr.mxu0 0.0
    %3633 = vmatpush1.msra.mxu0 %v2994
    %3634 = vmatprep.subr.mxu0 0.0
    %3635 = vmatpush1.msra.mxu0 %v2995
    %3636 = vmatprep.subr.mxu0 0.0
    %3637 = vmatpush1.msra.mxu0 %v2996
    %3638 = vmatprep.subr.mxu0 0.0
    %3639 = vmatpush1.msra.mxu0 0.0
    %3640 = vmatprep.subr.mxu0 0.0
    %3641 = vmatpush1.msra.mxu0 0.0
    %3642 = vmatprep.subr.mxu0 0.0
    %3643 = vmatpush1.msra.mxu0 0.0
    %3644 = vmatprep.subr.mxu0 0.0
    %3645 = vmatpush1.msra.mxu0 0.0
    %3646 = vmatprep.subr.mxu0 0.0
    %3647 = vmatpush1.msra.mxu0 0.0
    %3648 = vmatprep.subr.mxu0 0.0
    %3649 = vmatpush1.msra.mxu0 0.0
    %3650 = vmatprep.subr.mxu0 0.0
    %3651 = vmatpush1.msra.mxu0 0.0
    %3652 = vmatprep.subr.mxu0 0.0
    %3653 = vmatpush1.msra.mxu0 0.0
    %3654 = vmatprep.subr.mxu0 0.0
    %3655 = vmatpush1.msra.mxu0 0.0
    %3656 = vmatprep.subr.mxu0 0.0
    %3657 = vmatpush1.msra.mxu0 0.0
    %3658 = vmatprep.subr.mxu0 0.0
    %3659 = vmatpush1.msra.mxu0 0.0
    %3660 = vmatprep.subr.mxu0 0.0
    %3661 = vmatpush1.msra.mxu0 0.0
    %3662 = vmatprep.subr.mxu0 0.0
    %3663 = vmatpush1.msra.mxu0 0.0
    %3664 = vmatprep.subr.mxu0 0.0
    %3665 = vmatpush1.msra.mxu0 0.0
    %3666 = vmatprep.subr.mxu0 0.0
    %3667 = vmatpush1.msra.mxu0 0.0
    %3668 = vmatprep.subr.mxu0 0.0
    %3669 = vmatpush1.msra.mxu0 0.0
    %3670 = vmatprep.mubr.f32.mxu0 0.0
    %3671 = vmatmul.mubr.f32.gmra.mrb[0].mxu0 %v3526
    %v3672 = vpop.f32.mrb[0].mxu0
    %v3673 = vadd.f32 %v3598, %v3672
    %v3674 = vpop.f32.mrb[0].mxu0
    %3675 = vmatprep.mubr.f32.mxu0 0.0
    %3676 = vmatmul.mubr.f32.gmra.mrb[0].mxu0 %v3527
    %v3677 = vpop.f32.mrb[0].mxu0
    %v3678 = vadd.f32 %v3603, %v3677
    %v3679 = vpop.f32.mrb[0].mxu0
    %3680 = vdwg.mxu0
    %v3682 = vsel %vm317, %v3678, 0
    %3684 = vmatprep.subr.mxu0 0.0
    %3685 = vmatpush1.msra.mxu0 %v3673
    %3686 = vmatprep.subr.mxu0 0.0
    %3687 = vmatpush1.msra.mxu0 %v3682
    %3688 = vmatprep.subr.mxu0 0.0
    %3689 = vmatpush1.msra.mxu0 0.0
    %3690 = vmatprep.subr.mxu0 0.0
    %3691 = vmatpush1.msra.mxu0 0.0
    %3692 = vmatprep.subr.mxu0 0.0
    %3693 = vmatpush1.msra.mxu0 0.0
    %3694 = vmatprep.subr.mxu0 0.0
    %3695 = vmatpush1.msra.mxu0 0.0
    %3696 = vmatprep.subr.mxu0 0.0
    %3697 = vmatpush1.msra.mxu0 0.0
    %3698 = vmatprep.subr.mxu0 0.0
    %3699 = vmatpush1.msra.mxu0 0.0
    %3700 = vmatprep.subr.mxu0 0.0
    %3701 = vmatpush1.msra.mxu0 0.0
    %3702 = vmatprep.subr.mxu0 0.0
    %3703 = vmatpush1.msra.mxu0 0.0
    %3704 = vmatprep.subr.mxu0 0.0
    %3705 = vmatpush1.msra.mxu0 0.0
    %3706 = vmatprep.subr.mxu0 0.0
    %3707 = vmatpush1.msra.mxu0 0.0
    %3708 = vmatprep.subr.mxu0 0.0
    %3709 = vmatpush1.msra.mxu0 0.0
    %3710 = vmatprep.subr.mxu0 0.0
    %3711 = vmatpush1.msra.mxu0 0.0
    %3712 = vmatprep.subr.mxu0 0.0
    %3713 = vmatpush1.msra.mxu0 0.0
    %3714 = vmatprep.subr.mxu0 0.0
    %3715 = vmatpush1.msra.mxu0 0.0
    %3716 = vmatprep.subr.mxu0 0.0
    %3717 = vmatpush1.msra.mxu0 0.0
    %3718 = vmatprep.subr.mxu0 0.0
    %3719 = vmatpush1.msra.mxu0 0.0
    %3720 = vmatprep.subr.mxu0 0.0
    %3721 = vmatpush1.msra.mxu0 0.0
    %3722 = vmatprep.subr.mxu0 0.0
    %3723 = vmatpush1.msra.mxu0 0.0
    %3724 = vmatprep.subr.mxu0 0.0
    %3725 = vmatpush1.msra.mxu0 0.0
    %3726 = vmatprep.subr.mxu0 0.0
    %3727 = vmatpush1.msra.mxu0 0.0
    %3728 = vmatprep.subr.mxu0 0.0
    %3729 = vmatpush1.msra.mxu0 0.0
    %3730 = vmatprep.subr.mxu0 0.0
    %3731 = vmatpush1.msra.mxu0 0.0
    %3732 = vmatprep.subr.mxu0 0.0
    %3733 = vmatpush1.msra.mxu0 0.0
    %3734 = vmatprep.subr.mxu0 0.0
    %3735 = vmatpush1.msra.mxu0 0.0
    %3736 = vmatprep.subr.mxu0 0.0
    %3737 = vmatpush1.msra.mxu0 0.0
    %3738 = vmatprep.subr.mxu0 0.0
    %3739 = vmatpush1.msra.mxu0 0.0
    %3740 = vmatprep.subr.mxu0 0.0
    %3741 = vmatpush1.msra.mxu0 0.0
    %3742 = vmatprep.subr.mxu0 0.0
    %3743 = vmatpush1.msra.mxu0 0.0
    %3744 = vmatprep.subr.mxu0 0.0
    %3745 = vmatpush1.msra.mxu0 0.0
    %3746 = vmatprep.subr.mxu0 0.0
    %3747 = vmatpush1.msra.mxu0 0.0
    %3748 = vmatprep.mubr.f32.mxu0 0.0
    %3749 = vmatmul.mubr.f32.gmra.mrb[0].mxu0 %v3278
    %v3750 = vpop.f32.mrb[0].mxu0
    %v3751 = vadd.f32 0.0, %v3750
    %v3752 = vpop.f32.mrb[0].mxu0
    %3753 = vdwg.mxu0
    %v3754 = vmul.f32 %v3751, 0.5
    %vm3755 = vcmask 256000
    %3756 = vst.msk [vmem:[#allocation2] sm:$0x7] %vm3755, %v3754
    // Predicated region
    $region102: #{tpu_custom_call.1} parent=1 // pred_check
      _
    $region103: #{tpu_custom_call.1} parent=1 // pred_check_branch
      %3758 = sbr.rel (0) target = $region105
    $region104: #{tpu_custom_call.1} parent=1 // pred_region
      %s3760 = ssub.s32 64, 64
      %3761 = vsyncadd [#allocation3], %s3760
      %s3763 = sshll.u32 [#allocation2], 4
      %s3764 = int_to_ptr.vmem [resolvable:$true] %s3763
      %3766 = dma.vmem_to_hbm [thread:$0]  %s3764, 64, %s25, [#allocation3]
    $region105: #{tpu_custom_call.1} parent=1 // pred_fallthru
      _
    // Predicated region
    $region106: #{tpu_custom_call.1} parent=1 // pred_check
      _
    $region107: #{tpu_custom_call.1} parent=1 // pred_check_branch
      %3768 = sbr.rel (0) target = $region109
    $region108: #{tpu_custom_call.1} parent=1 // pred_region
      %3769 = dma.done [#allocation3], 64
    $region109: #{tpu_custom_call.1} parent=1 // pred_fallthru
      _
    %3770 = vsyncpa [#allocation3], 1

</llo_original>
